<compile_context>
chip_gen: v6e
topology: v6e:2x2x1
jax: 0.10.0
libtpu: 0.0.40
codegen_flags: <defaults>
</compile_context>

<pallas_src>
import functools

import jax
import jax.numpy as jnp
from jax import lax
from jax.experimental import pallas as pl
from jax.experimental.pallas import tpu as pltpu


def _round_up(a, b):
    return -(-a // b) * b


# ----------------------------------------------------------------------------
# Kernel 1: conv 5x5 / stride 2 / pad 2  (+ centered per-(b,t) BN statistics)
# ----------------------------------------------------------------------------
def conv_stats_kernel(x_ref, w_ref, out_ref, sum_ref, ssq_ref, *,
                      H_out, W_out, C_in, C_out, row_chunk):
    # x_ref  : (1, 4*C_in, Hp2, Wp2) f32   even/odd phase planes of one padded frame
    # w_ref  : (25, C_out, C_in)     bf16  per-tap conv weights
    # out_ref: (1, 1, C_out, HW)     bf16  conv output, flat lane-dense spatial axis
    # sum/ssq: (1, 1, C_out, 1)      f32   per-frame centered statistics
    n_run = 0
    s_run = None
    m2_run = None

    r = 0
    while r < H_out:                        # static Python loop over row chunks
        rows = min(row_chunk, H_out - r)
        L = rows * W_out
        acc = jnp.zeros((C_out, L), jnp.float32)
        for kh in range(5):
            for kw in range(5):
                p = 2 * (kh % 2) + (kw % 2)
                r0, c0 = kh // 2, kw // 2
                slab = x_ref[0, p * C_in:(p + 1) * C_in,
                             r + r0:r + r0 + rows, c0:c0 + W_out]
                slab = slab.reshape(C_in, L).astype(jnp.bfloat16)
                acc = acc + jnp.dot(w_ref[kh * 5 + kw], slab,
                                    preferred_element_type=jnp.float32)
        out_ref[0, 0, :, r * W_out:(r + rows) * W_out] = acc.astype(out_ref.dtype)

        # Centered statistics for this chunk, Chan-combined into the frame stats.
        s = jnp.sum(acc, axis=1, keepdims=True)              # (C_out, 1)
        mu = s * (1.0 / L)
        m2 = jnp.sum((acc - mu) * (acc - mu), axis=1, keepdims=True)
        if s_run is None:
            n_run, s_run, m2_run = L, s, m2
        else:
            delta = mu - s_run * (1.0 / n_run)
            m2_run = m2_run + m2 + delta * delta * (float(n_run) * L / (n_run + L))
            s_run = s_run + s
            n_run = n_run + L
        r += rows

    sum_ref[0, 0] = s_run
    ssq_ref[0, 0] = m2_run


# ----------------------------------------------------------------------------
# Kernel 2: BN affine + ReLU + Linear over t (unrolled VPU FMA) + final act
# ----------------------------------------------------------------------------
def temporal_kernel(y_ref, scale_ref, shift_ref, wt_ref, bt_ref, o_ref, *,
                    T, T_out, last, lane_chunk):
    C_out = y_ref.shape[2]
    hw = y_ref.shape[3]
    scale = scale_ref[...]                   # (C_out, 1)
    shift = shift_ref[...]

    c = 0
    while c < hw:                            # static lane chunking: bounded vregs
        L = min(lane_chunk, hw - c)
        scale_b = jnp.broadcast_to(scale, (C_out, L))   # hoisted out of the t loop
        shift_b = jnp.broadcast_to(shift, (C_out, L))
        acc = [None] * T_out
        for t in range(T):
            z = y_ref[0, t, :, c:c + L].astype(jnp.float32)
            z = jnp.maximum(z * scale_b + shift_b, 0.0)          # BN + ReLU
            for to in range(T_out):
                contrib = wt_ref[to, t] * z                      # SMEM scalar * vreg
                acc[to] = contrib if acc[to] is None else acc[to] + contrib
        for to in range(T_out):
            val = acc[to] + bt_ref[to]
            val = jnp.tanh(val) if last else jnp.maximum(val, 0.0)
            o_ref[0, to, :, c:c + L] = val
        c += L


# ----------------------------------------------------------------------------
# Wrapper
# ----------------------------------------------------------------------------
def _pick_hw_tile(hw, max_lanes=8192):
    """Largest multiple of 128 dividing hw (<= max_lanes), else full hw."""
    best = None
    t = 128
    while t <= min(hw, max_lanes):
        if hw % t == 0:
            best = t
        t += 128
    # TODO(synk): pad HW up to a multiple of 128 when hw is huge and has no
    #             128-multiple divisor (currently falls back to a full-HW block).
    return best if best is not None else hw


def spatial_temporal_block(x, params, last):
    B, T, C_in, H, W = x.shape
    w_conv = params["w_conv"]                                   # (C_out, C_in, 5, 5)
    C_out = w_conv.shape[0]
    w_t = params["w_t"]                                         # (t_out, t_in)
    T_out = w_t.shape[0]

    H_out = (H + 1) // 2
    W_out = (W + 1) // 2
    HW = H_out * W_out

    # --- glue: fused pad + even/odd phase split, batch-major layout ----------
    Hp = 2 * H_out + 4
    Wp = 2 * W_out + 4
    Hp2, Wp2 = Hp // 2, Wp // 2
    xpad = jnp.pad(x.astype(jnp.float32),
                   ((0, 0), (0, 0), (0, 0), (2, Hp - H - 2), (2, Wp - W - 2)))
    x6 = xpad.reshape(B, T, C_in, Hp2, 2, Wp2, 2)
    xph = x6.transpose(0, 1, 4, 6, 2, 3, 5).reshape(B, T * 4 * C_in, Hp2, Wp2)

    # Per-tap conv weights, bf16 for the MXU.  Conv bias dropped (cancelled by
    # the training-mode BN mean subtraction).
    w_k = jnp.transpose(w_conv, (2, 3, 0, 1)).reshape(25, C_out, C_in)
    w_k = w_k.astype(jnp.bfloat16)

    row_chunk = max(1, min(H_out, 2048 // max(W_out, 1)))

    # Explicit VMEM budget: padded physical tiles, x2 for double buffering.
    x_blk = 4 * C_in * _round_up(Hp2, 8) * _round_up(Wp2, 128) * 4
    w_blk = 25 * _round_up(C_out, 16) * 128 * 2
    y_blk = _round_up(C_out, 16) * _round_up(HW, 128) * 2
    vmem1 = int(min(64 << 20, 2 * (x_blk + w_blk + y_blk) + (8 << 20)))

    conv_out, bsum, bssq = pl.pallas_call(
        functools.partial(conv_stats_kernel, H_out=H_out, W_out=W_out,
                          C_in=C_in, C_out=C_out, row_chunk=row_chunk),
        out_shape=(jax.ShapeDtypeStruct((B, T, C_out, HW), jnp.bfloat16),
                   jax.ShapeDtypeStruct((B, T, C_out, 1), jnp.float32),
                   jax.ShapeDtypeStruct((B, T, C_out, 1), jnp.float32)),
        grid=(B, T),
        in_specs=[
            pl.BlockSpec((1, 4 * C_in, Hp2, Wp2), lambda b, t: (b, t, 0, 0)),
            pl.BlockSpec((25, C_out, C_in), lambda b, t: (0, 0, 0)),
        ],
        out_specs=[
            pl.BlockSpec((1, 1, C_out, HW), lambda b, t: (b, t, 0, 0)),
            pl.BlockSpec((1, 1, C_out, 1), lambda b, t: (b, t, 0, 0)),
            pl.BlockSpec((1, 1, C_out, 1), lambda b, t: (b, t, 0, 0)),
        ],
        compiler_params=pltpu.CompilerParams(
            dimension_semantics=("parallel", "parallel"),
            vmem_limit_bytes=vmem1),
    )(xph, w_k)

    # --- glue: combine per-(b,t) centered stats (Chan) -> BN scale/shift -----
    s = bsum[..., 0].astype(jnp.float32)                        # (B, T, C_out)
    q = bssq[..., 0].astype(jnp.float32)
    n_g = float(HW)
    n_tot = float(B * T * HW)
    mean = jnp.sum(s, axis=(0, 1)) / n_tot
    mu_g = s / n_g
    var = (jnp.sum(q, axis=(0, 1))
           + n_g * jnp.sum((mu_g - mean[None, None, :]) ** 2, axis=(0, 1))) / n_tot
    scale = params["gamma"].astype(jnp.float32) / jnp.sqrt(var + 1e-5)
    shift = params["beta"].astype(jnp.float32) - mean * scale

    # --- kernel 2: BN affine + ReLU + temporal linear + final activation -----
    hw_tile = _pick_hw_tile(HW)
    lane_chunk = min(512, hw_tile)
    y_blk2 = T * _round_up(C_out, 16) * _round_up(hw_tile, 128) * 2
    o_blk2 = T_out * _round_up(C_out, 8) * _round_up(hw_tile, 128) * 4
    vmem2 = int(min(64 << 20, 2 * (y_blk2 + o_blk2) + (8 << 20)))

    out = pl.pallas_call(
        functools.partial(temporal_kernel, T=T, T_out=T_out, last=last,
                          lane_chunk=lane_chunk),
        out_shape=jax.ShapeDtypeStruct((B, T_out, C_out, HW), jnp.float32),
        grid=(B, HW // hw_tile),
        in_specs=[
            pl.BlockSpec((1, T, C_out, hw_tile), lambda b, h: (b, 0, 0, h)),
            pl.BlockSpec((C_out, 1), lambda b, h: (0, 0)),
            pl.BlockSpec((C_out, 1), lambda b, h: (0, 0)),
            pl.BlockSpec(memory_space=pltpu.MemorySpace.SMEM),
            pl.BlockSpec(memory_space=pltpu.MemorySpace.SMEM),
        ],
        out_specs=pl.BlockSpec((1, T_out, C_out, hw_tile),
                               lambda b, h: (b, 0, 0, h)),
        compiler_params=pltpu.CompilerParams(
            dimension_semantics=("parallel", "parallel"),
            vmem_limit_bytes=vmem2),
    )(conv_out, scale.reshape(C_out, 1), shift.reshape(C_out, 1),
      w_t.astype(jnp.float32), params["b_t"].astype(jnp.float32))

    # Free reshapes back to the PyTorch layout.
    out = out.reshape(B, T_out, C_out, H_out, W_out)
    if last:
        out = out.reshape(B, T_out * C_out, H_out, W_out)
    return out


# ----------------------------------------------------------------------------
# Pure-JAX reference (mirrors the PyTorch forward, training-mode BN)
# ----------------------------------------------------------------------------
def reference(x, params, last):
    B, T, C_in, H, W = x.shape
    C_out = params["w_conv"].shape[0]
    xr = x.reshape(B * T, C_in, H, W)
    conv = lax.conv_general_dilated(
        xr, params["w_conv"], window_strides=(2, 2), padding=((2, 2), (2, 2)),
        dimension_numbers=("NCHW", "OIHW", "NCHW"),
        precision=lax.Precision.HIGHEST) + params["b_conv"][None, :, None, None]
    mean = conv.mean(axis=(0, 2, 3))
    var = conv.var(axis=(0, 2, 3))
    bn = (conv - mean[None, :, None, None]) / jnp.sqrt(var + 1e-5)[None, :, None, None]
    bn = bn * params["gamma"][None, :, None, None] + params["beta"][None, :, None, None]
    y = jnp.maximum(bn, 0.0)
    H_out, W_out = y.shape[2], y.shape[3]
    y = y.reshape(B, T, C_out, H_out, W_out).transpose(0, 2, 3, 4, 1)   # (B,C,H,W,T)
    y = jnp.matmul(y, params["w_t"].T, precision=lax.Precision.HIGHEST) + params["b_t"]
    y = y.transpose(0, 4, 1, 2, 3)                                      # (B,T_out,C,H,W)
    if last:
        y = jnp.tanh(y).reshape(B, -1, H_out, W_out)
    else:
        y = jnp.maximum(y, 0.0)
    return y


if __name__ == "__main__":
    B, t_in, t_out, n_in, n_out, H, W = 2, 4, 6, 4, 8, 16, 16

    key = jax.random.PRNGKey(0)
    k1, k2, k3, k4, k5 = jax.random.split(key, 5)
    params = {
        "w_conv": jax.random.normal(k1, (n_out, n_in, 5, 5), jnp.float32) * 0.1,
        "b_conv": jax.random.normal(k2, (n_out,), jnp.float32) * 0.1,
        "gamma": jnp.ones((n_out,), jnp.float32),
        "beta": jnp.zeros((n_out,), jnp.float32),
        "w_t": jax.random.normal(k3, (t_out, t_in), jnp.float32) * 0.3,
        "b_t": jax.random.normal(k4, (t_out,), jnp.float32) * 0.1,
    }
    x = jax.random.normal(k5, (B, t_in, n_in, H, W), jnp.float32)

    ok = True
    for last in (True, False):
        out = spatial_temporal_block(x, params, last)
        out = jax.block_until_ready(out)
        ref = reference(x, params, last)
        if out.shape != ref.shape:
            ok = False
        # bf16 MXU operands + bf16 conv_out intermediate vs f32 HIGHEST reference.
        elif not jnp.allclose(out, ref, rtol=2e-2, atol=2e-2):
            ok = False

    if ok:
        print("KERNEL_OK")
    else:
        print("KERNEL_MISMATCH")
</pallas_src>

<mosaic_0001>
module attributes {stable_mosaic.version = 11 : i64} {
  func.func @conv_stats_kernel(%arg0: i32, %arg1: i32, %arg2: memref<1x16x10x10xf32, #tpu.memory_space<vmem>>, %arg3: memref<25x8x4xbf16, #tpu.memory_space<vmem>>, %arg4: memref<1x1x8x64xbf16, #tpu.memory_space<vmem>>, %arg5: memref<1x1x8x1xf32, #tpu.memory_space<vmem>>, %arg6: memref<1x1x8x1xf32, #tpu.memory_space<vmem>>) attributes {dimension_semantics = [#tpu.dimension_semantics<parallel>, #tpu.dimension_semantics<parallel>], iteration_bounds = array<i64: 2, 4>, scalar_prefetch = 0 : i64, scratch_operands = 0 : i64, tpu.core_type = #tpu.core_type<tc>, window_params = [{transform_indices = @transform_0, window_bounds = array<i64: 1, 16, 10, 10>}, {pipeline_mode = #tpu.pipeline_mode<synchronous>, transform_indices = @transform_1, window_bounds = array<i64: 25, 8, 4>}, {transform_indices = @transform_2, window_bounds = array<i64: 1, 1, 8, 64>}, {transform_indices = @transform_3, window_bounds = array<i64: 1, 1, 8, 1>}, {transform_indices = @transform_4, window_bounds = array<i64: 1, 1, 8, 1>}]} {
    %cst = arith.constant 0.000000e+00 : f32
    %0 = vector.broadcast %cst : f32 to vector<8x64xf32>
    %c0 = arith.constant 0 : index
    %c0_0 = arith.constant 0 : index
    %c0_1 = arith.constant 0 : index
    %c0_2 = arith.constant 0 : index
    %1 = vector.load %arg2[%c0, %c0_0, %c0_1, %c0_2] : memref<1x16x10x10xf32, #tpu.memory_space<vmem>>, vector<1x4x8x8xf32>
    %2 = vector.shape_cast %1 : vector<1x4x8x8xf32> to vector<4x8x8xf32>
    %3 = vector.shape_cast %2 : vector<4x8x8xf32> to vector<4x64xf32>
    %4 = arith.truncf %3 : vector<4x64xf32> to vector<4x64xbf16>
    %c0_3 = arith.constant 0 : index
    %c0_4 = arith.constant 0 : index
    %c0_5 = arith.constant 0 : index
    %5 = vector.load %arg3[%c0_3, %c0_4, %c0_5] : memref<25x8x4xbf16, #tpu.memory_space<vmem>>, vector<1x8x4xbf16>
    %6 = vector.shape_cast %5 : vector<1x8x4xbf16> to vector<8x4xbf16>
    %cst_6 = arith.constant dense<0.000000e+00> : vector<8x64xf32>
    %7 = tpu.matmul %6, %4, %cst_6 {dimension_numbers = #tpu.dot_dimension_numbers<[1], [0], [0], [1], [0, 0, 1, 1], [], []>} : vector<8x4xbf16>, vector<4x64xbf16>, vector<8x64xf32> -> vector<8x64xf32>
    %8 = arith.addf %0, %7 : vector<8x64xf32>
    %c0_7 = arith.constant 0 : index
    %c4 = arith.constant 4 : index
    %c0_8 = arith.constant 0 : index
    %c0_9 = arith.constant 0 : index
    %9 = vector.load %arg2[%c0_7, %c4, %c0_8, %c0_9] : memref<1x16x10x10xf32, #tpu.memory_space<vmem>>, vector<1x4x8x8xf32>
    %10 = vector.shape_cast %9 : vector<1x4x8x8xf32> to vector<4x8x8xf32>
    %11 = vector.shape_cast %10 : vector<4x8x8xf32> to vector<4x64xf32>
    %12 = arith.truncf %11 : vector<4x64xf32> to vector<4x64xbf16>
    %c1 = arith.constant 1 : index
    %c0_10 = arith.constant 0 : index
    %c0_11 = arith.constant 0 : index
    %13 = vector.load %arg3[%c1, %c0_10, %c0_11] : memref<25x8x4xbf16, #tpu.memory_space<vmem>>, vector<1x8x4xbf16>
    %14 = vector.shape_cast %13 : vector<1x8x4xbf16> to vector<8x4xbf16>
    %cst_12 = arith.constant dense<0.000000e+00> : vector<8x64xf32>
    %15 = tpu.matmul %14, %12, %cst_12 {dimension_numbers = #tpu.dot_dimension_numbers<[1], [0], [0], [1], [0, 0, 1, 1], [], []>} : vector<8x4xbf16>, vector<4x64xbf16>, vector<8x64xf32> -> vector<8x64xf32>
    %16 = arith.addf %8, %15 : vector<8x64xf32>
    %c0_13 = arith.constant 0 : index
    %c0_14 = arith.constant 0 : index
    %c0_15 = arith.constant 0 : index
    %c1_16 = arith.constant 1 : index
    %17 = vector.load %arg2[%c0_13, %c0_14, %c0_15, %c1_16] : memref<1x16x10x10xf32, #tpu.memory_space<vmem>>, vector<1x4x8x8xf32>
    %18 = vector.shape_cast %17 : vector<1x4x8x8xf32> to vector<4x8x8xf32>
    %19 = vector.shape_cast %18 : vector<4x8x8xf32> to vector<4x64xf32>
    %20 = arith.truncf %19 : vector<4x64xf32> to vector<4x64xbf16>
    %c2 = arith.constant 2 : index
    %c0_17 = arith.constant 0 : index
    %c0_18 = arith.constant 0 : index
    %21 = vector.load %arg3[%c2, %c0_17, %c0_18] : memref<25x8x4xbf16, #tpu.memory_space<vmem>>, vector<1x8x4xbf16>
    %22 = vector.shape_cast %21 : vector<1x8x4xbf16> to vector<8x4xbf16>
    %cst_19 = arith.constant dense<0.000000e+00> : vector<8x64xf32>
    %23 = tpu.matmul %22, %20, %cst_19 {dimension_numbers = #tpu.dot_dimension_numbers<[1], [0], [0], [1], [0, 0, 1, 1], [], []>} : vector<8x4xbf16>, vector<4x64xbf16>, vector<8x64xf32> -> vector<8x64xf32>
    %24 = arith.addf %16, %23 : vector<8x64xf32>
    %c0_20 = arith.constant 0 : index
    %c4_21 = arith.constant 4 : index
    %c0_22 = arith.constant 0 : index
    %c1_23 = arith.constant 1 : index
    %25 = vector.load %arg2[%c0_20, %c4_21, %c0_22, %c1_23] : memref<1x16x10x10xf32, #tpu.memory_space<vmem>>, vector<1x4x8x8xf32>
    %26 = vector.shape_cast %25 : vector<1x4x8x8xf32> to vector<4x8x8xf32>
    %27 = vector.shape_cast %26 : vector<4x8x8xf32> to vector<4x64xf32>
    %28 = arith.truncf %27 : vector<4x64xf32> to vector<4x64xbf16>
    %c3 = arith.constant 3 : index
    %c0_24 = arith.constant 0 : index
    %c0_25 = arith.constant 0 : index
    %29 = vector.load %arg3[%c3, %c0_24, %c0_25] : memref<25x8x4xbf16, #tpu.memory_space<vmem>>, vector<1x8x4xbf16>
    %30 = vector.shape_cast %29 : vector<1x8x4xbf16> to vector<8x4xbf16>
    %cst_26 = arith.constant dense<0.000000e+00> : vector<8x64xf32>
    %31 = tpu.matmul %30, %28, %cst_26 {dimension_numbers = #tpu.dot_dimension_numbers<[1], [0], [0], [1], [0, 0, 1, 1], [], []>} : vector<8x4xbf16>, vector<4x64xbf16>, vector<8x64xf32> -> vector<8x64xf32>
    %32 = arith.addf %24, %31 : vector<8x64xf32>
    %c0_27 = arith.constant 0 : index
    %c0_28 = arith.constant 0 : index
    %c0_29 = arith.constant 0 : index
    %c2_30 = arith.constant 2 : index
    %33 = vector.load %arg2[%c0_27, %c0_28, %c0_29, %c2_30] : memref<1x16x10x10xf32, #tpu.memory_space<vmem>>, vector<1x4x8x8xf32>
    %34 = vector.shape_cast %33 : vector<1x4x8x8xf32> to vector<4x8x8xf32>
    %35 = vector.shape_cast %34 : vector<4x8x8xf32> to vector<4x64xf32>
    %36 = arith.truncf %35 : vector<4x64xf32> to vector<4x64xbf16>
    %c4_31 = arith.constant 4 : index
    %c0_32 = arith.constant 0 : index
    %c0_33 = arith.constant 0 : index
    %37 = vector.load %arg3[%c4_31, %c0_32, %c0_33] : memref<25x8x4xbf16, #tpu.memory_space<vmem>>, vector<1x8x4xbf16>
    %38 = vector.shape_cast %37 : vector<1x8x4xbf16> to vector<8x4xbf16>
    %cst_34 = arith.constant dense<0.000000e+00> : vector<8x64xf32>
    %39 = tpu.matmul %38, %36, %cst_34 {dimension_numbers = #tpu.dot_dimension_numbers<[1], [0], [0], [1], [0, 0, 1, 1], [], []>} : vector<8x4xbf16>, vector<4x64xbf16>, vector<8x64xf32> -> vector<8x64xf32>
    %40 = arith.addf %32, %39 : vector<8x64xf32>
    %c0_35 = arith.constant 0 : index
    %c8 = arith.constant 8 : index
    %c0_36 = arith.constant 0 : index
    %c0_37 = arith.constant 0 : index
    %41 = vector.load %arg2[%c0_35, %c8, %c0_36, %c0_37] : memref<1x16x10x10xf32, #tpu.memory_space<vmem>>, vector<1x4x8x8xf32>
    %42 = vector.shape_cast %41 : vector<1x4x8x8xf32> to vector<4x8x8xf32>
    %43 = vector.shape_cast %42 : vector<4x8x8xf32> to vector<4x64xf32>
    %44 = arith.truncf %43 : vector<4x64xf32> to vector<4x64xbf16>
    %c5 = arith.constant 5 : index
    %c0_38 = arith.constant 0 : index
    %c0_39 = arith.constant 0 : index
    %45 = vector.load %arg3[%c5, %c0_38, %c0_39] : memref<25x8x4xbf16, #tpu.memory_space<vmem>>, vector<1x8x4xbf16>
    %46 = vector.shape_cast %45 : vector<1x8x4xbf16> to vector<8x4xbf16>
    %cst_40 = arith.constant dense<0.000000e+00> : vector<8x64xf32>
    %47 = tpu.matmul %46, %44, %cst_40 {dimension_numbers = #tpu.dot_dimension_numbers<[1], [0], [0], [1], [0, 0, 1, 1], [], []>} : vector<8x4xbf16>, vector<4x64xbf16>, vector<8x64xf32> -> vector<8x64xf32>
    %48 = arith.addf %40, %47 : vector<8x64xf32>
    %c0_41 = arith.constant 0 : index
    %c12 = arith.constant 12 : index
    %c0_42 = arith.constant 0 : index
    %c0_43 = arith.constant 0 : index
    %49 = vector.load %arg2[%c0_41, %c12, %c0_42, %c0_43] : memref<1x16x10x10xf32, #tpu.memory_space<vmem>>, vector<1x4x8x8xf32>
    %50 = vector.shape_cast %49 : vector<1x4x8x8xf32> to vector<4x8x8xf32>
    %51 = vector.shape_cast %50 : vector<4x8x8xf32> to vector<4x64xf32>
    %52 = arith.truncf %51 : vector<4x64xf32> to vector<4x64xbf16>
    %c6 = arith.constant 6 : index
    %c0_44 = arith.constant 0 : index
    %c0_45 = arith.constant 0 : index
    %53 = vector.load %arg3[%c6, %c0_44, %c0_45] : memref<25x8x4xbf16, #tpu.memory_space<vmem>>, vector<1x8x4xbf16>
    %54 = vector.shape_cast %53 : vector<1x8x4xbf16> to vector<8x4xbf16>
    %cst_46 = arith.constant dense<0.000000e+00> : vector<8x64xf32>
    %55 = tpu.matmul %54, %52, %cst_46 {dimension_numbers = #tpu.dot_dimension_numbers<[1], [0], [0], [1], [0, 0, 1, 1], [], []>} : vector<8x4xbf16>, vector<4x64xbf16>, vector<8x64xf32> -> vector<8x64xf32>
    %56 = arith.addf %48, %55 : vector<8x64xf32>
    %c0_47 = arith.constant 0 : index
    %c8_48 = arith.constant 8 : index
    %c0_49 = arith.constant 0 : index
    %c1_50 = arith.constant 1 : index
    %57 = vector.load %arg2[%c0_47, %c8_48, %c0_49, %c1_50] : memref<1x16x10x10xf32, #tpu.memory_space<vmem>>, vector<1x4x8x8xf32>
    %58 = vector.shape_cast %57 : vector<1x4x8x8xf32> to vector<4x8x8xf32>
    %59 = vector.shape_cast %58 : vector<4x8x8xf32> to vector<4x64xf32>
    %60 = arith.truncf %59 : vector<4x64xf32> to vector<4x64xbf16>
    %c7 = arith.constant 7 : index
    %c0_51 = arith.constant 0 : index
    %c0_52 = arith.constant 0 : index
    %61 = vector.load %arg3[%c7, %c0_51, %c0_52] : memref<25x8x4xbf16, #tpu.memory_space<vmem>>, vector<1x8x4xbf16>
    %62 = vector.shape_cast %61 : vector<1x8x4xbf16> to vector<8x4xbf16>
    %cst_53 = arith.constant dense<0.000000e+00> : vector<8x64xf32>
    %63 = tpu.matmul %62, %60, %cst_53 {dimension_numbers = #tpu.dot_dimension_numbers<[1], [0], [0], [1], [0, 0, 1, 1], [], []>} : vector<8x4xbf16>, vector<4x64xbf16>, vector<8x64xf32> -> vector<8x64xf32>
    %64 = arith.addf %56, %63 : vector<8x64xf32>
    %c0_54 = arith.constant 0 : index
    %c12_55 = arith.constant 12 : index
    %c0_56 = arith.constant 0 : index
    %c1_57 = arith.constant 1 : index
    %65 = vector.load %arg2[%c0_54, %c12_55, %c0_56, %c1_57] : memref<1x16x10x10xf32, #tpu.memory_space<vmem>>, vector<1x4x8x8xf32>
    %66 = vector.shape_cast %65 : vector<1x4x8x8xf32> to vector<4x8x8xf32>
    %67 = vector.shape_cast %66 : vector<4x8x8xf32> to vector<4x64xf32>
    %68 = arith.truncf %67 : vector<4x64xf32> to vector<4x64xbf16>
    %c8_58 = arith.constant 8 : index
    %c0_59 = arith.constant 0 : index
    %c0_60 = arith.constant 0 : index
    %69 = vector.load %arg3[%c8_58, %c0_59, %c0_60] : memref<25x8x4xbf16, #tpu.memory_space<vmem>>, vector<1x8x4xbf16>
    %70 = vector.shape_cast %69 : vector<1x8x4xbf16> to vector<8x4xbf16>
    %cst_61 = arith.constant dense<0.000000e+00> : vector<8x64xf32>
    %71 = tpu.matmul %70, %68, %cst_61 {dimension_numbers = #tpu.dot_dimension_numbers<[1], [0], [0], [1], [0, 0, 1, 1], [], []>} : vector<8x4xbf16>, vector<4x64xbf16>, vector<8x64xf32> -> vector<8x64xf32>
    %72 = arith.addf %64, %71 : vector<8x64xf32>
    %c0_62 = arith.constant 0 : index
    %c8_63 = arith.constant 8 : index
    %c0_64 = arith.constant 0 : index
    %c2_65 = arith.constant 2 : index
    %73 = vector.load %arg2[%c0_62, %c8_63, %c0_64, %c2_65] : memref<1x16x10x10xf32, #tpu.memory_space<vmem>>, vector<1x4x8x8xf32>
    %74 = vector.shape_cast %73 : vector<1x4x8x8xf32> to vector<4x8x8xf32>
    %75 = vector.shape_cast %74 : vector<4x8x8xf32> to vector<4x64xf32>
    %76 = arith.truncf %75 : vector<4x64xf32> to vector<4x64xbf16>
    %c9 = arith.constant 9 : index
    %c0_66 = arith.constant 0 : index
    %c0_67 = arith.constant 0 : index
    %77 = vector.load %arg3[%c9, %c0_66, %c0_67] : memref<25x8x4xbf16, #tpu.memory_space<vmem>>, vector<1x8x4xbf16>
    %78 = vector.shape_cast %77 : vector<1x8x4xbf16> to vector<8x4xbf16>
    %cst_68 = arith.constant dense<0.000000e+00> : vector<8x64xf32>
    %79 = tpu.matmul %78, %76, %cst_68 {dimension_numbers = #tpu.dot_dimension_numbers<[1], [0], [0], [1], [0, 0, 1, 1], [], []>} : vector<8x4xbf16>, vector<4x64xbf16>, vector<8x64xf32> -> vector<8x64xf32>
    %80 = arith.addf %72, %79 : vector<8x64xf32>
    %c0_69 = arith.constant 0 : index
    %c0_70 = arith.constant 0 : index
    %c1_71 = arith.constant 1 : index
    %c0_72 = arith.constant 0 : index
    %81 = vector.load %arg2[%c0_69, %c0_70, %c1_71, %c0_72] : memref<1x16x10x10xf32, #tpu.memory_space<vmem>>, vector<1x4x8x8xf32>
    %82 = vector.shape_cast %81 : vector<1x4x8x8xf32> to vector<4x8x8xf32>
    %83 = vector.shape_cast %82 : vector<4x8x8xf32> to vector<4x64xf32>
    %84 = arith.truncf %83 : vector<4x64xf32> to vector<4x64xbf16>
    %c10 = arith.constant 10 : index
    %c0_73 = arith.constant 0 : index
    %c0_74 = arith.constant 0 : index
    %85 = vector.load %arg3[%c10, %c0_73, %c0_74] : memref<25x8x4xbf16, #tpu.memory_space<vmem>>, vector<1x8x4xbf16>
    %86 = vector.shape_cast %85 : vector<1x8x4xbf16> to vector<8x4xbf16>
    %cst_75 = arith.constant dense<0.000000e+00> : vector<8x64xf32>
    %87 = tpu.matmul %86, %84, %cst_75 {dimension_numbers = #tpu.dot_dimension_numbers<[1], [0], [0], [1], [0, 0, 1, 1], [], []>} : vector<8x4xbf16>, vector<4x64xbf16>, vector<8x64xf32> -> vector<8x64xf32>
    %88 = arith.addf %80, %87 : vector<8x64xf32>
    %c0_76 = arith.constant 0 : index
    %c4_77 = arith.constant 4 : index
    %c1_78 = arith.constant 1 : index
    %c0_79 = arith.constant 0 : index
    %89 = vector.load %arg2[%c0_76, %c4_77, %c1_78, %c0_79] : memref<1x16x10x10xf32, #tpu.memory_space<vmem>>, vector<1x4x8x8xf32>
    %90 = vector.shape_cast %89 : vector<1x4x8x8xf32> to vector<4x8x8xf32>
    %91 = vector.shape_cast %90 : vector<4x8x8xf32> to vector<4x64xf32>
    %92 = arith.truncf %91 : vector<4x64xf32> to vector<4x64xbf16>
    %c11 = arith.constant 11 : index
    %c0_80 = arith.constant 0 : index
    %c0_81 = arith.constant 0 : index
    %93 = vector.load %arg3[%c11, %c0_80, %c0_81] : memref<25x8x4xbf16, #tpu.memory_space<vmem>>, vector<1x8x4xbf16>
    %94 = vector.shape_cast %93 : vector<1x8x4xbf16> to vector<8x4xbf16>
    %cst_82 = arith.constant dense<0.000000e+00> : vector<8x64xf32>
    %95 = tpu.matmul %94, %92, %cst_82 {dimension_numbers = #tpu.dot_dimension_numbers<[1], [0], [0], [1], [0, 0, 1, 1], [], []>} : vector<8x4xbf16>, vector<4x64xbf16>, vector<8x64xf32> -> vector<8x64xf32>
    %96 = arith.addf %88, %95 : vector<8x64xf32>
    %c0_83 = arith.constant 0 : index
    %c0_84 = arith.constant 0 : index
    %c1_85 = arith.constant 1 : index
    %c1_86 = arith.constant 1 : index
    %97 = vector.load %arg2[%c0_83, %c0_84, %c1_85, %c1_86] : memref<1x16x10x10xf32, #tpu.memory_space<vmem>>, vector<1x4x8x8xf32>
    %98 = vector.shape_cast %97 : vector<1x4x8x8xf32> to vector<4x8x8xf32>
    %99 = vector.shape_cast %98 : vector<4x8x8xf32> to vector<4x64xf32>
    %100 = arith.truncf %99 : vector<4x64xf32> to vector<4x64xbf16>
    %c12_87 = arith.constant 12 : index
    %c0_88 = arith.constant 0 : index
    %c0_89 = arith.constant 0 : index
    %101 = vector.load %arg3[%c12_87, %c0_88, %c0_89] : memref<25x8x4xbf16, #tpu.memory_space<vmem>>, vector<1x8x4xbf16>
    %102 = vector.shape_cast %101 : vector<1x8x4xbf16> to vector<8x4xbf16>
    %cst_90 = arith.constant dense<0.000000e+00> : vector<8x64xf32>
    %103 = tpu.matmul %102, %100, %cst_90 {dimension_numbers = #tpu.dot_dimension_numbers<[1], [0], [0], [1], [0, 0, 1, 1], [], []>} : vector<8x4xbf16>, vector<4x64xbf16>, vector<8x64xf32> -> vector<8x64xf32>
    %104 = arith.addf %96, %103 : vector<8x64xf32>
    %c0_91 = arith.constant 0 : index
    %c4_92 = arith.constant 4 : index
    %c1_93 = arith.constant 1 : index
    %c1_94 = arith.constant 1 : index
    %105 = vector.load %arg2[%c0_91, %c4_92, %c1_93, %c1_94] : memref<1x16x10x10xf32, #tpu.memory_space<vmem>>, vector<1x4x8x8xf32>
    %106 = vector.shape_cast %105 : vector<1x4x8x8xf32> to vector<4x8x8xf32>
    %107 = vector.shape_cast %106 : vector<4x8x8xf32> to vector<4x64xf32>
    %108 = arith.truncf %107 : vector<4x64xf32> to vector<4x64xbf16>
    %c13 = arith.constant 13 : index
    %c0_95 = arith.constant 0 : index
    %c0_96 = arith.constant 0 : index
    %109 = vector.load %arg3[%c13, %c0_95, %c0_96] : memref<25x8x4xbf16, #tpu.memory_space<vmem>>, vector<1x8x4xbf16>
    %110 = vector.shape_cast %109 : vector<1x8x4xbf16> to vector<8x4xbf16>
    %cst_97 = arith.constant dense<0.000000e+00> : vector<8x64xf32>
    %111 = tpu.matmul %110, %108, %cst_97 {dimension_numbers = #tpu.dot_dimension_numbers<[1], [0], [0], [1], [0, 0, 1, 1], [], []>} : vector<8x4xbf16>, vector<4x64xbf16>, vector<8x64xf32> -> vector<8x64xf32>
    %112 = arith.addf %104, %111 : vector<8x64xf32>
    %c0_98 = arith.constant 0 : index
    %c0_99 = arith.constant 0 : index
    %c1_100 = arith.constant 1 : index
    %c2_101 = arith.constant 2 : index
    %113 = vector.load %arg2[%c0_98, %c0_99, %c1_100, %c2_101] : memref<1x16x10x10xf32, #tpu.memory_space<vmem>>, vector<1x4x8x8xf32>
    %114 = vector.shape_cast %113 : vector<1x4x8x8xf32> to vector<4x8x8xf32>
    %115 = vector.shape_cast %114 : vector<4x8x8xf32> to vector<4x64xf32>
    %116 = arith.truncf %115 : vector<4x64xf32> to vector<4x64xbf16>
    %c14 = arith.constant 14 : index
    %c0_102 = arith.constant 0 : index
    %c0_103 = arith.constant 0 : index
    %117 = vector.load %arg3[%c14, %c0_102, %c0_103] : memref<25x8x4xbf16, #tpu.memory_space<vmem>>, vector<1x8x4xbf16>
    %118 = vector.shape_cast %117 : vector<1x8x4xbf16> to vector<8x4xbf16>
    %cst_104 = arith.constant dense<0.000000e+00> : vector<8x64xf32>
    %119 = tpu.matmul %118, %116, %cst_104 {dimension_numbers = #tpu.dot_dimension_numbers<[1], [0], [0], [1], [0, 0, 1, 1], [], []>} : vector<8x4xbf16>, vector<4x64xbf16>, vector<8x64xf32> -> vector<8x64xf32>
    %120 = arith.addf %112, %119 : vector<8x64xf32>
    %c0_105 = arith.constant 0 : index
    %c8_106 = arith.constant 8 : index
    %c1_107 = arith.constant 1 : index
    %c0_108 = arith.constant 0 : index
    %121 = vector.load %arg2[%c0_105, %c8_106, %c1_107, %c0_108] : memref<1x16x10x10xf32, #tpu.memory_space<vmem>>, vector<1x4x8x8xf32>
    %122 = vector.shape_cast %121 : vector<1x4x8x8xf32> to vector<4x8x8xf32>
    %123 = vector.shape_cast %122 : vector<4x8x8xf32> to vector<4x64xf32>
    %124 = arith.truncf %123 : vector<4x64xf32> to vector<4x64xbf16>
    %c15 = arith.constant 15 : index
    %c0_109 = arith.constant 0 : index
    %c0_110 = arith.constant 0 : index
    %125 = vector.load %arg3[%c15, %c0_109, %c0_110] : memref<25x8x4xbf16, #tpu.memory_space<vmem>>, vector<1x8x4xbf16>
    %126 = vector.shape_cast %125 : vector<1x8x4xbf16> to vector<8x4xbf16>
    %cst_111 = arith.constant dense<0.000000e+00> : vector<8x64xf32>
    %127 = tpu.matmul %126, %124, %cst_111 {dimension_numbers = #tpu.dot_dimension_numbers<[1], [0], [0], [1], [0, 0, 1, 1], [], []>} : vector<8x4xbf16>, vector<4x64xbf16>, vector<8x64xf32> -> vector<8x64xf32>
    %128 = arith.addf %120, %127 : vector<8x64xf32>
    %c0_112 = arith.constant 0 : index
    %c12_113 = arith.constant 12 : index
    %c1_114 = arith.constant 1 : index
    %c0_115 = arith.constant 0 : index
    %129 = vector.load %arg2[%c0_112, %c12_113, %c1_114, %c0_115] : memref<1x16x10x10xf32, #tpu.memory_space<vmem>>, vector<1x4x8x8xf32>
    %130 = vector.shape_cast %129 : vector<1x4x8x8xf32> to vector<4x8x8xf32>
    %131 = vector.shape_cast %130 : vector<4x8x8xf32> to vector<4x64xf32>
    %132 = arith.truncf %131 : vector<4x64xf32> to vector<4x64xbf16>
    %c16 = arith.constant 16 : index
    %c0_116 = arith.constant 0 : index
    %c0_117 = arith.constant 0 : index
    %133 = vector.load %arg3[%c16, %c0_116, %c0_117] : memref<25x8x4xbf16, #tpu.memory_space<vmem>>, vector<1x8x4xbf16>
    %134 = vector.shape_cast %133 : vector<1x8x4xbf16> to vector<8x4xbf16>
    %cst_118 = arith.constant dense<0.000000e+00> : vector<8x64xf32>
    %135 = tpu.matmul %134, %132, %cst_118 {dimension_numbers = #tpu.dot_dimension_numbers<[1], [0], [0], [1], [0, 0, 1, 1], [], []>} : vector<8x4xbf16>, vector<4x64xbf16>, vector<8x64xf32> -> vector<8x64xf32>
    %136 = arith.addf %128, %135 : vector<8x64xf32>
    %c0_119 = arith.constant 0 : index
    %c8_120 = arith.constant 8 : index
    %c1_121 = arith.constant 1 : index
    %c1_122 = arith.constant 1 : index
    %137 = vector.load %arg2[%c0_119, %c8_120, %c1_121, %c1_122] : memref<1x16x10x10xf32, #tpu.memory_space<vmem>>, vector<1x4x8x8xf32>
    %138 = vector.shape_cast %137 : vector<1x4x8x8xf32> to vector<4x8x8xf32>
    %139 = vector.shape_cast %138 : vector<4x8x8xf32> to vector<4x64xf32>
    %140 = arith.truncf %139 : vector<4x64xf32> to vector<4x64xbf16>
    %c17 = arith.constant 17 : index
    %c0_123 = arith.constant 0 : index
    %c0_124 = arith.constant 0 : index
    %141 = vector.load %arg3[%c17, %c0_123, %c0_124] : memref<25x8x4xbf16, #tpu.memory_space<vmem>>, vector<1x8x4xbf16>
    %142 = vector.shape_cast %141 : vector<1x8x4xbf16> to vector<8x4xbf16>
    %cst_125 = arith.constant dense<0.000000e+00> : vector<8x64xf32>
    %143 = tpu.matmul %142, %140, %cst_125 {dimension_numbers = #tpu.dot_dimension_numbers<[1], [0], [0], [1], [0, 0, 1, 1], [], []>} : vector<8x4xbf16>, vector<4x64xbf16>, vector<8x64xf32> -> vector<8x64xf32>
    %144 = arith.addf %136, %143 : vector<8x64xf32>
    %c0_126 = arith.constant 0 : index
    %c12_127 = arith.constant 12 : index
    %c1_128 = arith.constant 1 : index
    %c1_129 = arith.constant 1 : index
    %145 = vector.load %arg2[%c0_126, %c12_127, %c1_128, %c1_129] : memref<1x16x10x10xf32, #tpu.memory_space<vmem>>, vector<1x4x8x8xf32>
    %146 = vector.shape_cast %145 : vector<1x4x8x8xf32> to vector<4x8x8xf32>
    %147 = vector.shape_cast %146 : vector<4x8x8xf32> to vector<4x64xf32>
    %148 = arith.truncf %147 : vector<4x64xf32> to vector<4x64xbf16>
    %c18 = arith.constant 18 : index
    %c0_130 = arith.constant 0 : index
    %c0_131 = arith.constant 0 : index
    %149 = vector.load %arg3[%c18, %c0_130, %c0_131] : memref<25x8x4xbf16, #tpu.memory_space<vmem>>, vector<1x8x4xbf16>
    %150 = vector.shape_cast %149 : vector<1x8x4xbf16> to vector<8x4xbf16>
    %cst_132 = arith.constant dense<0.000000e+00> : vector<8x64xf32>
    %151 = tpu.matmul %150, %148, %cst_132 {dimension_numbers = #tpu.dot_dimension_numbers<[1], [0], [0], [1], [0, 0, 1, 1], [], []>} : vector<8x4xbf16>, vector<4x64xbf16>, vector<8x64xf32> -> vector<8x64xf32>
    %152 = arith.addf %144, %151 : vector<8x64xf32>
    %c0_133 = arith.constant 0 : index
    %c8_134 = arith.constant 8 : index
    %c1_135 = arith.constant 1 : index
    %c2_136 = arith.constant 2 : index
    %153 = vector.load %arg2[%c0_133, %c8_134, %c1_135, %c2_136] : memref<1x16x10x10xf32, #tpu.memory_space<vmem>>, vector<1x4x8x8xf32>
    %154 = vector.shape_cast %153 : vector<1x4x8x8xf32> to vector<4x8x8xf32>
    %155 = vector.shape_cast %154 : vector<4x8x8xf32> to vector<4x64xf32>
    %156 = arith.truncf %155 : vector<4x64xf32> to vector<4x64xbf16>
    %c19 = arith.constant 19 : index
    %c0_137 = arith.constant 0 : index
    %c0_138 = arith.constant 0 : index
    %157 = vector.load %arg3[%c19, %c0_137, %c0_138] : memref<25x8x4xbf16, #tpu.memory_space<vmem>>, vector<1x8x4xbf16>
    %158 = vector.shape_cast %157 : vector<1x8x4xbf16> to vector<8x4xbf16>
    %cst_139 = arith.constant dense<0.000000e+00> : vector<8x64xf32>
    %159 = tpu.matmul %158, %156, %cst_139 {dimension_numbers = #tpu.dot_dimension_numbers<[1], [0], [0], [1], [0, 0, 1, 1], [], []>} : vector<8x4xbf16>, vector<4x64xbf16>, vector<8x64xf32> -> vector<8x64xf32>
    %160 = arith.addf %152, %159 : vector<8x64xf32>
    %c0_140 = arith.constant 0 : index
    %c0_141 = arith.constant 0 : index
    %c2_142 = arith.constant 2 : index
    %c0_143 = arith.constant 0 : index
    %161 = vector.load %arg2[%c0_140, %c0_141, %c2_142, %c0_143] : memref<1x16x10x10xf32, #tpu.memory_space<vmem>>, vector<1x4x8x8xf32>
    %162 = vector.shape_cast %161 : vector<1x4x8x8xf32> to vector<4x8x8xf32>
    %163 = vector.shape_cast %162 : vector<4x8x8xf32> to vector<4x64xf32>
    %164 = arith.truncf %163 : vector<4x64xf32> to vector<4x64xbf16>
    %c20 = arith.constant 20 : index
    %c0_144 = arith.constant 0 : index
    %c0_145 = arith.constant 0 : index
    %165 = vector.load %arg3[%c20, %c0_144, %c0_145] : memref<25x8x4xbf16, #tpu.memory_space<vmem>>, vector<1x8x4xbf16>
    %166 = vector.shape_cast %165 : vector<1x8x4xbf16> to vector<8x4xbf16>
    %cst_146 = arith.constant dense<0.000000e+00> : vector<8x64xf32>
    %167 = tpu.matmul %166, %164, %cst_146 {dimension_numbers = #tpu.dot_dimension_numbers<[1], [0], [0], [1], [0, 0, 1, 1], [], []>} : vector<8x4xbf16>, vector<4x64xbf16>, vector<8x64xf32> -> vector<8x64xf32>
    %168 = arith.addf %160, %167 : vector<8x64xf32>
    %c0_147 = arith.constant 0 : index
    %c4_148 = arith.constant 4 : index
    %c2_149 = arith.constant 2 : index
    %c0_150 = arith.constant 0 : index
    %169 = vector.load %arg2[%c0_147, %c4_148, %c2_149, %c0_150] : memref<1x16x10x10xf32, #tpu.memory_space<vmem>>, vector<1x4x8x8xf32>
    %170 = vector.shape_cast %169 : vector<1x4x8x8xf32> to vector<4x8x8xf32>
    %171 = vector.shape_cast %170 : vector<4x8x8xf32> to vector<4x64xf32>
    %172 = arith.truncf %171 : vector<4x64xf32> to vector<4x64xbf16>
    %c21 = arith.constant 21 : index
    %c0_151 = arith.constant 0 : index
    %c0_152 = arith.constant 0 : index
    %173 = vector.load %arg3[%c21, %c0_151, %c0_152] : memref<25x8x4xbf16, #tpu.memory_space<vmem>>, vector<1x8x4xbf16>
    %174 = vector.shape_cast %173 : vector<1x8x4xbf16> to vector<8x4xbf16>
    %cst_153 = arith.constant dense<0.000000e+00> : vector<8x64xf32>
    %175 = tpu.matmul %174, %172, %cst_153 {dimension_numbers = #tpu.dot_dimension_numbers<[1], [0], [0], [1], [0, 0, 1, 1], [], []>} : vector<8x4xbf16>, vector<4x64xbf16>, vector<8x64xf32> -> vector<8x64xf32>
    %176 = arith.addf %168, %175 : vector<8x64xf32>
    %c0_154 = arith.constant 0 : index
    %c0_155 = arith.constant 0 : index
    %c2_156 = arith.constant 2 : index
    %c1_157 = arith.constant 1 : index
    %177 = vector.load %arg2[%c0_154, %c0_155, %c2_156, %c1_157] : memref<1x16x10x10xf32, #tpu.memory_space<vmem>>, vector<1x4x8x8xf32>
    %178 = vector.shape_cast %177 : vector<1x4x8x8xf32> to vector<4x8x8xf32>
    %179 = vector.shape_cast %178 : vector<4x8x8xf32> to vector<4x64xf32>
    %180 = arith.truncf %179 : vector<4x64xf32> to vector<4x64xbf16>
    %c22 = arith.constant 22 : index
    %c0_158 = arith.constant 0 : index
    %c0_159 = arith.constant 0 : index
    %181 = vector.load %arg3[%c22, %c0_158, %c0_159] : memref<25x8x4xbf16, #tpu.memory_space<vmem>>, vector<1x8x4xbf16>
    %182 = vector.shape_cast %181 : vector<1x8x4xbf16> to vector<8x4xbf16>
    %cst_160 = arith.constant dense<0.000000e+00> : vector<8x64xf32>
    %183 = tpu.matmul %182, %180, %cst_160 {dimension_numbers = #tpu.dot_dimension_numbers<[1], [0], [0], [1], [0, 0, 1, 1], [], []>} : vector<8x4xbf16>, vector<4x64xbf16>, vector<8x64xf32> -> vector<8x64xf32>
    %184 = arith.addf %176, %183 : vector<8x64xf32>
    %c0_161 = arith.constant 0 : index
    %c4_162 = arith.constant 4 : index
    %c2_163 = arith.constant 2 : index
    %c1_164 = arith.constant 1 : index
    %185 = vector.load %arg2[%c0_161, %c4_162, %c2_163, %c1_164] : memref<1x16x10x10xf32, #tpu.memory_space<vmem>>, vector<1x4x8x8xf32>
    %186 = vector.shape_cast %185 : vector<1x4x8x8xf32> to vector<4x8x8xf32>
    %187 = vector.shape_cast %186 : vector<4x8x8xf32> to vector<4x64xf32>
    %188 = arith.truncf %187 : vector<4x64xf32> to vector<4x64xbf16>
    %c23 = arith.constant 23 : index
    %c0_165 = arith.constant 0 : index
    %c0_166 = arith.constant 0 : index
    %189 = vector.load %arg3[%c23, %c0_165, %c0_166] : memref<25x8x4xbf16, #tpu.memory_space<vmem>>, vector<1x8x4xbf16>
    %190 = vector.shape_cast %189 : vector<1x8x4xbf16> to vector<8x4xbf16>
    %cst_167 = arith.constant dense<0.000000e+00> : vector<8x64xf32>
    %191 = tpu.matmul %190, %188, %cst_167 {dimension_numbers = #tpu.dot_dimension_numbers<[1], [0], [0], [1], [0, 0, 1, 1], [], []>} : vector<8x4xbf16>, vector<4x64xbf16>, vector<8x64xf32> -> vector<8x64xf32>
    %192 = arith.addf %184, %191 : vector<8x64xf32>
    %c0_168 = arith.constant 0 : index
    %c0_169 = arith.constant 0 : index
    %c2_170 = arith.constant 2 : index
    %c2_171 = arith.constant 2 : index
    %193 = vector.load %arg2[%c0_168, %c0_169, %c2_170, %c2_171] : memref<1x16x10x10xf32, #tpu.memory_space<vmem>>, vector<1x4x8x8xf32>
    %194 = vector.shape_cast %193 : vector<1x4x8x8xf32> to vector<4x8x8xf32>
    %195 = vector.shape_cast %194 : vector<4x8x8xf32> to vector<4x64xf32>
    %196 = arith.truncf %195 : vector<4x64xf32> to vector<4x64xbf16>
    %c24 = arith.constant 24 : index
    %c0_172 = arith.constant 0 : index
    %c0_173 = arith.constant 0 : index
    %197 = vector.load %arg3[%c24, %c0_172, %c0_173] : memref<25x8x4xbf16, #tpu.memory_space<vmem>>, vector<1x8x4xbf16>
    %198 = vector.shape_cast %197 : vector<1x8x4xbf16> to vector<8x4xbf16>
    %cst_174 = arith.constant dense<0.000000e+00> : vector<8x64xf32>
    %199 = tpu.matmul %198, %196, %cst_174 {dimension_numbers = #tpu.dot_dimension_numbers<[1], [0], [0], [1], [0, 0, 1, 1], [], []>} : vector<8x4xbf16>, vector<4x64xbf16>, vector<8x64xf32> -> vector<8x64xf32>
    %200 = arith.addf %192, %199 : vector<8x64xf32>
    %201 = arith.truncf %200 : vector<8x64xf32> to vector<8x64xbf16>
    %c0_175 = arith.constant 0 : index
    %c0_176 = arith.constant 0 : index
    %c0_177 = arith.constant 0 : index
    %c0_178 = arith.constant 0 : index
    %202 = vector.load %arg4[%c0_175, %c0_176, %c0_177, %c0_178] : memref<1x1x8x64xbf16, #tpu.memory_space<vmem>>, vector<1x1x8x64xbf16>
    %203 = vector.shape_cast %202 : vector<1x1x8x64xbf16> to vector<8x64xbf16>
    %204 = vector.shape_cast %201 : vector<8x64xbf16> to vector<1x1x8x64xbf16>
    tpu.vector_store %arg4[%c0_175, %c0_176, %c0_177, %c0_178], %204 {strides = array<i32>} : memref<1x1x8x64xbf16, #tpu.memory_space<vmem>>, vector<1x1x8x64xbf16>,
    %cst_179 = arith.constant dense<0.000000e+00> : vector<8xf32>
    %205 = vector.multi_reduction <add>, %200, %cst_179 [1] : vector<8x64xf32> to vector<8xf32>
    %206 = vector.shape_cast %205 : vector<8xf32> to vector<8x1xf32>
    %cst_180 = arith.constant 1.562500e-02 : f32
    %207 = vector.broadcast %cst_180 : f32 to vector<8x1xf32>
    %208 = arith.mulf %206, %207 : vector<8x1xf32>
    %209 = vector.broadcast %208 : vector<8x1xf32> to vector<8x64xf32>
    %210 = arith.subf %200, %209 : vector<8x64xf32>
    %211 = vector.broadcast %208 : vector<8x1xf32> to vector<8x64xf32>
    %212 = arith.subf %200, %211 : vector<8x64xf32>
    %213 = arith.mulf %210, %212 : vector<8x64xf32>
    %cst_181 = arith.constant dense<0.000000e+00> : vector<8xf32>
    %214 = vector.multi_reduction <add>, %213, %cst_181 [1] : vector<8x64xf32> to vector<8xf32>
    %215 = vector.shape_cast %214 : vector<8xf32> to vector<8x1xf32>
    %c0_182 = arith.constant 0 : index
    %c0_183 = arith.constant 0 : index
    %c0_184 = arith.constant 0 : index
    %c0_185 = arith.constant 0 : index
    %216 = vector.load %arg5[%c0_182, %c0_183, %c0_184, %c0_185] : memref<1x1x8x1xf32, #tpu.memory_space<vmem>>, vector<1x1x8x1xf32>
    %217 = vector.shape_cast %216 : vector<1x1x8x1xf32> to vector<8x1xf32>
    %218 = vector.shape_cast %206 : vector<8x1xf32> to vector<1x1x8x1xf32>
    tpu.vector_store %arg5[%c0_182, %c0_183, %c0_184, %c0_185], %218 {strides = array<i32>} : memref<1x1x8x1xf32, #tpu.memory_space<vmem>>, vector<1x1x8x1xf32>,
    %c0_186 = arith.constant 0 : index
    %c0_187 = arith.constant 0 : index
    %c0_188 = arith.constant 0 : index
    %c0_189 = arith.constant 0 : index
    %219 = vector.load %arg6[%c0_186, %c0_187, %c0_188, %c0_189] : memref<1x1x8x1xf32, #tpu.memory_space<vmem>>, vector<1x1x8x1xf32>
    %220 = vector.shape_cast %219 : vector<1x1x8x1xf32> to vector<8x1xf32>
    %221 = vector.shape_cast %215 : vector<8x1xf32> to vector<1x1x8x1xf32>
    tpu.vector_store %arg6[%c0_186, %c0_187, %c0_188, %c0_189], %221 {strides = array<i32>} : memref<1x1x8x1xf32, #tpu.memory_space<vmem>>, vector<1x1x8x1xf32>,
    return
  }
  func.func @transform_0(%arg0: i32, %arg1: i32) -> (i32, i32, i32, i32) {
    %c0_i32 = arith.constant 0 : i32
    %c0_i32_0 = arith.constant 0 : i32
    %c0_i32_1 = arith.constant 0 : i32
    return %arg0, %arg1, %c0_i32, %c0_i32_0 : i32, i32, i32, i32
  }
  func.func @transform_1(%arg0: i32, %arg1: i32) -> (i32, i32, i32) {
    %c0_i32 = arith.constant 0 : i32
    %c0_i32_0 = arith.constant 0 : i32
    %c0_i32_1 = arith.constant 0 : i32
    %c0_i32_2 = arith.constant 0 : i32
    return %c0_i32, %c0_i32_0, %c0_i32_1 : i32, i32, i32
  }
  func.func @transform_2(%arg0: i32, %arg1: i32) -> (i32, i32, i32, i32) {
    %c0_i32 = arith.constant 0 : i32
    %c0_i32_0 = arith.constant 0 : i32
    %c0_i32_1 = arith.constant 0 : i32
    return %arg0, %arg1, %c0_i32, %c0_i32_0 : i32, i32, i32, i32
  }
  func.func @transform_3(%arg0: i32, %arg1: i32) -> (i32, i32, i32, i32) {
    %c0_i32 = arith.constant 0 : i32
    %c0_i32_0 = arith.constant 0 : i32
    %c0_i32_1 = arith.constant 0 : i32
    return %arg0, %arg1, %c0_i32, %c0_i32_0 : i32, i32, i32, i32
  }
  func.func @transform_4(%arg0: i32, %arg1: i32) -> (i32, i32, i32, i32) {
    %c0_i32 = arith.constant 0 : i32
    %c0_i32_0 = arith.constant 0 : i32
    %c0_i32_1 = arith.constant 0 : i32
    return %arg0, %arg1, %c0_i32, %c0_i32_0 : i32, i32, i32, i32
  }
}

</mosaic_0001>

<llo_original>
// kernel: tpu_custom_call.1
$region0: #{tpu_custom_call.1}
  #allocation0 [shape = 'u32[]', space=smem, size = 0x4, offset = 0x4, fixed_abs, tag = 'smem constant byte address 0x4 - core index']
  #allocation1 [shape = 'u32[144,128]{1,0:T(1,128)}', space=vmem, size = 0x12000, scoped, tag = 'internal scratch']
  %s0 = inlined_call_operand.vmem [shape: f32[2,64,10,10], index: 0, kind: input, shape index: {}]
  %s1 = inlined_call_operand.vmem [shape: bf16[25,8,4], index: 1, kind: input, shape index: {}]
  %s2 = inlined_call_operand.hbm [shape: bf16[2,4,8,64], index: 2, kind: output, shape index: {0}]
  %s3 = inlined_call_operand.vmem [shape: f32[2,4,8,1], index: 3, kind: output, shape index: {1}]
  %s4 = inlined_call_operand.vmem [shape: f32[2,4,8,1], index: 4, kind: output, shape index: {2}]
  %5 = xla_tuple %s2, %s3, %s4
  %s6 = sld [smem:[#allocation0]]
  $region57: #{tpu_custom_call.1} parent=0
    _
  %s8 = ssub.s32 1, %s6
  %s9 = scalar_select 0, %s8, %s6
  $region1: #{tpu_custom_call.1} parent=0
    #allocation2 [shape = 'u8[4096]{0}', space=vmem, size = 0x1000, scoped, tag = 'output window, operand 0']
    #allocation3 [shape = 's32[2]{0}', space=sflag, size = 0x8, scoped, tag = 'scoped memory for tpu_custom_call.1']
    %10 = vsyncpa [#allocation3], 0
    %s11 = scalar_lea.sflag [#allocation3], 1
    %12 = vsyncpa %s11, 0
    loop: start=0, step=1, limit=10
    $region2: #{tpu_custom_call.1} parent=1 // loop_pre_header
      _
    $region3: #{tpu_custom_call.1} parent=1 // loop_header
      %s14 = sphi 0, %s18
      %p15 = scmp.ge.s32.totalorder %s14, 10
      %s21 = sphi 0, %s33
      %s22 = sphi 0, %s29
      %s23 = sphi 0, %s21
      %s24 = sphi 0, %s22
      %s25 = sphi 0, %s23
      %s26 = sphi 0, %s24
      %s38 = sphi 0, %s40
      %s41 = sphi 0, %s38
      %s42 = sphi 0, %s41
      %s58 = sphi 0, %s42
      %s62 = sphi 0, %s62
      %s64 = sphi 0, %s62
      %s65 = sphi 0, %s64
      %s79 = sphi 0, %s65
      %s87 = sphi 0, %s89
      %s90 = sphi 0, %s87
      %s91 = sphi 0, %s90
      %s107 = sphi 0, %s91
      %s115 = sphi 0, %s117
      %s118 = sphi 0, %s115
      %s119 = sphi 0, %s118
      %s135 = sphi 0, %s119
      %s143 = sphi 0, %s145
      %s146 = sphi 0, %s143
      %s147 = sphi 0, %s146
      %s163 = sphi 0, %s147
    $region4: #{tpu_custom_call.1} parent=1 // loop_header_branch
      %17 = sbr.rel (%p15) target = $region8
    $region5: #{tpu_custom_call.1} parent=1 // loop_body
      %s19 = ssub.s32 %s14, 1
      %s20 = ssub.s32 %s14, 2
      %s27 = sadd.s32 1, %s22
      %p28 = scmp.ge.s32.totalorder %s27, 4
      %s29 = scalar_select %p28, 0, %s27
      %s30 = sadd.s32 1, %s21
      %s31 = scalar_select %p28, %s30, %s21
      %p32 = scmp.ge.s32.totalorder %s31, 2
      %s33 = scalar_select %p32, 0, %s31
      %s34 = ssub.s32 %s21, %s33
      %s35 = ssub.s32 %s22, %s29
      %s36 = sor.u32 %s34, %s35
      %p37 = scmp.eq.s32.totalorder %s36, 0
      %s39 = sadd.s32 %s38, 1
      %s40 = scalar_select %p37, %s38, %s39
      %p43 = pneg %p37
      %p44 = scmp.eq.s32.totalorder %s14, 7
      %p45 = por %p43, %p44
      %p46 = scmp.ne.s32.totalorder %s38, %s41
      %p47 = scmp.eq.s32.totalorder %s14, 0
      %p48 = por %p46, %p47
      %p49 = scmp.ne.s32.totalorder %s38, %s41
      %p50 = scmp.eq.s32.totalorder %s19, 7
      %p51 = por %p49, %p50
      %p52 = scmp.ne.s32.totalorder %s41, %s42
      %p53 = scmp.eq.s32.totalorder %s19, 0
      %p54 = por %p52, %p53
      %p55 = scmp.ne.s32.totalorder %s41, %s42
      %p56 = scmp.eq.s32.totalorder %s20, 7
      %p57 = por %p55, %p56
      %p59 = scmp.ne.s32.totalorder %s42, %s58
      %p60 = scmp.eq.s32.totalorder %s20, 0
      %p61 = por %p59, %p60
      %s63 = sadd.s32 %s62, 1
      %p66 = scmp.eq.s32.totalorder %s14, 7
      %p67 = scmp.ne.s32.totalorder %s62, %s64
      %p68 = scmp.eq.s32.totalorder %s14, 0
      %p69 = por %p67, %p68
      %p70 = scmp.ne.s32.totalorder %s62, %s64
      %p71 = scmp.eq.s32.totalorder %s19, 7
      %p72 = por %p70, %p71
      %p73 = scmp.ne.s32.totalorder %s64, %s65
      %p74 = scmp.eq.s32.totalorder %s19, 0
      %p75 = por %p73, %p74
      %p76 = scmp.ne.s32.totalorder %s64, %s65
      %p77 = scmp.eq.s32.totalorder %s20, 7
      %p78 = por %p76, %p77
      %p80 = scmp.ne.s32.totalorder %s65, %s79
      %p81 = scmp.eq.s32.totalorder %s20, 0
      %p82 = por %p80, %p81
      %s83 = ssub.s32 %s21, %s33
      %s84 = ssub.s32 %s22, %s29
      %s85 = sor.u32 %s83, %s84
      %p86 = scmp.eq.s32.totalorder %s85, 0
      %s88 = sadd.s32 %s87, 1
      %s89 = scalar_select %p86, %s87, %s88
      %p92 = pneg %p86
      %p93 = scmp.eq.s32.totalorder %s14, 7
      %p94 = por %p92, %p93
      %p95 = scmp.ne.s32.totalorder %s87, %s90
      %p96 = scmp.eq.s32.totalorder %s14, 0
      %p97 = por %p95, %p96
      %p98 = scmp.ne.s32.totalorder %s87, %s90
      %p99 = scmp.eq.s32.totalorder %s19, 7
      %p100 = por %p98, %p99
      %p101 = scmp.ne.s32.totalorder %s90, %s91
      %p102 = scmp.eq.s32.totalorder %s19, 0
      %p103 = por %p101, %p102
      %p104 = scmp.ne.s32.totalorder %s90, %s91
      %p105 = scmp.eq.s32.totalorder %s20, 7
      %p106 = por %p104, %p105
      %p108 = scmp.ne.s32.totalorder %s91, %s107
      %p109 = scmp.eq.s32.totalorder %s20, 0
      %p110 = por %p108, %p109
      %s111 = ssub.s32 %s21, %s33
      %s112 = ssub.s32 %s22, %s29
      %s113 = sor.u32 %s111, %s112
      %p114 = scmp.eq.s32.totalorder %s113, 0
      %s116 = sadd.s32 %s115, 1
      %s117 = scalar_select %p114, %s115, %s116
      %p120 = pneg %p114
      %p121 = scmp.eq.s32.totalorder %s14, 7
      %p122 = por %p120, %p121
      %p123 = scmp.ne.s32.totalorder %s115, %s118
      %p124 = scmp.eq.s32.totalorder %s14, 0
      %p125 = por %p123, %p124
      %p126 = scmp.ne.s32.totalorder %s115, %s118
      %p127 = scmp.eq.s32.totalorder %s19, 7
      %p128 = por %p126, %p127
      %p129 = scmp.ne.s32.totalorder %s118, %s119
      %p130 = scmp.eq.s32.totalorder %s19, 0
      %p131 = por %p129, %p130
      %p132 = scmp.ne.s32.totalorder %s118, %s119
      %p133 = scmp.eq.s32.totalorder %s20, 7
      %p134 = por %p132, %p133
      %p136 = scmp.ne.s32.totalorder %s119, %s135
      %p137 = scmp.eq.s32.totalorder %s20, 0
      %p138 = por %p136, %p137
      %s139 = ssub.s32 %s21, %s33
      %s140 = ssub.s32 %s22, %s29
      %s141 = sor.u32 %s139, %s140
      %p142 = scmp.eq.s32.totalorder %s141, 0
      %s144 = sadd.s32 %s143, 1
      %s145 = scalar_select %p142, %s143, %s144
      %p148 = pneg %p142
      %p149 = scmp.eq.s32.totalorder %s14, 7
      %p150 = por %p148, %p149
      %p151 = scmp.ne.s32.totalorder %s143, %s146
      %p152 = scmp.eq.s32.totalorder %s14, 0
      %p153 = por %p151, %p152
      %p154 = scmp.ne.s32.totalorder %s143, %s146
      %p155 = scmp.eq.s32.totalorder %s19, 7
      %p156 = por %p154, %p155
      %p157 = scmp.ne.s32.totalorder %s146, %s147
      %p158 = scmp.eq.s32.totalorder %s19, 0
      %p159 = por %p157, %p158
      %p160 = scmp.ne.s32.totalorder %s146, %s147
      %p161 = scmp.eq.s32.totalorder %s20, 7
      %p162 = por %p160, %p161
      %p164 = scmp.ne.s32.totalorder %s147, %s163
      %p165 = scmp.eq.s32.totalorder %s20, 0
      %p166 = por %p164, %p165
      %p167 = scmp.le.s32.totalorder 1, %s14
      %p168 = scmp.lt.s32.totalorder %s14, 9
      %p169 = pnand %p167, %p168
      %p170 = pneg %p169
      // Predicated region
      $region9: #{tpu_custom_call.1} parent=5 // pred_check
        _
      $region10: #{tpu_custom_call.1} parent=5 // pred_check_branch
        %172 = sbr.rel (%p169) target = $region12
      $region11: #{tpu_custom_call.1} parent=5 // pred_region
        %s173 = ssub.s32 %s14, 1
        // Predicated region
        $region13: #{tpu_custom_call.1} parent=11 // pred_check
          %p174 = pneg %p75
        $region14: #{tpu_custom_call.1} parent=11 // pred_check_branch
          %176 = sbr.rel (%p174) target = $region16
        $region15: #{tpu_custom_call.1} parent=11 // pred_region
          _
        $region16: #{tpu_custom_call.1} parent=11 // pred_fallthru
          _
      $region12: #{tpu_custom_call.1} parent=5 // pred_fallthru
        _
      %p177 = scmp.lt.s32.totalorder %s14, 8
      // Predicated region
      $region17: #{tpu_custom_call.1} parent=5 // pred_check
        %p178 = pneg %p177
      $region18: #{tpu_custom_call.1} parent=5 // pred_check_branch
        %180 = sbr.rel (%p178) target = $region20
      $region19: #{tpu_custom_call.1} parent=5 // pred_region
        // Predicated region
        $region21: #{tpu_custom_call.1} parent=19 // pred_check
          %p181 = pneg %p48
        $region22: #{tpu_custom_call.1} parent=19 // pred_check_branch
          %183 = sbr.rel (%p181) target = $region24
        $region23: #{tpu_custom_call.1} parent=19 // pred_region
          %s184 = smul.u32 16, %s22
          %p185 = scmp.lt.s32.totalorder %s21, 1
          %s186 = scalar_select %p185, %s21, 1
          %p187 = scmp.lt.s32.totalorder %s184, 63
          %s188 = scalar_select %p187, %s184, 63
          %s189 = smul.addr %s188, 2
          %s190 = smul.addr %s186, 128
          %s191 = sadd.s32 %s189, %s190
          %s192 = smul.addr %s191, 8
          %s193 = scalar_lea.vmem %s0, %s192
          %s194 = smul.u32 16, %s22
        $region24: #{tpu_custom_call.1} parent=19 // pred_fallthru
          _
      $region20: #{tpu_custom_call.1} parent=5 // pred_fallthru
        _
      %p195 = scmp.le.s32.totalorder 1, %s14
      %p196 = scmp.lt.s32.totalorder %s14, 9
      %p197 = pnand %p195, %p196
      %p198 = pneg %p197
      // Predicated region
      $region25: #{tpu_custom_call.1} parent=5 // pred_check
        _
      $region26: #{tpu_custom_call.1} parent=5 // pred_check_branch
        %200 = sbr.rel (%p197) target = $region28
      $region27: #{tpu_custom_call.1} parent=5 // pred_region
        %s201 = ssub.s32 %s14, 1
        %s202 = smul.u32 16, %s24
        %p203 = scmp.lt.s32.totalorder %s23, 1
        %s204 = scalar_select %p203, %s23, 1
        %p205 = scmp.lt.s32.totalorder %s202, 63
        %s206 = scalar_select %p205, %s202, 63
        %s207 = smul.addr %s206, 2
        %s208 = smul.addr %s204, 128
        %s209 = sadd.s32 %s207, %s208
        %s210 = smul.addr %s209, 8
        %s211 = scalar_lea.vmem %s0, %s210
        %p212 = pneg %p54
        %p213 = pneg %p51
        %p214 = pneg %p75
        %p215 = pneg %p72
        %p216 = pneg %p103
        %p217 = pneg %p100
        %s218 = sand.u32 %s90, 1
        %s219 = scalar_lea.sflag [#allocation3], %s218
        %s220 = sand.u32 %s90, 1
        %s221 = smul.addr %s220, 4
        %s222 = scalar_lea.vmem [#allocation2], %s221
        %p223 = pneg %p131
        %p224 = pneg %p128
        %p225 = scmp.lt.s32.totalorder %s23, 1
        %s226 = scalar_select %p225, %s23, 1
        %p227 = scmp.lt.s32.totalorder %s24, 3
        %s228 = scalar_select %p227, %s24, 3
        %s229 = smul.addr %s226, 4
        %s230 = sadd.s32 %s228, %s229
        %s231 = smul.addr %s230, 8
        %s232 = scalar_lea.vmem %s3, %s231
        %p233 = pneg %p159
        %p234 = pneg %p156
        %p235 = scmp.lt.s32.totalorder %s23, 1
        %s236 = scalar_select %p235, %s23, 1
        %p237 = scmp.lt.s32.totalorder %s24, 3
        %s238 = scalar_select %p237, %s24, 3
        %s239 = smul.addr %s236, 4
        %s240 = sadd.s32 %s238, %s239
        %s241 = smul.addr %s240, 8
        %s242 = scalar_lea.vmem %s4, %s241
        %s243 = smul.u32 16, %s24
        %p244 = scmp.lt.s32.totalorder %s23, 1
        %s245 = scalar_select %p244, %s23, 1
        %p246 = scmp.lt.s32.totalorder %s243, 63
        %s247 = scalar_select %p246, %s243, 63
        %s248 = smul.addr %s247, 2
        %s249 = smul.addr %s245, 128
        %s250 = sadd.s32 %s248, %s249
        %s251 = smul.addr %s250, 8
        %s252 = scalar_lea.vmem %s0, %s251
        %s253 = smul.u32 16, %s24
        %p254 = scmp.lt.s32.totalorder %s23, 1
        %s255 = scalar_select %p254, %s23, 1
        %p256 = scmp.lt.s32.totalorder %s24, 3
        %s257 = scalar_select %p256, %s24, 3
        %s258 = smul.addr %s255, 4
        %s259 = sadd.s32 %s257, %s258
        %s260 = smul.addr %s259, 8
        %s261 = scalar_lea.vmem %s3, %s260
        %p262 = scmp.lt.s32.totalorder %s23, 1
        %s263 = scalar_select %p262, %s23, 1
        %p264 = scmp.lt.s32.totalorder %s24, 3
        %s265 = scalar_select %p264, %s24, 3
        %s266 = smul.addr %s263, 4
        %s267 = sadd.s32 %s265, %s266
        %s268 = smul.addr %s267, 8
        %s269 = scalar_lea.vmem %s4, %s268
        %v271 = vld [vmem:[%s252] sm:$0xff]
        %v272 = vld [vmem:[%s252 + $0x10] sm:$0xff]
        %v273 = vld [vmem:[%s252 + $0x20] sm:$0xff]
        %v274 = vld [vmem:[%s252 + $0x30] sm:$0xff]
        %v275 = vcombine.low %v271, %v273
        %v276 = vcombine.high %v271, %v273
        %v278 = vunpack.c.l.s4 1983009808
        %v279 = vunpack.c.0.s8 %v278
        %v280 = vlaneseq
        %v281 = vshrl.u32 %v280, 7
        %v282 = vsub.s32 %v279, %v281
        %v283 = vrot.slane %v275, %v282
        %v285 = vunpack.c.l.s4 1983009808
        %v286 = vunpack.c.0.s8 %v285
        %v287 = vlaneseq
        %v288 = vshrl.u32 %v287, 7
        %v289 = vsub.s32 %v286, %v288
        %v290 = vrot.slane %v276, %v289
        %v291 = vcombine.low %v272, %v274
        %v292 = vcombine.high %v272, %v274
        %v294 = vunpack.c.l.s4 1983009808
        %v295 = vunpack.c.0.s8 %v294
        %v296 = vlaneseq
        %v297 = vshrl.u32 %v296, 7
        %v298 = vsub.s32 %v295, %v297
        %v299 = vrot.slane %v291, %v298
        %v301 = vunpack.c.l.s4 1983009808
        %v302 = vunpack.c.0.s8 %v301
        %v303 = vlaneseq
        %v304 = vshrl.u32 %v303, 7
        %v305 = vsub.s32 %v302, %v304
        %v306 = vrot.slane %v292, %v305
        %v307 = vcombine.low %v283, %v299
        %v308 = vcombine.high %v283, %v299
        %v310 = vunpack.c.l.s4 1934713408
        %v311 = vunpack.c.0.s8 %v310
        %v312 = vlaneseq
        %v313 = vshrl.u32 %v312, 7
        %v314 = vsub.s32 %v311, %v313
        %v315 = vrot.slane %v307, %v314
        %v317 = vunpack.c.l.s4 1934713408
        %v318 = vunpack.c.0.s8 %v317
        %v319 = vlaneseq
        %v320 = vshrl.u32 %v319, 7
        %v321 = vsub.s32 %v318, %v320
        %v322 = vrot.slane %v308, %v321
        %v323 = vcombine.low %v290, %v306
        %v324 = vcombine.high %v290, %v306
        %v326 = vunpack.c.l.s4 1934713408
        %v327 = vunpack.c.0.s8 %v326
        %v328 = vlaneseq
        %v329 = vshrl.u32 %v328, 7
        %v330 = vsub.s32 %v327, %v329
        %v331 = vrot.slane %v323, %v330
        %v333 = vunpack.c.l.s4 1934713408
        %v334 = vunpack.c.0.s8 %v333
        %v335 = vlaneseq
        %v336 = vshrl.u32 %v335, 7
        %v337 = vsub.s32 %v334, %v336
        %v338 = vrot.slane %v324, %v337
        %v339 = vcombine.high %v315, 0.0
        %v340 = vcombine.high %v322, 0.0
        %v341 = vcombine.high %v331, 0.0
        %v342 = vcombine.high %v338, 0.0
        %344 = vrot.lane.b32.xlu0 %v339, 8
        %v345 = vpop.permute.xlu0 %344
        %348 = vrot.lane.b32.xlu0 %v322, 16
        %v349 = vpop.permute.xlu0 %348
        %352 = vrot.lane.b32.xlu0 %v340, 24
        %v353 = vpop.permute.xlu0 %352
        %356 = vrot.lane.b32.xlu0 %v331, 32
        %v357 = vpop.permute.xlu0 %356
        %360 = vrot.lane.b32.xlu0 %v341, 40
        %v361 = vpop.permute.xlu0 %360
        %364 = vrot.lane.b32.xlu0 %v338, 48
        %v365 = vpop.permute.xlu0 %364
        %368 = vrot.lane.b32.xlu0 %v342, 56
        %v369 = vpop.permute.xlu0 %368
        %vm371 = vcmask 64512
        %v372 = vsel %vm371, %v315, %v345
        %vm373 = vcmask 130048
        %v374 = vsel %vm373, %v372, %v349
        %vm375 = vcmask 195584
        %v376 = vsel %vm375, %v374, %v353
        %vm377 = vcmask 261120
        %v378 = vsel %vm377, %v376, %v357
        %vm379 = vcmask 326656
        %v380 = vsel %vm379, %v378, %v361
        %vm381 = vcmask 392192
        %v382 = vsel %vm381, %v380, %v365
        %vm383 = vcmask 457728
        %v384 = vsel %vm383, %v382, %v369
        %v385 = vpack.c.bf16 %v384, %v384
        %v386 = vld [vmem:[%s1] sm:$0xf]
        %s387 = scalar_lea.vmem %s252, 64
        %v388 = vld [vmem:[%s387] sm:$0xff]
        %v389 = vld [vmem:[%s387 + $0x10] sm:$0xff]
        %v390 = vld [vmem:[%s387 + $0x20] sm:$0xff]
        %v391 = vld [vmem:[%s387 + $0x30] sm:$0xff]
        %v392 = vcombine.low %v388, %v390
        %v393 = vcombine.high %v388, %v390
        %v395 = vunpack.c.l.s4 1983009808
        %v396 = vunpack.c.0.s8 %v395
        %v397 = vlaneseq
        %v398 = vshrl.u32 %v397, 7
        %v399 = vsub.s32 %v396, %v398
        %v400 = vrot.slane %v392, %v399
        %v402 = vunpack.c.l.s4 1983009808
        %v403 = vunpack.c.0.s8 %v402
        %v404 = vlaneseq
        %v405 = vshrl.u32 %v404, 7
        %v406 = vsub.s32 %v403, %v405
        %v407 = vrot.slane %v393, %v406
        %v408 = vcombine.low %v389, %v391
        %v409 = vcombine.high %v389, %v391
        %v411 = vunpack.c.l.s4 1983009808
        %v412 = vunpack.c.0.s8 %v411
        %v413 = vlaneseq
        %v414 = vshrl.u32 %v413, 7
        %v415 = vsub.s32 %v412, %v414
        %v416 = vrot.slane %v408, %v415
        %v418 = vunpack.c.l.s4 1983009808
        %v419 = vunpack.c.0.s8 %v418
        %v420 = vlaneseq
        %v421 = vshrl.u32 %v420, 7
        %v422 = vsub.s32 %v419, %v421
        %v423 = vrot.slane %v409, %v422
        %v424 = vcombine.low %v400, %v416
        %v425 = vcombine.high %v400, %v416
        %v427 = vunpack.c.l.s4 1934713408
        %v428 = vunpack.c.0.s8 %v427
        %v429 = vlaneseq
        %v430 = vshrl.u32 %v429, 7
        %v431 = vsub.s32 %v428, %v430
        %v432 = vrot.slane %v424, %v431
        %v434 = vunpack.c.l.s4 1934713408
        %v435 = vunpack.c.0.s8 %v434
        %v436 = vlaneseq
        %v437 = vshrl.u32 %v436, 7
        %v438 = vsub.s32 %v435, %v437
        %v439 = vrot.slane %v425, %v438
        %v440 = vcombine.low %v407, %v423
        %v441 = vcombine.high %v407, %v423
        %v443 = vunpack.c.l.s4 1934713408
        %v444 = vunpack.c.0.s8 %v443
        %v445 = vlaneseq
        %v446 = vshrl.u32 %v445, 7
        %v447 = vsub.s32 %v444, %v446
        %v448 = vrot.slane %v440, %v447
        %v450 = vunpack.c.l.s4 1934713408
        %v451 = vunpack.c.0.s8 %v450
        %v452 = vlaneseq
        %v453 = vshrl.u32 %v452, 7
        %v454 = vsub.s32 %v451, %v453
        %v455 = vrot.slane %v441, %v454
        %v456 = vcombine.high %v432, 0.0
        %v457 = vcombine.high %v439, 0.0
        %v458 = vcombine.high %v448, 0.0
        %v459 = vcombine.high %v455, 0.0
        %461 = vrot.lane.b32.xlu0 %v456, 8
        %v462 = vpop.permute.xlu0 %461
        %465 = vrot.lane.b32.xlu0 %v439, 16
        %v466 = vpop.permute.xlu0 %465
        %469 = vrot.lane.b32.xlu0 %v457, 24
        %v470 = vpop.permute.xlu0 %469
        %473 = vrot.lane.b32.xlu0 %v448, 32
        %v474 = vpop.permute.xlu0 %473
        %477 = vrot.lane.b32.xlu0 %v458, 40
        %v478 = vpop.permute.xlu0 %477
        %481 = vrot.lane.b32.xlu0 %v455, 48
        %v482 = vpop.permute.xlu0 %481
        %485 = vrot.lane.b32.xlu0 %v459, 56
        %v486 = vpop.permute.xlu0 %485
        %v488 = vsel %vm371, %v432, %v462
        %v489 = vsel %vm373, %v488, %v466
        %v490 = vsel %vm375, %v489, %v470
        %v491 = vsel %vm377, %v490, %v474
        %v492 = vsel %vm379, %v491, %v478
        %v493 = vsel %vm381, %v492, %v482
        %v494 = vsel %vm383, %v493, %v486
        %v495 = vpack.c.bf16 %v494, %v494
        %s496 = scalar_lea.vmem %s1, 4
        %v497 = vld [vmem:[%s496] sm:$0xf]
        %vm498 = vcmask 31744
        %v500 = vsel %vm498, %v497, 0
        %vm502 = vcmask 1041408
        %v504 = vsel %vm502, %v495, 0
        %506 = vmatprep.subr.bf16.mxu0 0
        %507 = vmatpush1.bf16.msra.mxu0 0
        %508 = vmatprep.subr.bf16.mxu0 0
        %509 = vmatpush1.bf16.msra.mxu0 0
        %510 = vmatprep.subr.bf16.mxu0 0
        %511 = vmatpush1.bf16.msra.mxu0 0
        %512 = vmatprep.subr.bf16.mxu0 0
        %513 = vmatpush1.bf16.msra.mxu0 0
        %514 = vmatprep.subr.bf16.mxu0 0
        %515 = vmatpush1.bf16.msra.mxu0 0
        %516 = vmatprep.subr.bf16.mxu0 0
        %517 = vmatpush1.bf16.msra.mxu0 0
        %518 = vmatprep.subr.bf16.mxu0 0
        %519 = vmatpush1.bf16.msra.mxu0 0
        %520 = vmatprep.subr.bf16.mxu0 0
        %521 = vmatpush1.bf16.msra.mxu0 %v504
        %522 = vmatprep.subr.bf16.mxu0 0
        %523 = vmatpush2.bf16.msra.mxu0 0
        %524 = vmatprep.subr.bf16.mxu0 0
        %525 = vmatpush2.bf16.msra.mxu0 0
        %526 = vmatprep.subr.bf16.mxu0 0
        %527 = vmatpush2.bf16.msra.mxu0 0
        %528 = vmatprep.subr.bf16.mxu0 0
        %529 = vmatpush2.bf16.msra.mxu0 0
        %530 = vmatprep.subr.bf16.mxu0 0
        %531 = vmatpush2.bf16.msra.mxu0 0
        %532 = vmatprep.subr.bf16.mxu0 0
        %533 = vmatpush2.bf16.msra.mxu0 0
        %534 = vmatprep.subr.bf16.mxu0 0
        %535 = vmatpush2.bf16.msra.mxu0 0
        %536 = vmatprep.subr.bf16.mxu0 0
        %537 = vmatpush2.bf16.msra.mxu0 0
        %538 = vmatprep.mubr.bf16.mxu0 0
        %539 = vmatmul.mubr.bf16.gmra.mxu0 %v500
        %v540 = vpop.f32.mrf.mxu0
        %v541 = vadd.f32 0.0, %v540
        %v542 = vpop.f32.mrf.mxu0
        %v543 = vpop.f32.mrf.mxu0
        %v544 = vpop.f32.mrf.mxu0
        %545 = vdwg.mxu0
        %v547 = vsel %vm498, %v386, 0
        %v550 = vsel %vm502, %v385, 0
        %552 = vmatprep.subr.bf16.mxu0 0
        %553 = vmatpush1.bf16.msra.mxu0 0
        %554 = vmatprep.subr.bf16.mxu0 0
        %555 = vmatpush1.bf16.msra.mxu0 0
        %556 = vmatprep.subr.bf16.mxu0 0
        %557 = vmatpush1.bf16.msra.mxu0 0
        %558 = vmatprep.subr.bf16.mxu0 0
        %559 = vmatpush1.bf16.msra.mxu0 0
        %560 = vmatprep.subr.bf16.mxu0 0
        %561 = vmatpush1.bf16.msra.mxu0 0
        %562 = vmatprep.subr.bf16.mxu0 0
        %563 = vmatpush1.bf16.msra.mxu0 0
        %564 = vmatprep.subr.bf16.mxu0 0
        %565 = vmatpush1.bf16.msra.mxu0 0
        %566 = vmatprep.subr.bf16.mxu0 0
        %567 = vmatpush1.bf16.msra.mxu0 %v550
        %568 = vmatprep.subr.bf16.mxu0 0
        %569 = vmatpush2.bf16.msra.mxu0 0
        %570 = vmatprep.subr.bf16.mxu0 0
        %571 = vmatpush2.bf16.msra.mxu0 0
        %572 = vmatprep.subr.bf16.mxu0 0
        %573 = vmatpush2.bf16.msra.mxu0 0
        %574 = vmatprep.subr.bf16.mxu0 0
        %575 = vmatpush2.bf16.msra.mxu0 0
        %576 = vmatprep.subr.bf16.mxu0 0
        %577 = vmatpush2.bf16.msra.mxu0 0
        %578 = vmatprep.subr.bf16.mxu0 0
        %579 = vmatpush2.bf16.msra.mxu0 0
        %580 = vmatprep.subr.bf16.mxu0 0
        %581 = vmatpush2.bf16.msra.mxu0 0
        %582 = vmatprep.subr.bf16.mxu0 0
        %583 = vmatpush2.bf16.msra.mxu0 0
        %584 = vmatprep.mubr.bf16.mxu0 0
        %585 = vmatmul.mubr.bf16.gmra.mxu0 %v547
        %v586 = vpop.f32.mrf.mxu0
        %v587 = vadd.f32 %v541, %v586
        %v588 = vpop.f32.mrf.mxu0
        %v589 = vpop.f32.mrf.mxu0
        %v590 = vpop.f32.mrf.mxu0
        %591 = vdwg.mxu0
        %v592 = vld [vmem:[%s252] sm:$0xff]
        %v593 = vld [vmem:[%s252 + $0x10] sm:$0xff]
        %v594 = vld [vmem:[%s252 + $0x20] sm:$0xff]
        %v595 = vld [vmem:[%s252 + $0x30] sm:$0xff]
        %600 = vrot.lane.b32.xlu0 %v592, 127
        %v601 = vpop.permute.xlu0 %600
        %602 = vrot.lane.b32.xlu0 %v593, 127
        %v603 = vpop.permute.xlu0 %602
        %604 = vrot.lane.b32.xlu0 %v594, 127
        %v605 = vpop.permute.xlu0 %604
        %606 = vrot.lane.b32.xlu0 %v595, 127
        %v607 = vpop.permute.xlu0 %606
        %v612 = vcombine.low %v601, %v605
        %v613 = vcombine.high %v601, %v605
        %v615 = vunpack.c.l.s4 1983009808
        %v616 = vunpack.c.0.s8 %v615
        %v617 = vlaneseq
        %v618 = vshrl.u32 %v617, 7
        %v619 = vsub.s32 %v616, %v618
        %v620 = vrot.slane %v612, %v619
        %v622 = vunpack.c.l.s4 1983009808
        %v623 = vunpack.c.0.s8 %v622
        %v624 = vlaneseq
        %v625 = vshrl.u32 %v624, 7
        %v626 = vsub.s32 %v623, %v625
        %v627 = vrot.slane %v613, %v626
        %v628 = vcombine.low %v603, %v607
        %v629 = vcombine.high %v603, %v607
        %v631 = vunpack.c.l.s4 1983009808
        %v632 = vunpack.c.0.s8 %v631
        %v633 = vlaneseq
        %v634 = vshrl.u32 %v633, 7
        %v635 = vsub.s32 %v632, %v634
        %v636 = vrot.slane %v628, %v635
        %v638 = vunpack.c.l.s4 1983009808
        %v639 = vunpack.c.0.s8 %v638
        %v640 = vlaneseq
        %v641 = vshrl.u32 %v640, 7
        %v642 = vsub.s32 %v639, %v641
        %v643 = vrot.slane %v629, %v642
        %v644 = vcombine.low %v620, %v636
        %v645 = vcombine.high %v620, %v636
        %v647 = vunpack.c.l.s4 1934713408
        %v648 = vunpack.c.0.s8 %v647
        %v649 = vlaneseq
        %v650 = vshrl.u32 %v649, 7
        %v651 = vsub.s32 %v648, %v650
        %v652 = vrot.slane %v644, %v651
        %v654 = vunpack.c.l.s4 1934713408
        %v655 = vunpack.c.0.s8 %v654
        %v656 = vlaneseq
        %v657 = vshrl.u32 %v656, 7
        %v658 = vsub.s32 %v655, %v657
        %v659 = vrot.slane %v645, %v658
        %v660 = vcombine.low %v627, %v643
        %v661 = vcombine.high %v627, %v643
        %v663 = vunpack.c.l.s4 1934713408
        %v664 = vunpack.c.0.s8 %v663
        %v665 = vlaneseq
        %v666 = vshrl.u32 %v665, 7
        %v667 = vsub.s32 %v664, %v666
        %v668 = vrot.slane %v660, %v667
        %v670 = vunpack.c.l.s4 1934713408
        %v671 = vunpack.c.0.s8 %v670
        %v672 = vlaneseq
        %v673 = vshrl.u32 %v672, 7
        %v674 = vsub.s32 %v671, %v673
        %v675 = vrot.slane %v661, %v674
        %v676 = vcombine.high %v652, 0.0
        %v677 = vcombine.high %v659, 0.0
        %v678 = vcombine.high %v668, 0.0
        %v679 = vcombine.high %v675, 0.0
        %681 = vrot.lane.b32.xlu0 %v676, 8
        %v682 = vpop.permute.xlu0 %681
        %685 = vrot.lane.b32.xlu0 %v659, 16
        %v686 = vpop.permute.xlu0 %685
        %689 = vrot.lane.b32.xlu0 %v677, 24
        %v690 = vpop.permute.xlu0 %689
        %693 = vrot.lane.b32.xlu0 %v668, 32
        %v694 = vpop.permute.xlu0 %693
        %697 = vrot.lane.b32.xlu0 %v678, 40
        %v698 = vpop.permute.xlu0 %697
        %701 = vrot.lane.b32.xlu0 %v675, 48
        %v702 = vpop.permute.xlu0 %701
        %705 = vrot.lane.b32.xlu0 %v679, 56
        %v706 = vpop.permute.xlu0 %705
        %v708 = vsel %vm371, %v652, %v682
        %v709 = vsel %vm373, %v708, %v686
        %v710 = vsel %vm375, %v709, %v690
        %v711 = vsel %vm377, %v710, %v694
        %v712 = vsel %vm379, %v711, %v698
        %v713 = vsel %vm381, %v712, %v702
        %v714 = vsel %vm383, %v713, %v706
        %v715 = vpack.c.bf16 %v714, %v714
        %s716 = scalar_lea.vmem %s1, 8
        %v717 = vld [vmem:[%s716] sm:$0xf]
        %v719 = vsel %vm498, %v717, 0
        %v722 = vsel %vm502, %v715, 0
        %724 = vmatprep.subr.bf16.mxu0 0
        %725 = vmatpush1.bf16.msra.mxu0 0
        %726 = vmatprep.subr.bf16.mxu0 0
        %727 = vmatpush1.bf16.msra.mxu0 0
        %728 = vmatprep.subr.bf16.mxu0 0
        %729 = vmatpush1.bf16.msra.mxu0 0
        %730 = vmatprep.subr.bf16.mxu0 0
        %731 = vmatpush1.bf16.msra.mxu0 0
        %732 = vmatprep.subr.bf16.mxu0 0
        %733 = vmatpush1.bf16.msra.mxu0 0
        %734 = vmatprep.subr.bf16.mxu0 0
        %735 = vmatpush1.bf16.msra.mxu0 0
        %736 = vmatprep.subr.bf16.mxu0 0
        %737 = vmatpush1.bf16.msra.mxu0 0
        %738 = vmatprep.subr.bf16.mxu0 0
        %739 = vmatpush1.bf16.msra.mxu0 %v722
        %740 = vmatprep.subr.bf16.mxu0 0
        %741 = vmatpush2.bf16.msra.mxu0 0
        %742 = vmatprep.subr.bf16.mxu0 0
        %743 = vmatpush2.bf16.msra.mxu0 0
        %744 = vmatprep.subr.bf16.mxu0 0
        %745 = vmatpush2.bf16.msra.mxu0 0
        %746 = vmatprep.subr.bf16.mxu0 0
        %747 = vmatpush2.bf16.msra.mxu0 0
        %748 = vmatprep.subr.bf16.mxu0 0
        %749 = vmatpush2.bf16.msra.mxu0 0
        %750 = vmatprep.subr.bf16.mxu0 0
        %751 = vmatpush2.bf16.msra.mxu0 0
        %752 = vmatprep.subr.bf16.mxu0 0
        %753 = vmatpush2.bf16.msra.mxu0 0
        %754 = vmatprep.subr.bf16.mxu0 0
        %755 = vmatpush2.bf16.msra.mxu0 0
        %756 = vmatprep.mubr.bf16.mxu0 0
        %757 = vmatmul.mubr.bf16.gmra.mxu0 %v719
        %v758 = vpop.f32.mrf.mxu0
        %v759 = vadd.f32 0.0, %v758
        %v760 = vpop.f32.mrf.mxu0
        %v761 = vpop.f32.mrf.mxu0
        %v762 = vpop.f32.mrf.mxu0
        %763 = vdwg.mxu0
        %v764 = vadd.f32 %v587, %v759
        %v765 = vld [vmem:[%s387] sm:$0xff]
        %v766 = vld [vmem:[%s387 + $0x10] sm:$0xff]
        %v767 = vld [vmem:[%s387 + $0x20] sm:$0xff]
        %v768 = vld [vmem:[%s387 + $0x30] sm:$0xff]
        %773 = vrot.lane.b32.xlu0 %v765, 127
        %v774 = vpop.permute.xlu0 %773
        %775 = vrot.lane.b32.xlu0 %v766, 127
        %v776 = vpop.permute.xlu0 %775
        %777 = vrot.lane.b32.xlu0 %v767, 127
        %v778 = vpop.permute.xlu0 %777
        %779 = vrot.lane.b32.xlu0 %v768, 127
        %v780 = vpop.permute.xlu0 %779
        %v785 = vcombine.low %v774, %v778
        %v786 = vcombine.high %v774, %v778
        %v788 = vunpack.c.l.s4 1983009808
        %v789 = vunpack.c.0.s8 %v788
        %v790 = vlaneseq
        %v791 = vshrl.u32 %v790, 7
        %v792 = vsub.s32 %v789, %v791
        %v793 = vrot.slane %v785, %v792
        %v795 = vunpack.c.l.s4 1983009808
        %v796 = vunpack.c.0.s8 %v795
        %v797 = vlaneseq
        %v798 = vshrl.u32 %v797, 7
        %v799 = vsub.s32 %v796, %v798
        %v800 = vrot.slane %v786, %v799
        %v801 = vcombine.low %v776, %v780
        %v802 = vcombine.high %v776, %v780
        %v804 = vunpack.c.l.s4 1983009808
        %v805 = vunpack.c.0.s8 %v804
        %v806 = vlaneseq
        %v807 = vshrl.u32 %v806, 7
        %v808 = vsub.s32 %v805, %v807
        %v809 = vrot.slane %v801, %v808
        %v811 = vunpack.c.l.s4 1983009808
        %v812 = vunpack.c.0.s8 %v811
        %v813 = vlaneseq
        %v814 = vshrl.u32 %v813, 7
        %v815 = vsub.s32 %v812, %v814
        %v816 = vrot.slane %v802, %v815
        %v817 = vcombine.low %v793, %v809
        %v818 = vcombine.high %v793, %v809
        %v820 = vunpack.c.l.s4 1934713408
        %v821 = vunpack.c.0.s8 %v820
        %v822 = vlaneseq
        %v823 = vshrl.u32 %v822, 7
        %v824 = vsub.s32 %v821, %v823
        %v825 = vrot.slane %v817, %v824
        %v827 = vunpack.c.l.s4 1934713408
        %v828 = vunpack.c.0.s8 %v827
        %v829 = vlaneseq
        %v830 = vshrl.u32 %v829, 7
        %v831 = vsub.s32 %v828, %v830
        %v832 = vrot.slane %v818, %v831
        %v833 = vcombine.low %v800, %v816
        %v834 = vcombine.high %v800, %v816
        %v836 = vunpack.c.l.s4 1934713408
        %v837 = vunpack.c.0.s8 %v836
        %v838 = vlaneseq
        %v839 = vshrl.u32 %v838, 7
        %v840 = vsub.s32 %v837, %v839
        %v841 = vrot.slane %v833, %v840
        %v843 = vunpack.c.l.s4 1934713408
        %v844 = vunpack.c.0.s8 %v843
        %v845 = vlaneseq
        %v846 = vshrl.u32 %v845, 7
        %v847 = vsub.s32 %v844, %v846
        %v848 = vrot.slane %v834, %v847
        %v849 = vcombine.high %v825, 0.0
        %v850 = vcombine.high %v832, 0.0
        %v851 = vcombine.high %v841, 0.0
        %v852 = vcombine.high %v848, 0.0
        %854 = vrot.lane.b32.xlu0 %v849, 8
        %v855 = vpop.permute.xlu0 %854
        %858 = vrot.lane.b32.xlu0 %v832, 16
        %v859 = vpop.permute.xlu0 %858
        %862 = vrot.lane.b32.xlu0 %v850, 24
        %v863 = vpop.permute.xlu0 %862
        %866 = vrot.lane.b32.xlu0 %v841, 32
        %v867 = vpop.permute.xlu0 %866
        %870 = vrot.lane.b32.xlu0 %v851, 40
        %v871 = vpop.permute.xlu0 %870
        %874 = vrot.lane.b32.xlu0 %v848, 48
        %v875 = vpop.permute.xlu0 %874
        %878 = vrot.lane.b32.xlu0 %v852, 56
        %v879 = vpop.permute.xlu0 %878
        %v881 = vsel %vm371, %v825, %v855
        %v882 = vsel %vm373, %v881, %v859
        %v883 = vsel %vm375, %v882, %v863
        %v884 = vsel %vm377, %v883, %v867
        %v885 = vsel %vm379, %v884, %v871
        %v886 = vsel %vm381, %v885, %v875
        %v887 = vsel %vm383, %v886, %v879
        %v888 = vpack.c.bf16 %v887, %v887
        %s889 = scalar_lea.vmem %s1, 12
        %v890 = vld [vmem:[%s889] sm:$0xf]
        %v892 = vsel %vm498, %v890, 0
        %v895 = vsel %vm502, %v888, 0
        %897 = vmatprep.subr.bf16.mxu0 0
        %898 = vmatpush1.bf16.msra.mxu0 0
        %899 = vmatprep.subr.bf16.mxu0 0
        %900 = vmatpush1.bf16.msra.mxu0 0
        %901 = vmatprep.subr.bf16.mxu0 0
        %902 = vmatpush1.bf16.msra.mxu0 0
        %903 = vmatprep.subr.bf16.mxu0 0
        %904 = vmatpush1.bf16.msra.mxu0 0
        %905 = vmatprep.subr.bf16.mxu0 0
        %906 = vmatpush1.bf16.msra.mxu0 0
        %907 = vmatprep.subr.bf16.mxu0 0
        %908 = vmatpush1.bf16.msra.mxu0 0
        %909 = vmatprep.subr.bf16.mxu0 0
        %910 = vmatpush1.bf16.msra.mxu0 0
        %911 = vmatprep.subr.bf16.mxu0 0
        %912 = vmatpush1.bf16.msra.mxu0 %v895
        %913 = vmatprep.subr.bf16.mxu0 0
        %914 = vmatpush2.bf16.msra.mxu0 0
        %915 = vmatprep.subr.bf16.mxu0 0
        %916 = vmatpush2.bf16.msra.mxu0 0
        %917 = vmatprep.subr.bf16.mxu0 0
        %918 = vmatpush2.bf16.msra.mxu0 0
        %919 = vmatprep.subr.bf16.mxu0 0
        %920 = vmatpush2.bf16.msra.mxu0 0
        %921 = vmatprep.subr.bf16.mxu0 0
        %922 = vmatpush2.bf16.msra.mxu0 0
        %923 = vmatprep.subr.bf16.mxu0 0
        %924 = vmatpush2.bf16.msra.mxu0 0
        %925 = vmatprep.subr.bf16.mxu0 0
        %926 = vmatpush2.bf16.msra.mxu0 0
        %927 = vmatprep.subr.bf16.mxu0 0
        %928 = vmatpush2.bf16.msra.mxu0 0
        %929 = vmatprep.mubr.bf16.mxu0 0
        %930 = vmatmul.mubr.bf16.gmra.mxu0 %v892
        %v931 = vpop.f32.mrf.mxu0
        %v932 = vadd.f32 0.0, %v931
        %v933 = vpop.f32.mrf.mxu0
        %v934 = vpop.f32.mrf.mxu0
        %v935 = vpop.f32.mrf.mxu0
        %936 = vdwg.mxu0
        %v937 = vadd.f32 %v764, %v932
        %v938 = vld [vmem:[%s252] sm:$0xff]
        %v939 = vld [vmem:[%s252 + $0x10] sm:$0xff]
        %v940 = vld [vmem:[%s252 + $0x20] sm:$0xff]
        %v941 = vld [vmem:[%s252 + $0x30] sm:$0xff]
        %946 = vrot.lane.b32.xlu0 %v938, 126
        %v947 = vpop.permute.xlu0 %946
        %948 = vrot.lane.b32.xlu0 %v939, 126
        %v949 = vpop.permute.xlu0 %948
        %950 = vrot.lane.b32.xlu0 %v940, 126
        %v951 = vpop.permute.xlu0 %950
        %952 = vrot.lane.b32.xlu0 %v941, 126
        %v953 = vpop.permute.xlu0 %952
        %v958 = vcombine.low %v947, %v951
        %v959 = vcombine.high %v947, %v951
        %v961 = vunpack.c.l.s4 1983009808
        %v962 = vunpack.c.0.s8 %v961
        %v963 = vlaneseq
        %v964 = vshrl.u32 %v963, 7
        %v965 = vsub.s32 %v962, %v964
        %v966 = vrot.slane %v958, %v965
        %v968 = vunpack.c.l.s4 1983009808
        %v969 = vunpack.c.0.s8 %v968
        %v970 = vlaneseq
        %v971 = vshrl.u32 %v970, 7
        %v972 = vsub.s32 %v969, %v971
        %v973 = vrot.slane %v959, %v972
        %v974 = vcombine.low %v949, %v953
        %v975 = vcombine.high %v949, %v953
        %v977 = vunpack.c.l.s4 1983009808
        %v978 = vunpack.c.0.s8 %v977
        %v979 = vlaneseq
        %v980 = vshrl.u32 %v979, 7
        %v981 = vsub.s32 %v978, %v980
        %v982 = vrot.slane %v974, %v981
        %v984 = vunpack.c.l.s4 1983009808
        %v985 = vunpack.c.0.s8 %v984
        %v986 = vlaneseq
        %v987 = vshrl.u32 %v986, 7
        %v988 = vsub.s32 %v985, %v987
        %v989 = vrot.slane %v975, %v988
        %v990 = vcombine.low %v966, %v982
        %v991 = vcombine.high %v966, %v982
        %v993 = vunpack.c.l.s4 1934713408
        %v994 = vunpack.c.0.s8 %v993
        %v995 = vlaneseq
        %v996 = vshrl.u32 %v995, 7
        %v997 = vsub.s32 %v994, %v996
        %v998 = vrot.slane %v990, %v997
        %v1000 = vunpack.c.l.s4 1934713408
        %v1001 = vunpack.c.0.s8 %v1000
        %v1002 = vlaneseq
        %v1003 = vshrl.u32 %v1002, 7
        %v1004 = vsub.s32 %v1001, %v1003
        %v1005 = vrot.slane %v991, %v1004
        %v1006 = vcombine.low %v973, %v989
        %v1007 = vcombine.high %v973, %v989
        %v1009 = vunpack.c.l.s4 1934713408
        %v1010 = vunpack.c.0.s8 %v1009
        %v1011 = vlaneseq
        %v1012 = vshrl.u32 %v1011, 7
        %v1013 = vsub.s32 %v1010, %v1012
        %v1014 = vrot.slane %v1006, %v1013
        %v1016 = vunpack.c.l.s4 1934713408
        %v1017 = vunpack.c.0.s8 %v1016
        %v1018 = vlaneseq
        %v1019 = vshrl.u32 %v1018, 7
        %v1020 = vsub.s32 %v1017, %v1019
        %v1021 = vrot.slane %v1007, %v1020
        %v1022 = vcombine.high %v998, 0.0
        %v1023 = vcombine.high %v1005, 0.0
        %v1024 = vcombine.high %v1014, 0.0
        %v1025 = vcombine.high %v1021, 0.0
        %1027 = vrot.lane.b32.xlu0 %v1022, 8
        %v1028 = vpop.permute.xlu0 %1027
        %1031 = vrot.lane.b32.xlu0 %v1005, 16
        %v1032 = vpop.permute.xlu0 %1031
        %1035 = vrot.lane.b32.xlu0 %v1023, 24
        %v1036 = vpop.permute.xlu0 %1035
        %1039 = vrot.lane.b32.xlu0 %v1014, 32
        %v1040 = vpop.permute.xlu0 %1039
        %1043 = vrot.lane.b32.xlu0 %v1024, 40
        %v1044 = vpop.permute.xlu0 %1043
        %1047 = vrot.lane.b32.xlu0 %v1021, 48
        %v1048 = vpop.permute.xlu0 %1047
        %1051 = vrot.lane.b32.xlu0 %v1025, 56
        %v1052 = vpop.permute.xlu0 %1051
        %v1054 = vsel %vm371, %v998, %v1028
        %v1055 = vsel %vm373, %v1054, %v1032
        %v1056 = vsel %vm375, %v1055, %v1036
        %v1057 = vsel %vm377, %v1056, %v1040
        %v1058 = vsel %vm379, %v1057, %v1044
        %v1059 = vsel %vm381, %v1058, %v1048
        %v1060 = vsel %vm383, %v1059, %v1052
        %v1061 = vpack.c.bf16 %v1060, %v1060
        %s1062 = scalar_lea.vmem %s1, 16
        %v1063 = vld [vmem:[%s1062] sm:$0xf]
        %v1065 = vsel %vm498, %v1063, 0
        %v1068 = vsel %vm502, %v1061, 0
        %1070 = vmatprep.subr.bf16.mxu0 0
        %1071 = vmatpush1.bf16.msra.mxu0 0
        %1072 = vmatprep.subr.bf16.mxu0 0
        %1073 = vmatpush1.bf16.msra.mxu0 0
        %1074 = vmatprep.subr.bf16.mxu0 0
        %1075 = vmatpush1.bf16.msra.mxu0 0
        %1076 = vmatprep.subr.bf16.mxu0 0
        %1077 = vmatpush1.bf16.msra.mxu0 0
        %1078 = vmatprep.subr.bf16.mxu0 0
        %1079 = vmatpush1.bf16.msra.mxu0 0
        %1080 = vmatprep.subr.bf16.mxu0 0
        %1081 = vmatpush1.bf16.msra.mxu0 0
        %1082 = vmatprep.subr.bf16.mxu0 0
        %1083 = vmatpush1.bf16.msra.mxu0 0
        %1084 = vmatprep.subr.bf16.mxu0 0
        %1085 = vmatpush1.bf16.msra.mxu0 %v1068
        %1086 = vmatprep.subr.bf16.mxu0 0
        %1087 = vmatpush2.bf16.msra.mxu0 0
        %1088 = vmatprep.subr.bf16.mxu0 0
        %1089 = vmatpush2.bf16.msra.mxu0 0
        %1090 = vmatprep.subr.bf16.mxu0 0
        %1091 = vmatpush2.bf16.msra.mxu0 0
        %1092 = vmatprep.subr.bf16.mxu0 0
        %1093 = vmatpush2.bf16.msra.mxu0 0
        %1094 = vmatprep.subr.bf16.mxu0 0
        %1095 = vmatpush2.bf16.msra.mxu0 0
        %1096 = vmatprep.subr.bf16.mxu0 0
        %1097 = vmatpush2.bf16.msra.mxu0 0
        %1098 = vmatprep.subr.bf16.mxu0 0
        %1099 = vmatpush2.bf16.msra.mxu0 0
        %1100 = vmatprep.subr.bf16.mxu0 0
        %1101 = vmatpush2.bf16.msra.mxu0 0
        %1102 = vmatprep.mubr.bf16.mxu0 0
        %1103 = vmatmul.mubr.bf16.gmra.mxu0 %v1065
        %v1104 = vpop.f32.mrf.mxu0
        %v1105 = vadd.f32 0.0, %v1104
        %v1106 = vpop.f32.mrf.mxu0
        %v1107 = vpop.f32.mrf.mxu0
        %v1108 = vpop.f32.mrf.mxu0
        %1109 = vdwg.mxu0
        %v1110 = vadd.f32 %v937, %v1105
        %s1111 = scalar_lea.vmem %s252, 128
        %v1112 = vld [vmem:[%s1111] sm:$0xff]
        %v1113 = vld [vmem:[%s1111 + $0x10] sm:$0xff]
        %v1114 = vld [vmem:[%s1111 + $0x20] sm:$0xff]
        %v1115 = vld [vmem:[%s1111 + $0x30] sm:$0xff]
        %v1116 = vcombine.low %v1112, %v1114
        %v1117 = vcombine.high %v1112, %v1114
        %v1119 = vunpack.c.l.s4 1983009808
        %v1120 = vunpack.c.0.s8 %v1119
        %v1121 = vlaneseq
        %v1122 = vshrl.u32 %v1121, 7
        %v1123 = vsub.s32 %v1120, %v1122
        %v1124 = vrot.slane %v1116, %v1123
        %v1126 = vunpack.c.l.s4 1983009808
        %v1127 = vunpack.c.0.s8 %v1126
        %v1128 = vlaneseq
        %v1129 = vshrl.u32 %v1128, 7
        %v1130 = vsub.s32 %v1127, %v1129
        %v1131 = vrot.slane %v1117, %v1130
        %v1132 = vcombine.low %v1113, %v1115
        %v1133 = vcombine.high %v1113, %v1115
        %v1135 = vunpack.c.l.s4 1983009808
        %v1136 = vunpack.c.0.s8 %v1135
        %v1137 = vlaneseq
        %v1138 = vshrl.u32 %v1137, 7
        %v1139 = vsub.s32 %v1136, %v1138
        %v1140 = vrot.slane %v1132, %v1139
        %v1142 = vunpack.c.l.s4 1983009808
        %v1143 = vunpack.c.0.s8 %v1142
        %v1144 = vlaneseq
        %v1145 = vshrl.u32 %v1144, 7
        %v1146 = vsub.s32 %v1143, %v1145
        %v1147 = vrot.slane %v1133, %v1146
        %v1148 = vcombine.low %v1124, %v1140
        %v1149 = vcombine.high %v1124, %v1140
        %v1151 = vunpack.c.l.s4 1934713408
        %v1152 = vunpack.c.0.s8 %v1151
        %v1153 = vlaneseq
        %v1154 = vshrl.u32 %v1153, 7
        %v1155 = vsub.s32 %v1152, %v1154
        %v1156 = vrot.slane %v1148, %v1155
        %v1158 = vunpack.c.l.s4 1934713408
        %v1159 = vunpack.c.0.s8 %v1158
        %v1160 = vlaneseq
        %v1161 = vshrl.u32 %v1160, 7
        %v1162 = vsub.s32 %v1159, %v1161
        %v1163 = vrot.slane %v1149, %v1162
        %v1164 = vcombine.low %v1131, %v1147
        %v1165 = vcombine.high %v1131, %v1147
        %v1167 = vunpack.c.l.s4 1934713408
        %v1168 = vunpack.c.0.s8 %v1167
        %v1169 = vlaneseq
        %v1170 = vshrl.u32 %v1169, 7
        %v1171 = vsub.s32 %v1168, %v1170
        %v1172 = vrot.slane %v1164, %v1171
        %v1174 = vunpack.c.l.s4 1934713408
        %v1175 = vunpack.c.0.s8 %v1174
        %v1176 = vlaneseq
        %v1177 = vshrl.u32 %v1176, 7
        %v1178 = vsub.s32 %v1175, %v1177
        %v1179 = vrot.slane %v1165, %v1178
        %v1180 = vcombine.high %v1156, 0.0
        %v1181 = vcombine.high %v1163, 0.0
        %v1182 = vcombine.high %v1172, 0.0
        %v1183 = vcombine.high %v1179, 0.0
        %1185 = vrot.lane.b32.xlu0 %v1180, 8
        %v1186 = vpop.permute.xlu0 %1185
        %1189 = vrot.lane.b32.xlu0 %v1163, 16
        %v1190 = vpop.permute.xlu0 %1189
        %1193 = vrot.lane.b32.xlu0 %v1181, 24
        %v1194 = vpop.permute.xlu0 %1193
        %1197 = vrot.lane.b32.xlu0 %v1172, 32
        %v1198 = vpop.permute.xlu0 %1197
        %1201 = vrot.lane.b32.xlu0 %v1182, 40
        %v1202 = vpop.permute.xlu0 %1201
        %1205 = vrot.lane.b32.xlu0 %v1179, 48
        %v1206 = vpop.permute.xlu0 %1205
        %1209 = vrot.lane.b32.xlu0 %v1183, 56
        %v1210 = vpop.permute.xlu0 %1209
        %v1212 = vsel %vm371, %v1156, %v1186
        %v1213 = vsel %vm373, %v1212, %v1190
        %v1214 = vsel %vm375, %v1213, %v1194
        %v1215 = vsel %vm377, %v1214, %v1198
        %v1216 = vsel %vm379, %v1215, %v1202
        %v1217 = vsel %vm381, %v1216, %v1206
        %v1218 = vsel %vm383, %v1217, %v1210
        %v1219 = vpack.c.bf16 %v1218, %v1218
        %s1220 = scalar_lea.vmem %s1, 20
        %v1221 = vld [vmem:[%s1220] sm:$0xf]
        %v1223 = vsel %vm498, %v1221, 0
        %v1226 = vsel %vm502, %v1219, 0
        %1228 = vmatprep.subr.bf16.mxu0 0
        %1229 = vmatpush1.bf16.msra.mxu0 0
        %1230 = vmatprep.subr.bf16.mxu0 0
        %1231 = vmatpush1.bf16.msra.mxu0 0
        %1232 = vmatprep.subr.bf16.mxu0 0
        %1233 = vmatpush1.bf16.msra.mxu0 0
        %1234 = vmatprep.subr.bf16.mxu0 0
        %1235 = vmatpush1.bf16.msra.mxu0 0
        %1236 = vmatprep.subr.bf16.mxu0 0
        %1237 = vmatpush1.bf16.msra.mxu0 0
        %1238 = vmatprep.subr.bf16.mxu0 0
        %1239 = vmatpush1.bf16.msra.mxu0 0
        %1240 = vmatprep.subr.bf16.mxu0 0
        %1241 = vmatpush1.bf16.msra.mxu0 0
        %1242 = vmatprep.subr.bf16.mxu0 0
        %1243 = vmatpush1.bf16.msra.mxu0 %v1226
        %1244 = vmatprep.subr.bf16.mxu0 0
        %1245 = vmatpush2.bf16.msra.mxu0 0
        %1246 = vmatprep.subr.bf16.mxu0 0
        %1247 = vmatpush2.bf16.msra.mxu0 0
        %1248 = vmatprep.subr.bf16.mxu0 0
        %1249 = vmatpush2.bf16.msra.mxu0 0
        %1250 = vmatprep.subr.bf16.mxu0 0
        %1251 = vmatpush2.bf16.msra.mxu0 0
        %1252 = vmatprep.subr.bf16.mxu0 0
        %1253 = vmatpush2.bf16.msra.mxu0 0
        %1254 = vmatprep.subr.bf16.mxu0 0
        %1255 = vmatpush2.bf16.msra.mxu0 0
        %1256 = vmatprep.subr.bf16.mxu0 0
        %1257 = vmatpush2.bf16.msra.mxu0 0
        %1258 = vmatprep.subr.bf16.mxu0 0
        %1259 = vmatpush2.bf16.msra.mxu0 0
        %1260 = vmatprep.mubr.bf16.mxu0 0
        %1261 = vmatmul.mubr.bf16.gmra.mxu0 %v1223
        %v1262 = vpop.f32.mrf.mxu0
        %v1263 = vadd.f32 0.0, %v1262
        %v1264 = vpop.f32.mrf.mxu0
        %v1265 = vpop.f32.mrf.mxu0
        %v1266 = vpop.f32.mrf.mxu0
        %1267 = vdwg.mxu0
        %v1268 = vadd.f32 %v1110, %v1263
        %s1269 = scalar_lea.vmem %s252, 192
        %v1270 = vld [vmem:[%s1269] sm:$0xff]
        %v1271 = vld [vmem:[%s1269 + $0x10] sm:$0xff]
        %v1272 = vld [vmem:[%s1269 + $0x20] sm:$0xff]
        %v1273 = vld [vmem:[%s1269 + $0x30] sm:$0xff]
        %v1274 = vcombine.low %v1270, %v1272
        %v1275 = vcombine.high %v1270, %v1272
        %v1277 = vunpack.c.l.s4 1983009808
        %v1278 = vunpack.c.0.s8 %v1277
        %v1279 = vlaneseq
        %v1280 = vshrl.u32 %v1279, 7
        %v1281 = vsub.s32 %v1278, %v1280
        %v1282 = vrot.slane %v1274, %v1281
        %v1284 = vunpack.c.l.s4 1983009808
        %v1285 = vunpack.c.0.s8 %v1284
        %v1286 = vlaneseq
        %v1287 = vshrl.u32 %v1286, 7
        %v1288 = vsub.s32 %v1285, %v1287
        %v1289 = vrot.slane %v1275, %v1288
        %v1290 = vcombine.low %v1271, %v1273
        %v1291 = vcombine.high %v1271, %v1273
        %v1293 = vunpack.c.l.s4 1983009808
        %v1294 = vunpack.c.0.s8 %v1293
        %v1295 = vlaneseq
        %v1296 = vshrl.u32 %v1295, 7
        %v1297 = vsub.s32 %v1294, %v1296
        %v1298 = vrot.slane %v1290, %v1297
        %v1300 = vunpack.c.l.s4 1983009808
        %v1301 = vunpack.c.0.s8 %v1300
        %v1302 = vlaneseq
        %v1303 = vshrl.u32 %v1302, 7
        %v1304 = vsub.s32 %v1301, %v1303
        %v1305 = vrot.slane %v1291, %v1304
        %v1306 = vcombine.low %v1282, %v1298
        %v1307 = vcombine.high %v1282, %v1298
        %v1309 = vunpack.c.l.s4 1934713408
        %v1310 = vunpack.c.0.s8 %v1309
        %v1311 = vlaneseq
        %v1312 = vshrl.u32 %v1311, 7
        %v1313 = vsub.s32 %v1310, %v1312
        %v1314 = vrot.slane %v1306, %v1313
        %v1316 = vunpack.c.l.s4 1934713408
        %v1317 = vunpack.c.0.s8 %v1316
        %v1318 = vlaneseq
        %v1319 = vshrl.u32 %v1318, 7
        %v1320 = vsub.s32 %v1317, %v1319
        %v1321 = vrot.slane %v1307, %v1320
        %v1322 = vcombine.low %v1289, %v1305
        %v1323 = vcombine.high %v1289, %v1305
        %v1325 = vunpack.c.l.s4 1934713408
        %v1326 = vunpack.c.0.s8 %v1325
        %v1327 = vlaneseq
        %v1328 = vshrl.u32 %v1327, 7
        %v1329 = vsub.s32 %v1326, %v1328
        %v1330 = vrot.slane %v1322, %v1329
        %v1332 = vunpack.c.l.s4 1934713408
        %v1333 = vunpack.c.0.s8 %v1332
        %v1334 = vlaneseq
        %v1335 = vshrl.u32 %v1334, 7
        %v1336 = vsub.s32 %v1333, %v1335
        %v1337 = vrot.slane %v1323, %v1336
        %v1338 = vcombine.high %v1314, 0.0
        %v1339 = vcombine.high %v1321, 0.0
        %v1340 = vcombine.high %v1330, 0.0
        %v1341 = vcombine.high %v1337, 0.0
        %1343 = vrot.lane.b32.xlu0 %v1338, 8
        %v1344 = vpop.permute.xlu0 %1343
        %1347 = vrot.lane.b32.xlu0 %v1321, 16
        %v1348 = vpop.permute.xlu0 %1347
        %1351 = vrot.lane.b32.xlu0 %v1339, 24
        %v1352 = vpop.permute.xlu0 %1351
        %1355 = vrot.lane.b32.xlu0 %v1330, 32
        %v1356 = vpop.permute.xlu0 %1355
        %1359 = vrot.lane.b32.xlu0 %v1340, 40
        %v1360 = vpop.permute.xlu0 %1359
        %1363 = vrot.lane.b32.xlu0 %v1337, 48
        %v1364 = vpop.permute.xlu0 %1363
        %1367 = vrot.lane.b32.xlu0 %v1341, 56
        %v1368 = vpop.permute.xlu0 %1367
        %v1370 = vsel %vm371, %v1314, %v1344
        %v1371 = vsel %vm373, %v1370, %v1348
        %v1372 = vsel %vm375, %v1371, %v1352
        %v1373 = vsel %vm377, %v1372, %v1356
        %v1374 = vsel %vm379, %v1373, %v1360
        %v1375 = vsel %vm381, %v1374, %v1364
        %v1376 = vsel %vm383, %v1375, %v1368
        %v1377 = vpack.c.bf16 %v1376, %v1376
        %s1378 = scalar_lea.vmem %s1, 24
        %v1379 = vld [vmem:[%s1378] sm:$0xf]
        %v1381 = vsel %vm498, %v1379, 0
        %v1384 = vsel %vm502, %v1377, 0
        %1386 = vmatprep.subr.bf16.mxu0 0
        %1387 = vmatpush1.bf16.msra.mxu0 0
        %1388 = vmatprep.subr.bf16.mxu0 0
        %1389 = vmatpush1.bf16.msra.mxu0 0
        %1390 = vmatprep.subr.bf16.mxu0 0
        %1391 = vmatpush1.bf16.msra.mxu0 0
        %1392 = vmatprep.subr.bf16.mxu0 0
        %1393 = vmatpush1.bf16.msra.mxu0 0
        %1394 = vmatprep.subr.bf16.mxu0 0
        %1395 = vmatpush1.bf16.msra.mxu0 0
        %1396 = vmatprep.subr.bf16.mxu0 0
        %1397 = vmatpush1.bf16.msra.mxu0 0
        %1398 = vmatprep.subr.bf16.mxu0 0
        %1399 = vmatpush1.bf16.msra.mxu0 0
        %1400 = vmatprep.subr.bf16.mxu0 0
        %1401 = vmatpush1.bf16.msra.mxu0 %v1384
        %1402 = vmatprep.subr.bf16.mxu0 0
        %1403 = vmatpush2.bf16.msra.mxu0 0
        %1404 = vmatprep.subr.bf16.mxu0 0
        %1405 = vmatpush2.bf16.msra.mxu0 0
        %1406 = vmatprep.subr.bf16.mxu0 0
        %1407 = vmatpush2.bf16.msra.mxu0 0
        %1408 = vmatprep.subr.bf16.mxu0 0
        %1409 = vmatpush2.bf16.msra.mxu0 0
        %1410 = vmatprep.subr.bf16.mxu0 0
        %1411 = vmatpush2.bf16.msra.mxu0 0
        %1412 = vmatprep.subr.bf16.mxu0 0
        %1413 = vmatpush2.bf16.msra.mxu0 0
        %1414 = vmatprep.subr.bf16.mxu0 0
        %1415 = vmatpush2.bf16.msra.mxu0 0
        %1416 = vmatprep.subr.bf16.mxu0 0
        %1417 = vmatpush2.bf16.msra.mxu0 0
        %1418 = vmatprep.mubr.bf16.mxu0 0
        %1419 = vmatmul.mubr.bf16.gmra.mxu0 %v1381
        %v1420 = vpop.f32.mrf.mxu0
        %v1421 = vadd.f32 0.0, %v1420
        %v1422 = vpop.f32.mrf.mxu0
        %v1423 = vpop.f32.mrf.mxu0
        %v1424 = vpop.f32.mrf.mxu0
        %1425 = vdwg.mxu0
        %v1426 = vadd.f32 %v1268, %v1421
        %v1427 = vld [vmem:[%s1111] sm:$0xff]
        %v1428 = vld [vmem:[%s1111 + $0x10] sm:$0xff]
        %v1429 = vld [vmem:[%s1111 + $0x20] sm:$0xff]
        %v1430 = vld [vmem:[%s1111 + $0x30] sm:$0xff]
        %1435 = vrot.lane.b32.xlu0 %v1427, 127
        %v1436 = vpop.permute.xlu0 %1435
        %1437 = vrot.lane.b32.xlu0 %v1428, 127
        %v1438 = vpop.permute.xlu0 %1437
        %1439 = vrot.lane.b32.xlu0 %v1429, 127
        %v1440 = vpop.permute.xlu0 %1439
        %1441 = vrot.lane.b32.xlu0 %v1430, 127
        %v1442 = vpop.permute.xlu0 %1441
        %v1447 = vcombine.low %v1436, %v1440
        %v1448 = vcombine.high %v1436, %v1440
        %v1450 = vunpack.c.l.s4 1983009808
        %v1451 = vunpack.c.0.s8 %v1450
        %v1452 = vlaneseq
        %v1453 = vshrl.u32 %v1452, 7
        %v1454 = vsub.s32 %v1451, %v1453
        %v1455 = vrot.slane %v1447, %v1454
        %v1457 = vunpack.c.l.s4 1983009808
        %v1458 = vunpack.c.0.s8 %v1457
        %v1459 = vlaneseq
        %v1460 = vshrl.u32 %v1459, 7
        %v1461 = vsub.s32 %v1458, %v1460
        %v1462 = vrot.slane %v1448, %v1461
        %v1463 = vcombine.low %v1438, %v1442
        %v1464 = vcombine.high %v1438, %v1442
        %v1466 = vunpack.c.l.s4 1983009808
        %v1467 = vunpack.c.0.s8 %v1466
        %v1468 = vlaneseq
        %v1469 = vshrl.u32 %v1468, 7
        %v1470 = vsub.s32 %v1467, %v1469
        %v1471 = vrot.slane %v1463, %v1470
        %v1473 = vunpack.c.l.s4 1983009808
        %v1474 = vunpack.c.0.s8 %v1473
        %v1475 = vlaneseq
        %v1476 = vshrl.u32 %v1475, 7
        %v1477 = vsub.s32 %v1474, %v1476
        %v1478 = vrot.slane %v1464, %v1477
        %v1479 = vcombine.low %v1455, %v1471
        %v1480 = vcombine.high %v1455, %v1471
        %v1482 = vunpack.c.l.s4 1934713408
        %v1483 = vunpack.c.0.s8 %v1482
        %v1484 = vlaneseq
        %v1485 = vshrl.u32 %v1484, 7
        %v1486 = vsub.s32 %v1483, %v1485
        %v1487 = vrot.slane %v1479, %v1486
        %v1489 = vunpack.c.l.s4 1934713408
        %v1490 = vunpack.c.0.s8 %v1489
        %v1491 = vlaneseq
        %v1492 = vshrl.u32 %v1491, 7
        %v1493 = vsub.s32 %v1490, %v1492
        %v1494 = vrot.slane %v1480, %v1493
        %v1495 = vcombine.low %v1462, %v1478
        %v1496 = vcombine.high %v1462, %v1478
        %v1498 = vunpack.c.l.s4 1934713408
        %v1499 = vunpack.c.0.s8 %v1498
        %v1500 = vlaneseq
        %v1501 = vshrl.u32 %v1500, 7
        %v1502 = vsub.s32 %v1499, %v1501
        %v1503 = vrot.slane %v1495, %v1502
        %v1505 = vunpack.c.l.s4 1934713408
        %v1506 = vunpack.c.0.s8 %v1505
        %v1507 = vlaneseq
        %v1508 = vshrl.u32 %v1507, 7
        %v1509 = vsub.s32 %v1506, %v1508
        %v1510 = vrot.slane %v1496, %v1509
        %v1511 = vcombine.high %v1487, 0.0
        %v1512 = vcombine.high %v1494, 0.0
        %v1513 = vcombine.high %v1503, 0.0
        %v1514 = vcombine.high %v1510, 0.0
        %1516 = vrot.lane.b32.xlu0 %v1511, 8
        %v1517 = vpop.permute.xlu0 %1516
        %1520 = vrot.lane.b32.xlu0 %v1494, 16
        %v1521 = vpop.permute.xlu0 %1520
        %1524 = vrot.lane.b32.xlu0 %v1512, 24
        %v1525 = vpop.permute.xlu0 %1524
        %1528 = vrot.lane.b32.xlu0 %v1503, 32
        %v1529 = vpop.permute.xlu0 %1528
        %1532 = vrot.lane.b32.xlu0 %v1513, 40
        %v1533 = vpop.permute.xlu0 %1532
        %1536 = vrot.lane.b32.xlu0 %v1510, 48
        %v1537 = vpop.permute.xlu0 %1536
        %1540 = vrot.lane.b32.xlu0 %v1514, 56
        %v1541 = vpop.permute.xlu0 %1540
        %v1543 = vsel %vm371, %v1487, %v1517
        %v1544 = vsel %vm373, %v1543, %v1521
        %v1545 = vsel %vm375, %v1544, %v1525
        %v1546 = vsel %vm377, %v1545, %v1529
        %v1547 = vsel %vm379, %v1546, %v1533
        %v1548 = vsel %vm381, %v1547, %v1537
        %v1549 = vsel %vm383, %v1548, %v1541
        %v1550 = vpack.c.bf16 %v1549, %v1549
        %s1551 = scalar_lea.vmem %s1, 28
        %v1552 = vld [vmem:[%s1551] sm:$0xf]
        %v1554 = vsel %vm498, %v1552, 0
        %v1557 = vsel %vm502, %v1550, 0
        %1559 = vmatprep.subr.bf16.mxu0 0
        %1560 = vmatpush1.bf16.msra.mxu0 0
        %1561 = vmatprep.subr.bf16.mxu0 0
        %1562 = vmatpush1.bf16.msra.mxu0 0
        %1563 = vmatprep.subr.bf16.mxu0 0
        %1564 = vmatpush1.bf16.msra.mxu0 0
        %1565 = vmatprep.subr.bf16.mxu0 0
        %1566 = vmatpush1.bf16.msra.mxu0 0
        %1567 = vmatprep.subr.bf16.mxu0 0
        %1568 = vmatpush1.bf16.msra.mxu0 0
        %1569 = vmatprep.subr.bf16.mxu0 0
        %1570 = vmatpush1.bf16.msra.mxu0 0
        %1571 = vmatprep.subr.bf16.mxu0 0
        %1572 = vmatpush1.bf16.msra.mxu0 0
        %1573 = vmatprep.subr.bf16.mxu0 0
        %1574 = vmatpush1.bf16.msra.mxu0 %v1557
        %1575 = vmatprep.subr.bf16.mxu0 0
        %1576 = vmatpush2.bf16.msra.mxu0 0
        %1577 = vmatprep.subr.bf16.mxu0 0
        %1578 = vmatpush2.bf16.msra.mxu0 0
        %1579 = vmatprep.subr.bf16.mxu0 0
        %1580 = vmatpush2.bf16.msra.mxu0 0
        %1581 = vmatprep.subr.bf16.mxu0 0
        %1582 = vmatpush2.bf16.msra.mxu0 0
        %1583 = vmatprep.subr.bf16.mxu0 0
        %1584 = vmatpush2.bf16.msra.mxu0 0
        %1585 = vmatprep.subr.bf16.mxu0 0
        %1586 = vmatpush2.bf16.msra.mxu0 0
        %1587 = vmatprep.subr.bf16.mxu0 0
        %1588 = vmatpush2.bf16.msra.mxu0 0
        %1589 = vmatprep.subr.bf16.mxu0 0
        %1590 = vmatpush2.bf16.msra.mxu0 0
        %1591 = vmatprep.mubr.bf16.mxu0 0
        %1592 = vmatmul.mubr.bf16.gmra.mxu0 %v1554
        %v1593 = vpop.f32.mrf.mxu0
        %v1594 = vadd.f32 0.0, %v1593
        %v1595 = vpop.f32.mrf.mxu0
        %v1596 = vpop.f32.mrf.mxu0
        %v1597 = vpop.f32.mrf.mxu0
        %1598 = vdwg.mxu0
        %v1599 = vadd.f32 %v1426, %v1594
        %v1600 = vld [vmem:[%s1269] sm:$0xff]
        %v1601 = vld [vmem:[%s1269 + $0x10] sm:$0xff]
        %v1602 = vld [vmem:[%s1269 + $0x20] sm:$0xff]
        %v1603 = vld [vmem:[%s1269 + $0x30] sm:$0xff]
        %1608 = vrot.lane.b32.xlu0 %v1600, 127
        %v1609 = vpop.permute.xlu0 %1608
        %1610 = vrot.lane.b32.xlu0 %v1601, 127
        %v1611 = vpop.permute.xlu0 %1610
        %1612 = vrot.lane.b32.xlu0 %v1602, 127
        %v1613 = vpop.permute.xlu0 %1612
        %1614 = vrot.lane.b32.xlu0 %v1603, 127
        %v1615 = vpop.permute.xlu0 %1614
        %v1620 = vcombine.low %v1609, %v1613
        %v1621 = vcombine.high %v1609, %v1613
        %v1623 = vunpack.c.l.s4 1983009808
        %v1624 = vunpack.c.0.s8 %v1623
        %v1625 = vlaneseq
        %v1626 = vshrl.u32 %v1625, 7
        %v1627 = vsub.s32 %v1624, %v1626
        %v1628 = vrot.slane %v1620, %v1627
        %v1630 = vunpack.c.l.s4 1983009808
        %v1631 = vunpack.c.0.s8 %v1630
        %v1632 = vlaneseq
        %v1633 = vshrl.u32 %v1632, 7
        %v1634 = vsub.s32 %v1631, %v1633
        %v1635 = vrot.slane %v1621, %v1634
        %v1636 = vcombine.low %v1611, %v1615
        %v1637 = vcombine.high %v1611, %v1615
        %v1639 = vunpack.c.l.s4 1983009808
        %v1640 = vunpack.c.0.s8 %v1639
        %v1641 = vlaneseq
        %v1642 = vshrl.u32 %v1641, 7
        %v1643 = vsub.s32 %v1640, %v1642
        %v1644 = vrot.slane %v1636, %v1643
        %v1646 = vunpack.c.l.s4 1983009808
        %v1647 = vunpack.c.0.s8 %v1646
        %v1648 = vlaneseq
        %v1649 = vshrl.u32 %v1648, 7
        %v1650 = vsub.s32 %v1647, %v1649
        %v1651 = vrot.slane %v1637, %v1650
        %v1652 = vcombine.low %v1628, %v1644
        %v1653 = vcombine.high %v1628, %v1644
        %v1655 = vunpack.c.l.s4 1934713408
        %v1656 = vunpack.c.0.s8 %v1655
        %v1657 = vlaneseq
        %v1658 = vshrl.u32 %v1657, 7
        %v1659 = vsub.s32 %v1656, %v1658
        %v1660 = vrot.slane %v1652, %v1659
        %v1662 = vunpack.c.l.s4 1934713408
        %v1663 = vunpack.c.0.s8 %v1662
        %v1664 = vlaneseq
        %v1665 = vshrl.u32 %v1664, 7
        %v1666 = vsub.s32 %v1663, %v1665
        %v1667 = vrot.slane %v1653, %v1666
        %v1668 = vcombine.low %v1635, %v1651
        %v1669 = vcombine.high %v1635, %v1651
        %v1671 = vunpack.c.l.s4 1934713408
        %v1672 = vunpack.c.0.s8 %v1671
        %v1673 = vlaneseq
        %v1674 = vshrl.u32 %v1673, 7
        %v1675 = vsub.s32 %v1672, %v1674
        %v1676 = vrot.slane %v1668, %v1675
        %v1678 = vunpack.c.l.s4 1934713408
        %v1679 = vunpack.c.0.s8 %v1678
        %v1680 = vlaneseq
        %v1681 = vshrl.u32 %v1680, 7
        %v1682 = vsub.s32 %v1679, %v1681
        %v1683 = vrot.slane %v1669, %v1682
        %v1684 = vcombine.high %v1660, 0.0
        %v1685 = vcombine.high %v1667, 0.0
        %v1686 = vcombine.high %v1676, 0.0
        %v1687 = vcombine.high %v1683, 0.0
        %1689 = vrot.lane.b32.xlu0 %v1684, 8
        %v1690 = vpop.permute.xlu0 %1689
        %1693 = vrot.lane.b32.xlu0 %v1667, 16
        %v1694 = vpop.permute.xlu0 %1693
        %1697 = vrot.lane.b32.xlu0 %v1685, 24
        %v1698 = vpop.permute.xlu0 %1697
        %1701 = vrot.lane.b32.xlu0 %v1676, 32
        %v1702 = vpop.permute.xlu0 %1701
        %1705 = vrot.lane.b32.xlu0 %v1686, 40
        %v1706 = vpop.permute.xlu0 %1705
        %1709 = vrot.lane.b32.xlu0 %v1683, 48
        %v1710 = vpop.permute.xlu0 %1709
        %1713 = vrot.lane.b32.xlu0 %v1687, 56
        %v1714 = vpop.permute.xlu0 %1713
        %v1716 = vsel %vm371, %v1660, %v1690
        %v1717 = vsel %vm373, %v1716, %v1694
        %v1718 = vsel %vm375, %v1717, %v1698
        %v1719 = vsel %vm377, %v1718, %v1702
        %v1720 = vsel %vm379, %v1719, %v1706
        %v1721 = vsel %vm381, %v1720, %v1710
        %v1722 = vsel %vm383, %v1721, %v1714
        %v1723 = vpack.c.bf16 %v1722, %v1722
        %s1724 = scalar_lea.vmem %s1, 32
        %v1725 = vld [vmem:[%s1724] sm:$0xf]
        %v1727 = vsel %vm498, %v1725, 0
        %v1730 = vsel %vm502, %v1723, 0
        %1732 = vmatprep.subr.bf16.mxu0 0
        %1733 = vmatpush1.bf16.msra.mxu0 0
        %1734 = vmatprep.subr.bf16.mxu0 0
        %1735 = vmatpush1.bf16.msra.mxu0 0
        %1736 = vmatprep.subr.bf16.mxu0 0
        %1737 = vmatpush1.bf16.msra.mxu0 0
        %1738 = vmatprep.subr.bf16.mxu0 0
        %1739 = vmatpush1.bf16.msra.mxu0 0
        %1740 = vmatprep.subr.bf16.mxu0 0
        %1741 = vmatpush1.bf16.msra.mxu0 0
        %1742 = vmatprep.subr.bf16.mxu0 0
        %1743 = vmatpush1.bf16.msra.mxu0 0
        %1744 = vmatprep.subr.bf16.mxu0 0
        %1745 = vmatpush1.bf16.msra.mxu0 0
        %1746 = vmatprep.subr.bf16.mxu0 0
        %1747 = vmatpush1.bf16.msra.mxu0 %v1730
        %1748 = vmatprep.subr.bf16.mxu0 0
        %1749 = vmatpush2.bf16.msra.mxu0 0
        %1750 = vmatprep.subr.bf16.mxu0 0
        %1751 = vmatpush2.bf16.msra.mxu0 0
        %1752 = vmatprep.subr.bf16.mxu0 0
        %1753 = vmatpush2.bf16.msra.mxu0 0
        %1754 = vmatprep.subr.bf16.mxu0 0
        %1755 = vmatpush2.bf16.msra.mxu0 0
        %1756 = vmatprep.subr.bf16.mxu0 0
        %1757 = vmatpush2.bf16.msra.mxu0 0
        %1758 = vmatprep.subr.bf16.mxu0 0
        %1759 = vmatpush2.bf16.msra.mxu0 0
        %1760 = vmatprep.subr.bf16.mxu0 0
        %1761 = vmatpush2.bf16.msra.mxu0 0
        %1762 = vmatprep.subr.bf16.mxu0 0
        %1763 = vmatpush2.bf16.msra.mxu0 0
        %1764 = vmatprep.mubr.bf16.mxu0 0
        %1765 = vmatmul.mubr.bf16.gmra.mxu0 %v1727
        %v1766 = vpop.f32.mrf.mxu0
        %v1767 = vadd.f32 0.0, %v1766
        %v1768 = vpop.f32.mrf.mxu0
        %v1769 = vpop.f32.mrf.mxu0
        %v1770 = vpop.f32.mrf.mxu0
        %1771 = vdwg.mxu0
        %v1772 = vadd.f32 %v1599, %v1767
        %v1773 = vld [vmem:[%s1111] sm:$0xff]
        %v1774 = vld [vmem:[%s1111 + $0x10] sm:$0xff]
        %v1775 = vld [vmem:[%s1111 + $0x20] sm:$0xff]
        %v1776 = vld [vmem:[%s1111 + $0x30] sm:$0xff]
        %1781 = vrot.lane.b32.xlu0 %v1773, 126
        %v1782 = vpop.permute.xlu0 %1781
        %1783 = vrot.lane.b32.xlu0 %v1774, 126
        %v1784 = vpop.permute.xlu0 %1783
        %1785 = vrot.lane.b32.xlu0 %v1775, 126
        %v1786 = vpop.permute.xlu0 %1785
        %1787 = vrot.lane.b32.xlu0 %v1776, 126
        %v1788 = vpop.permute.xlu0 %1787
        %v1793 = vcombine.low %v1782, %v1786
        %v1794 = vcombine.high %v1782, %v1786
        %v1796 = vunpack.c.l.s4 1983009808
        %v1797 = vunpack.c.0.s8 %v1796
        %v1798 = vlaneseq
        %v1799 = vshrl.u32 %v1798, 7
        %v1800 = vsub.s32 %v1797, %v1799
        %v1801 = vrot.slane %v1793, %v1800
        %v1803 = vunpack.c.l.s4 1983009808
        %v1804 = vunpack.c.0.s8 %v1803
        %v1805 = vlaneseq
        %v1806 = vshrl.u32 %v1805, 7
        %v1807 = vsub.s32 %v1804, %v1806
        %v1808 = vrot.slane %v1794, %v1807
        %v1809 = vcombine.low %v1784, %v1788
        %v1810 = vcombine.high %v1784, %v1788
        %v1812 = vunpack.c.l.s4 1983009808
        %v1813 = vunpack.c.0.s8 %v1812
        %v1814 = vlaneseq
        %v1815 = vshrl.u32 %v1814, 7
        %v1816 = vsub.s32 %v1813, %v1815
        %v1817 = vrot.slane %v1809, %v1816
        %v1819 = vunpack.c.l.s4 1983009808
        %v1820 = vunpack.c.0.s8 %v1819
        %v1821 = vlaneseq
        %v1822 = vshrl.u32 %v1821, 7
        %v1823 = vsub.s32 %v1820, %v1822
        %v1824 = vrot.slane %v1810, %v1823
        %v1825 = vcombine.low %v1801, %v1817
        %v1826 = vcombine.high %v1801, %v1817
        %v1828 = vunpack.c.l.s4 1934713408
        %v1829 = vunpack.c.0.s8 %v1828
        %v1830 = vlaneseq
        %v1831 = vshrl.u32 %v1830, 7
        %v1832 = vsub.s32 %v1829, %v1831
        %v1833 = vrot.slane %v1825, %v1832
        %v1835 = vunpack.c.l.s4 1934713408
        %v1836 = vunpack.c.0.s8 %v1835
        %v1837 = vlaneseq
        %v1838 = vshrl.u32 %v1837, 7
        %v1839 = vsub.s32 %v1836, %v1838
        %v1840 = vrot.slane %v1826, %v1839
        %v1841 = vcombine.low %v1808, %v1824
        %v1842 = vcombine.high %v1808, %v1824
        %v1844 = vunpack.c.l.s4 1934713408
        %v1845 = vunpack.c.0.s8 %v1844
        %v1846 = vlaneseq
        %v1847 = vshrl.u32 %v1846, 7
        %v1848 = vsub.s32 %v1845, %v1847
        %v1849 = vrot.slane %v1841, %v1848
        %v1851 = vunpack.c.l.s4 1934713408
        %v1852 = vunpack.c.0.s8 %v1851
        %v1853 = vlaneseq
        %v1854 = vshrl.u32 %v1853, 7
        %v1855 = vsub.s32 %v1852, %v1854
        %v1856 = vrot.slane %v1842, %v1855
        %v1857 = vcombine.high %v1833, 0.0
        %v1858 = vcombine.high %v1840, 0.0
        %v1859 = vcombine.high %v1849, 0.0
        %v1860 = vcombine.high %v1856, 0.0
        %1862 = vrot.lane.b32.xlu0 %v1857, 8
        %v1863 = vpop.permute.xlu0 %1862
        %1866 = vrot.lane.b32.xlu0 %v1840, 16
        %v1867 = vpop.permute.xlu0 %1866
        %1870 = vrot.lane.b32.xlu0 %v1858, 24
        %v1871 = vpop.permute.xlu0 %1870
        %1874 = vrot.lane.b32.xlu0 %v1849, 32
        %v1875 = vpop.permute.xlu0 %1874
        %1878 = vrot.lane.b32.xlu0 %v1859, 40
        %v1879 = vpop.permute.xlu0 %1878
        %1882 = vrot.lane.b32.xlu0 %v1856, 48
        %v1883 = vpop.permute.xlu0 %1882
        %1886 = vrot.lane.b32.xlu0 %v1860, 56
        %v1887 = vpop.permute.xlu0 %1886
        %v1889 = vsel %vm371, %v1833, %v1863
        %v1890 = vsel %vm373, %v1889, %v1867
        %v1891 = vsel %vm375, %v1890, %v1871
        %v1892 = vsel %vm377, %v1891, %v1875
        %v1893 = vsel %vm379, %v1892, %v1879
        %v1894 = vsel %vm381, %v1893, %v1883
        %v1895 = vsel %vm383, %v1894, %v1887
        %v1896 = vpack.c.bf16 %v1895, %v1895
        %s1897 = scalar_lea.vmem %s1, 36
        %v1898 = vld [vmem:[%s1897] sm:$0xf]
        %v1900 = vsel %vm498, %v1898, 0
        %v1903 = vsel %vm502, %v1896, 0
        %1905 = vmatprep.subr.bf16.mxu0 0
        %1906 = vmatpush1.bf16.msra.mxu0 0
        %1907 = vmatprep.subr.bf16.mxu0 0
        %1908 = vmatpush1.bf16.msra.mxu0 0
        %1909 = vmatprep.subr.bf16.mxu0 0
        %1910 = vmatpush1.bf16.msra.mxu0 0
        %1911 = vmatprep.subr.bf16.mxu0 0
        %1912 = vmatpush1.bf16.msra.mxu0 0
        %1913 = vmatprep.subr.bf16.mxu0 0
        %1914 = vmatpush1.bf16.msra.mxu0 0
        %1915 = vmatprep.subr.bf16.mxu0 0
        %1916 = vmatpush1.bf16.msra.mxu0 0
        %1917 = vmatprep.subr.bf16.mxu0 0
        %1918 = vmatpush1.bf16.msra.mxu0 0
        %1919 = vmatprep.subr.bf16.mxu0 0
        %1920 = vmatpush1.bf16.msra.mxu0 %v1903
        %1921 = vmatprep.subr.bf16.mxu0 0
        %1922 = vmatpush2.bf16.msra.mxu0 0
        %1923 = vmatprep.subr.bf16.mxu0 0
        %1924 = vmatpush2.bf16.msra.mxu0 0
        %1925 = vmatprep.subr.bf16.mxu0 0
        %1926 = vmatpush2.bf16.msra.mxu0 0
        %1927 = vmatprep.subr.bf16.mxu0 0
        %1928 = vmatpush2.bf16.msra.mxu0 0
        %1929 = vmatprep.subr.bf16.mxu0 0
        %1930 = vmatpush2.bf16.msra.mxu0 0
        %1931 = vmatprep.subr.bf16.mxu0 0
        %1932 = vmatpush2.bf16.msra.mxu0 0
        %1933 = vmatprep.subr.bf16.mxu0 0
        %1934 = vmatpush2.bf16.msra.mxu0 0
        %1935 = vmatprep.subr.bf16.mxu0 0
        %1936 = vmatpush2.bf16.msra.mxu0 0
        %1937 = vmatprep.mubr.bf16.mxu0 0
        %1938 = vmatmul.mubr.bf16.gmra.mxu0 %v1900
        %v1939 = vpop.f32.mrf.mxu0
        %v1940 = vadd.f32 0.0, %v1939
        %v1941 = vpop.f32.mrf.mxu0
        %v1942 = vpop.f32.mrf.mxu0
        %v1943 = vpop.f32.mrf.mxu0
        %1944 = vdwg.mxu0
        %v1945 = vadd.f32 %v1772, %v1940
        %v1946 = vld [vmem:[%s252 + $0x1] sm:$0xff]
        %v1947 = vld [vmem:[%s252 + $0x11] sm:$0xff]
        %v1948 = vld [vmem:[%s252 + $0x21] sm:$0xff]
        %v1949 = vld [vmem:[%s252 + $0x31] sm:$0xff]
        %v1950 = vcombine.low %v1946, %v1948
        %v1951 = vcombine.high %v1946, %v1948
        %v1953 = vunpack.c.l.s4 1983009808
        %v1954 = vunpack.c.0.s8 %v1953
        %v1955 = vlaneseq
        %v1956 = vshrl.u32 %v1955, 7
        %v1957 = vsub.s32 %v1954, %v1956
        %v1958 = vrot.slane %v1950, %v1957
        %v1960 = vunpack.c.l.s4 1983009808
        %v1961 = vunpack.c.0.s8 %v1960
        %v1962 = vlaneseq
        %v1963 = vshrl.u32 %v1962, 7
        %v1964 = vsub.s32 %v1961, %v1963
        %v1965 = vrot.slane %v1951, %v1964
        %v1966 = vcombine.low %v1947, %v1949
        %v1967 = vcombine.high %v1947, %v1949
        %v1969 = vunpack.c.l.s4 1983009808
        %v1970 = vunpack.c.0.s8 %v1969
        %v1971 = vlaneseq
        %v1972 = vshrl.u32 %v1971, 7
        %v1973 = vsub.s32 %v1970, %v1972
        %v1974 = vrot.slane %v1966, %v1973
        %v1976 = vunpack.c.l.s4 1983009808
        %v1977 = vunpack.c.0.s8 %v1976
        %v1978 = vlaneseq
        %v1979 = vshrl.u32 %v1978, 7
        %v1980 = vsub.s32 %v1977, %v1979
        %v1981 = vrot.slane %v1967, %v1980
        %v1982 = vcombine.low %v1958, %v1974
        %v1983 = vcombine.high %v1958, %v1974
        %v1985 = vunpack.c.l.s4 1934713408
        %v1986 = vunpack.c.0.s8 %v1985
        %v1987 = vlaneseq
        %v1988 = vshrl.u32 %v1987, 7
        %v1989 = vsub.s32 %v1986, %v1988
        %v1990 = vrot.slane %v1982, %v1989
        %v1992 = vunpack.c.l.s4 1934713408
        %v1993 = vunpack.c.0.s8 %v1992
        %v1994 = vlaneseq
        %v1995 = vshrl.u32 %v1994, 7
        %v1996 = vsub.s32 %v1993, %v1995
        %v1997 = vrot.slane %v1983, %v1996
        %v1998 = vcombine.low %v1965, %v1981
        %v1999 = vcombine.high %v1965, %v1981
        %v2001 = vunpack.c.l.s4 1934713408
        %v2002 = vunpack.c.0.s8 %v2001
        %v2003 = vlaneseq
        %v2004 = vshrl.u32 %v2003, 7
        %v2005 = vsub.s32 %v2002, %v2004
        %v2006 = vrot.slane %v1998, %v2005
        %v2008 = vunpack.c.l.s4 1934713408
        %v2009 = vunpack.c.0.s8 %v2008
        %v2010 = vlaneseq
        %v2011 = vshrl.u32 %v2010, 7
        %v2012 = vsub.s32 %v2009, %v2011
        %v2013 = vrot.slane %v1999, %v2012
        %v2014 = vcombine.high %v1990, 0.0
        %v2015 = vcombine.high %v1997, 0.0
        %v2016 = vcombine.high %v2006, 0.0
        %v2017 = vcombine.high %v2013, 0.0
        %2019 = vrot.lane.b32.xlu0 %v2014, 8
        %v2020 = vpop.permute.xlu0 %2019
        %2023 = vrot.lane.b32.xlu0 %v1997, 16
        %v2024 = vpop.permute.xlu0 %2023
        %2027 = vrot.lane.b32.xlu0 %v2015, 24
        %v2028 = vpop.permute.xlu0 %2027
        %2031 = vrot.lane.b32.xlu0 %v2006, 32
        %v2032 = vpop.permute.xlu0 %2031
        %2035 = vrot.lane.b32.xlu0 %v2016, 40
        %v2036 = vpop.permute.xlu0 %2035
        %2039 = vrot.lane.b32.xlu0 %v2013, 48
        %v2040 = vpop.permute.xlu0 %2039
        %2043 = vrot.lane.b32.xlu0 %v2017, 56
        %v2044 = vpop.permute.xlu0 %2043
        %v2046 = vsel %vm371, %v1990, %v2020
        %v2047 = vsel %vm373, %v2046, %v2024
        %v2048 = vsel %vm375, %v2047, %v2028
        %v2049 = vsel %vm377, %v2048, %v2032
        %v2050 = vsel %vm379, %v2049, %v2036
        %v2051 = vsel %vm381, %v2050, %v2040
        %v2052 = vsel %vm383, %v2051, %v2044
        %v2053 = vpack.c.bf16 %v2052, %v2052
        %s2054 = scalar_lea.vmem %s1, 40
        %v2055 = vld [vmem:[%s2054] sm:$0xf]
        %v2057 = vsel %vm498, %v2055, 0
        %v2060 = vsel %vm502, %v2053, 0
        %2062 = vmatprep.subr.bf16.mxu0 0
        %2063 = vmatpush1.bf16.msra.mxu0 0
        %2064 = vmatprep.subr.bf16.mxu0 0
        %2065 = vmatpush1.bf16.msra.mxu0 0
        %2066 = vmatprep.subr.bf16.mxu0 0
        %2067 = vmatpush1.bf16.msra.mxu0 0
        %2068 = vmatprep.subr.bf16.mxu0 0
        %2069 = vmatpush1.bf16.msra.mxu0 0
        %2070 = vmatprep.subr.bf16.mxu0 0
        %2071 = vmatpush1.bf16.msra.mxu0 0
        %2072 = vmatprep.subr.bf16.mxu0 0
        %2073 = vmatpush1.bf16.msra.mxu0 0
        %2074 = vmatprep.subr.bf16.mxu0 0
        %2075 = vmatpush1.bf16.msra.mxu0 0
        %2076 = vmatprep.subr.bf16.mxu0 0
        %2077 = vmatpush1.bf16.msra.mxu0 %v2060
        %2078 = vmatprep.subr.bf16.mxu0 0
        %2079 = vmatpush2.bf16.msra.mxu0 0
        %2080 = vmatprep.subr.bf16.mxu0 0
        %2081 = vmatpush2.bf16.msra.mxu0 0
        %2082 = vmatprep.subr.bf16.mxu0 0
        %2083 = vmatpush2.bf16.msra.mxu0 0
        %2084 = vmatprep.subr.bf16.mxu0 0
        %2085 = vmatpush2.bf16.msra.mxu0 0
        %2086 = vmatprep.subr.bf16.mxu0 0
        %2087 = vmatpush2.bf16.msra.mxu0 0
        %2088 = vmatprep.subr.bf16.mxu0 0
        %2089 = vmatpush2.bf16.msra.mxu0 0
        %2090 = vmatprep.subr.bf16.mxu0 0
        %2091 = vmatpush2.bf16.msra.mxu0 0
        %2092 = vmatprep.subr.bf16.mxu0 0
        %2093 = vmatpush2.bf16.msra.mxu0 0
        %2094 = vmatprep.mubr.bf16.mxu0 0
        %2095 = vmatmul.mubr.bf16.gmra.mxu0 %v2057
        %v2096 = vpop.f32.mrf.mxu0
        %v2097 = vadd.f32 0.0, %v2096
        %v2098 = vpop.f32.mrf.mxu0
        %v2099 = vpop.f32.mrf.mxu0
        %v2100 = vpop.f32.mrf.mxu0
        %2101 = vdwg.mxu0
        %v2102 = vadd.f32 %v1945, %v2097
        %v2103 = vld [vmem:[%s387 + $0x1] sm:$0xff]
        %v2104 = vld [vmem:[%s387 + $0x11] sm:$0xff]
        %v2105 = vld [vmem:[%s387 + $0x21] sm:$0xff]
        %v2106 = vld [vmem:[%s387 + $0x31] sm:$0xff]
        %v2107 = vcombine.low %v2103, %v2105
        %v2108 = vcombine.high %v2103, %v2105
        %v2110 = vunpack.c.l.s4 1983009808
        %v2111 = vunpack.c.0.s8 %v2110
        %v2112 = vlaneseq
        %v2113 = vshrl.u32 %v2112, 7
        %v2114 = vsub.s32 %v2111, %v2113
        %v2115 = vrot.slane %v2107, %v2114
        %v2117 = vunpack.c.l.s4 1983009808
        %v2118 = vunpack.c.0.s8 %v2117
        %v2119 = vlaneseq
        %v2120 = vshrl.u32 %v2119, 7
        %v2121 = vsub.s32 %v2118, %v2120
        %v2122 = vrot.slane %v2108, %v2121
        %v2123 = vcombine.low %v2104, %v2106
        %v2124 = vcombine.high %v2104, %v2106
        %v2126 = vunpack.c.l.s4 1983009808
        %v2127 = vunpack.c.0.s8 %v2126
        %v2128 = vlaneseq
        %v2129 = vshrl.u32 %v2128, 7
        %v2130 = vsub.s32 %v2127, %v2129
        %v2131 = vrot.slane %v2123, %v2130
        %v2133 = vunpack.c.l.s4 1983009808
        %v2134 = vunpack.c.0.s8 %v2133
        %v2135 = vlaneseq
        %v2136 = vshrl.u32 %v2135, 7
        %v2137 = vsub.s32 %v2134, %v2136
        %v2138 = vrot.slane %v2124, %v2137
        %v2139 = vcombine.low %v2115, %v2131
        %v2140 = vcombine.high %v2115, %v2131
        %v2142 = vunpack.c.l.s4 1934713408
        %v2143 = vunpack.c.0.s8 %v2142
        %v2144 = vlaneseq
        %v2145 = vshrl.u32 %v2144, 7
        %v2146 = vsub.s32 %v2143, %v2145
        %v2147 = vrot.slane %v2139, %v2146
        %v2149 = vunpack.c.l.s4 1934713408
        %v2150 = vunpack.c.0.s8 %v2149
        %v2151 = vlaneseq
        %v2152 = vshrl.u32 %v2151, 7
        %v2153 = vsub.s32 %v2150, %v2152
        %v2154 = vrot.slane %v2140, %v2153
        %v2155 = vcombine.low %v2122, %v2138
        %v2156 = vcombine.high %v2122, %v2138
        %v2158 = vunpack.c.l.s4 1934713408
        %v2159 = vunpack.c.0.s8 %v2158
        %v2160 = vlaneseq
        %v2161 = vshrl.u32 %v2160, 7
        %v2162 = vsub.s32 %v2159, %v2161
        %v2163 = vrot.slane %v2155, %v2162
        %v2165 = vunpack.c.l.s4 1934713408
        %v2166 = vunpack.c.0.s8 %v2165
        %v2167 = vlaneseq
        %v2168 = vshrl.u32 %v2167, 7
        %v2169 = vsub.s32 %v2166, %v2168
        %v2170 = vrot.slane %v2156, %v2169
        %v2171 = vcombine.high %v2147, 0.0
        %v2172 = vcombine.high %v2154, 0.0
        %v2173 = vcombine.high %v2163, 0.0
        %v2174 = vcombine.high %v2170, 0.0
        %2176 = vrot.lane.b32.xlu0 %v2171, 8
        %v2177 = vpop.permute.xlu0 %2176
        %2180 = vrot.lane.b32.xlu0 %v2154, 16
        %v2181 = vpop.permute.xlu0 %2180
        %2184 = vrot.lane.b32.xlu0 %v2172, 24
        %v2185 = vpop.permute.xlu0 %2184
        %2188 = vrot.lane.b32.xlu0 %v2163, 32
        %v2189 = vpop.permute.xlu0 %2188
        %2192 = vrot.lane.b32.xlu0 %v2173, 40
        %v2193 = vpop.permute.xlu0 %2192
        %2196 = vrot.lane.b32.xlu0 %v2170, 48
        %v2197 = vpop.permute.xlu0 %2196
        %2200 = vrot.lane.b32.xlu0 %v2174, 56
        %v2201 = vpop.permute.xlu0 %2200
        %v2203 = vsel %vm371, %v2147, %v2177
        %v2204 = vsel %vm373, %v2203, %v2181
        %v2205 = vsel %vm375, %v2204, %v2185
        %v2206 = vsel %vm377, %v2205, %v2189
        %v2207 = vsel %vm379, %v2206, %v2193
        %v2208 = vsel %vm381, %v2207, %v2197
        %v2209 = vsel %vm383, %v2208, %v2201
        %v2210 = vpack.c.bf16 %v2209, %v2209
        %s2211 = scalar_lea.vmem %s1, 44
        %v2212 = vld [vmem:[%s2211] sm:$0xf]
        %v2214 = vsel %vm498, %v2212, 0
        %v2217 = vsel %vm502, %v2210, 0
        %2219 = vmatprep.subr.bf16.mxu0 0
        %2220 = vmatpush1.bf16.msra.mxu0 0
        %2221 = vmatprep.subr.bf16.mxu0 0
        %2222 = vmatpush1.bf16.msra.mxu0 0
        %2223 = vmatprep.subr.bf16.mxu0 0
        %2224 = vmatpush1.bf16.msra.mxu0 0
        %2225 = vmatprep.subr.bf16.mxu0 0
        %2226 = vmatpush1.bf16.msra.mxu0 0
        %2227 = vmatprep.subr.bf16.mxu0 0
        %2228 = vmatpush1.bf16.msra.mxu0 0
        %2229 = vmatprep.subr.bf16.mxu0 0
        %2230 = vmatpush1.bf16.msra.mxu0 0
        %2231 = vmatprep.subr.bf16.mxu0 0
        %2232 = vmatpush1.bf16.msra.mxu0 0
        %2233 = vmatprep.subr.bf16.mxu0 0
        %2234 = vmatpush1.bf16.msra.mxu0 %v2217
        %2235 = vmatprep.subr.bf16.mxu0 0
        %2236 = vmatpush2.bf16.msra.mxu0 0
        %2237 = vmatprep.subr.bf16.mxu0 0
        %2238 = vmatpush2.bf16.msra.mxu0 0
        %2239 = vmatprep.subr.bf16.mxu0 0
        %2240 = vmatpush2.bf16.msra.mxu0 0
        %2241 = vmatprep.subr.bf16.mxu0 0
        %2242 = vmatpush2.bf16.msra.mxu0 0
        %2243 = vmatprep.subr.bf16.mxu0 0
        %2244 = vmatpush2.bf16.msra.mxu0 0
        %2245 = vmatprep.subr.bf16.mxu0 0
        %2246 = vmatpush2.bf16.msra.mxu0 0
        %2247 = vmatprep.subr.bf16.mxu0 0
        %2248 = vmatpush2.bf16.msra.mxu0 0
        %2249 = vmatprep.subr.bf16.mxu0 0
        %2250 = vmatpush2.bf16.msra.mxu0 0
        %2251 = vmatprep.mubr.bf16.mxu0 0
        %2252 = vmatmul.mubr.bf16.gmra.mxu0 %v2214
        %v2253 = vpop.f32.mrf.mxu0
        %v2254 = vadd.f32 0.0, %v2253
        %v2255 = vpop.f32.mrf.mxu0
        %v2256 = vpop.f32.mrf.mxu0
        %v2257 = vpop.f32.mrf.mxu0
        %2258 = vdwg.mxu0
        %v2259 = vadd.f32 %v2102, %v2254
        %v2260 = vld [vmem:[%s252 + $0x1] sm:$0xff]
        %v2261 = vld [vmem:[%s252 + $0x11] sm:$0xff]
        %v2262 = vld [vmem:[%s252 + $0x21] sm:$0xff]
        %v2263 = vld [vmem:[%s252 + $0x31] sm:$0xff]
        %2268 = vrot.lane.b32.xlu0 %v2260, 127
        %v2269 = vpop.permute.xlu0 %2268
        %2270 = vrot.lane.b32.xlu0 %v2261, 127
        %v2271 = vpop.permute.xlu0 %2270
        %2272 = vrot.lane.b32.xlu0 %v2262, 127
        %v2273 = vpop.permute.xlu0 %2272
        %2274 = vrot.lane.b32.xlu0 %v2263, 127
        %v2275 = vpop.permute.xlu0 %2274
        %v2280 = vcombine.low %v2269, %v2273
        %v2281 = vcombine.high %v2269, %v2273
        %v2283 = vunpack.c.l.s4 1983009808
        %v2284 = vunpack.c.0.s8 %v2283
        %v2285 = vlaneseq
        %v2286 = vshrl.u32 %v2285, 7
        %v2287 = vsub.s32 %v2284, %v2286
        %v2288 = vrot.slane %v2280, %v2287
        %v2290 = vunpack.c.l.s4 1983009808
        %v2291 = vunpack.c.0.s8 %v2290
        %v2292 = vlaneseq
        %v2293 = vshrl.u32 %v2292, 7
        %v2294 = vsub.s32 %v2291, %v2293
        %v2295 = vrot.slane %v2281, %v2294
        %v2296 = vcombine.low %v2271, %v2275
        %v2297 = vcombine.high %v2271, %v2275
        %v2299 = vunpack.c.l.s4 1983009808
        %v2300 = vunpack.c.0.s8 %v2299
        %v2301 = vlaneseq
        %v2302 = vshrl.u32 %v2301, 7
        %v2303 = vsub.s32 %v2300, %v2302
        %v2304 = vrot.slane %v2296, %v2303
        %v2306 = vunpack.c.l.s4 1983009808
        %v2307 = vunpack.c.0.s8 %v2306
        %v2308 = vlaneseq
        %v2309 = vshrl.u32 %v2308, 7
        %v2310 = vsub.s32 %v2307, %v2309
        %v2311 = vrot.slane %v2297, %v2310
        %v2312 = vcombine.low %v2288, %v2304
        %v2313 = vcombine.high %v2288, %v2304
        %v2315 = vunpack.c.l.s4 1934713408
        %v2316 = vunpack.c.0.s8 %v2315
        %v2317 = vlaneseq
        %v2318 = vshrl.u32 %v2317, 7
        %v2319 = vsub.s32 %v2316, %v2318
        %v2320 = vrot.slane %v2312, %v2319
        %v2322 = vunpack.c.l.s4 1934713408
        %v2323 = vunpack.c.0.s8 %v2322
        %v2324 = vlaneseq
        %v2325 = vshrl.u32 %v2324, 7
        %v2326 = vsub.s32 %v2323, %v2325
        %v2327 = vrot.slane %v2313, %v2326
        %v2328 = vcombine.low %v2295, %v2311
        %v2329 = vcombine.high %v2295, %v2311
        %v2331 = vunpack.c.l.s4 1934713408
        %v2332 = vunpack.c.0.s8 %v2331
        %v2333 = vlaneseq
        %v2334 = vshrl.u32 %v2333, 7
        %v2335 = vsub.s32 %v2332, %v2334
        %v2336 = vrot.slane %v2328, %v2335
        %v2338 = vunpack.c.l.s4 1934713408
        %v2339 = vunpack.c.0.s8 %v2338
        %v2340 = vlaneseq
        %v2341 = vshrl.u32 %v2340, 7
        %v2342 = vsub.s32 %v2339, %v2341
        %v2343 = vrot.slane %v2329, %v2342
        %v2344 = vcombine.high %v2320, 0.0
        %v2345 = vcombine.high %v2327, 0.0
        %v2346 = vcombine.high %v2336, 0.0
        %v2347 = vcombine.high %v2343, 0.0
        %2349 = vrot.lane.b32.xlu0 %v2344, 8
        %v2350 = vpop.permute.xlu0 %2349
        %2353 = vrot.lane.b32.xlu0 %v2327, 16
        %v2354 = vpop.permute.xlu0 %2353
        %2357 = vrot.lane.b32.xlu0 %v2345, 24
        %v2358 = vpop.permute.xlu0 %2357
        %2361 = vrot.lane.b32.xlu0 %v2336, 32
        %v2362 = vpop.permute.xlu0 %2361
        %2365 = vrot.lane.b32.xlu0 %v2346, 40
        %v2366 = vpop.permute.xlu0 %2365
        %2369 = vrot.lane.b32.xlu0 %v2343, 48
        %v2370 = vpop.permute.xlu0 %2369
        %2373 = vrot.lane.b32.xlu0 %v2347, 56
        %v2374 = vpop.permute.xlu0 %2373
        %v2376 = vsel %vm371, %v2320, %v2350
        %v2377 = vsel %vm373, %v2376, %v2354
        %v2378 = vsel %vm375, %v2377, %v2358
        %v2379 = vsel %vm377, %v2378, %v2362
        %v2380 = vsel %vm379, %v2379, %v2366
        %v2381 = vsel %vm381, %v2380, %v2370
        %v2382 = vsel %vm383, %v2381, %v2374
        %v2383 = vpack.c.bf16 %v2382, %v2382
        %s2384 = scalar_lea.vmem %s1, 48
        %v2385 = vld [vmem:[%s2384] sm:$0xf]
        %v2387 = vsel %vm498, %v2385, 0
        %v2390 = vsel %vm502, %v2383, 0
        %2392 = vmatprep.subr.bf16.mxu0 0
        %2393 = vmatpush1.bf16.msra.mxu0 0
        %2394 = vmatprep.subr.bf16.mxu0 0
        %2395 = vmatpush1.bf16.msra.mxu0 0
        %2396 = vmatprep.subr.bf16.mxu0 0
        %2397 = vmatpush1.bf16.msra.mxu0 0
        %2398 = vmatprep.subr.bf16.mxu0 0
        %2399 = vmatpush1.bf16.msra.mxu0 0
        %2400 = vmatprep.subr.bf16.mxu0 0
        %2401 = vmatpush1.bf16.msra.mxu0 0
        %2402 = vmatprep.subr.bf16.mxu0 0
        %2403 = vmatpush1.bf16.msra.mxu0 0
        %2404 = vmatprep.subr.bf16.mxu0 0
        %2405 = vmatpush1.bf16.msra.mxu0 0
        %2406 = vmatprep.subr.bf16.mxu0 0
        %2407 = vmatpush1.bf16.msra.mxu0 %v2390
        %2408 = vmatprep.subr.bf16.mxu0 0
        %2409 = vmatpush2.bf16.msra.mxu0 0
        %2410 = vmatprep.subr.bf16.mxu0 0
        %2411 = vmatpush2.bf16.msra.mxu0 0
        %2412 = vmatprep.subr.bf16.mxu0 0
        %2413 = vmatpush2.bf16.msra.mxu0 0
        %2414 = vmatprep.subr.bf16.mxu0 0
        %2415 = vmatpush2.bf16.msra.mxu0 0
        %2416 = vmatprep.subr.bf16.mxu0 0
        %2417 = vmatpush2.bf16.msra.mxu0 0
        %2418 = vmatprep.subr.bf16.mxu0 0
        %2419 = vmatpush2.bf16.msra.mxu0 0
        %2420 = vmatprep.subr.bf16.mxu0 0
        %2421 = vmatpush2.bf16.msra.mxu0 0
        %2422 = vmatprep.subr.bf16.mxu0 0
        %2423 = vmatpush2.bf16.msra.mxu0 0
        %2424 = vmatprep.mubr.bf16.mxu0 0
        %2425 = vmatmul.mubr.bf16.gmra.mxu0 %v2387
        %v2426 = vpop.f32.mrf.mxu0
        %v2427 = vadd.f32 0.0, %v2426
        %v2428 = vpop.f32.mrf.mxu0
        %v2429 = vpop.f32.mrf.mxu0
        %v2430 = vpop.f32.mrf.mxu0
        %2431 = vdwg.mxu0
        %v2432 = vadd.f32 %v2259, %v2427
        %v2433 = vld [vmem:[%s387 + $0x1] sm:$0xff]
        %v2434 = vld [vmem:[%s387 + $0x11] sm:$0xff]
        %v2435 = vld [vmem:[%s387 + $0x21] sm:$0xff]
        %v2436 = vld [vmem:[%s387 + $0x31] sm:$0xff]
        %2441 = vrot.lane.b32.xlu0 %v2433, 127
        %v2442 = vpop.permute.xlu0 %2441
        %2443 = vrot.lane.b32.xlu0 %v2434, 127
        %v2444 = vpop.permute.xlu0 %2443
        %2445 = vrot.lane.b32.xlu0 %v2435, 127
        %v2446 = vpop.permute.xlu0 %2445
        %2447 = vrot.lane.b32.xlu0 %v2436, 127
        %v2448 = vpop.permute.xlu0 %2447
        %v2453 = vcombine.low %v2442, %v2446
        %v2454 = vcombine.high %v2442, %v2446
        %v2456 = vunpack.c.l.s4 1983009808
        %v2457 = vunpack.c.0.s8 %v2456
        %v2458 = vlaneseq
        %v2459 = vshrl.u32 %v2458, 7
        %v2460 = vsub.s32 %v2457, %v2459
        %v2461 = vrot.slane %v2453, %v2460
        %v2463 = vunpack.c.l.s4 1983009808
        %v2464 = vunpack.c.0.s8 %v2463
        %v2465 = vlaneseq
        %v2466 = vshrl.u32 %v2465, 7
        %v2467 = vsub.s32 %v2464, %v2466
        %v2468 = vrot.slane %v2454, %v2467
        %v2469 = vcombine.low %v2444, %v2448
        %v2470 = vcombine.high %v2444, %v2448
        %v2472 = vunpack.c.l.s4 1983009808
        %v2473 = vunpack.c.0.s8 %v2472
        %v2474 = vlaneseq
        %v2475 = vshrl.u32 %v2474, 7
        %v2476 = vsub.s32 %v2473, %v2475
        %v2477 = vrot.slane %v2469, %v2476
        %v2479 = vunpack.c.l.s4 1983009808
        %v2480 = vunpack.c.0.s8 %v2479
        %v2481 = vlaneseq
        %v2482 = vshrl.u32 %v2481, 7
        %v2483 = vsub.s32 %v2480, %v2482
        %v2484 = vrot.slane %v2470, %v2483
        %v2485 = vcombine.low %v2461, %v2477
        %v2486 = vcombine.high %v2461, %v2477
        %v2488 = vunpack.c.l.s4 1934713408
        %v2489 = vunpack.c.0.s8 %v2488
        %v2490 = vlaneseq
        %v2491 = vshrl.u32 %v2490, 7
        %v2492 = vsub.s32 %v2489, %v2491
        %v2493 = vrot.slane %v2485, %v2492
        %v2495 = vunpack.c.l.s4 1934713408
        %v2496 = vunpack.c.0.s8 %v2495
        %v2497 = vlaneseq
        %v2498 = vshrl.u32 %v2497, 7
        %v2499 = vsub.s32 %v2496, %v2498
        %v2500 = vrot.slane %v2486, %v2499
        %v2501 = vcombine.low %v2468, %v2484
        %v2502 = vcombine.high %v2468, %v2484
        %v2504 = vunpack.c.l.s4 1934713408
        %v2505 = vunpack.c.0.s8 %v2504
        %v2506 = vlaneseq
        %v2507 = vshrl.u32 %v2506, 7
        %v2508 = vsub.s32 %v2505, %v2507
        %v2509 = vrot.slane %v2501, %v2508
        %v2511 = vunpack.c.l.s4 1934713408
        %v2512 = vunpack.c.0.s8 %v2511
        %v2513 = vlaneseq
        %v2514 = vshrl.u32 %v2513, 7
        %v2515 = vsub.s32 %v2512, %v2514
        %v2516 = vrot.slane %v2502, %v2515
        %v2517 = vcombine.high %v2493, 0.0
        %v2518 = vcombine.high %v2500, 0.0
        %v2519 = vcombine.high %v2509, 0.0
        %v2520 = vcombine.high %v2516, 0.0
        %2522 = vrot.lane.b32.xlu0 %v2517, 8
        %v2523 = vpop.permute.xlu0 %2522
        %2526 = vrot.lane.b32.xlu0 %v2500, 16
        %v2527 = vpop.permute.xlu0 %2526
        %2530 = vrot.lane.b32.xlu0 %v2518, 24
        %v2531 = vpop.permute.xlu0 %2530
        %2534 = vrot.lane.b32.xlu0 %v2509, 32
        %v2535 = vpop.permute.xlu0 %2534
        %2538 = vrot.lane.b32.xlu0 %v2519, 40
        %v2539 = vpop.permute.xlu0 %2538
        %2542 = vrot.lane.b32.xlu0 %v2516, 48
        %v2543 = vpop.permute.xlu0 %2542
        %2546 = vrot.lane.b32.xlu0 %v2520, 56
        %v2547 = vpop.permute.xlu0 %2546
        %v2549 = vsel %vm371, %v2493, %v2523
        %v2550 = vsel %vm373, %v2549, %v2527
        %v2551 = vsel %vm375, %v2550, %v2531
        %v2552 = vsel %vm377, %v2551, %v2535
        %v2553 = vsel %vm379, %v2552, %v2539
        %v2554 = vsel %vm381, %v2553, %v2543
        %v2555 = vsel %vm383, %v2554, %v2547
        %v2556 = vpack.c.bf16 %v2555, %v2555
        %s2557 = scalar_lea.vmem %s1, 52
        %v2558 = vld [vmem:[%s2557] sm:$0xf]
        %v2560 = vsel %vm498, %v2558, 0
        %v2563 = vsel %vm502, %v2556, 0
        %2565 = vmatprep.subr.bf16.mxu0 0
        %2566 = vmatpush1.bf16.msra.mxu0 0
        %2567 = vmatprep.subr.bf16.mxu0 0
        %2568 = vmatpush1.bf16.msra.mxu0 0
        %2569 = vmatprep.subr.bf16.mxu0 0
        %2570 = vmatpush1.bf16.msra.mxu0 0
        %2571 = vmatprep.subr.bf16.mxu0 0
        %2572 = vmatpush1.bf16.msra.mxu0 0
        %2573 = vmatprep.subr.bf16.mxu0 0
        %2574 = vmatpush1.bf16.msra.mxu0 0
        %2575 = vmatprep.subr.bf16.mxu0 0
        %2576 = vmatpush1.bf16.msra.mxu0 0
        %2577 = vmatprep.subr.bf16.mxu0 0
        %2578 = vmatpush1.bf16.msra.mxu0 0
        %2579 = vmatprep.subr.bf16.mxu0 0
        %2580 = vmatpush1.bf16.msra.mxu0 %v2563
        %2581 = vmatprep.subr.bf16.mxu0 0
        %2582 = vmatpush2.bf16.msra.mxu0 0
        %2583 = vmatprep.subr.bf16.mxu0 0
        %2584 = vmatpush2.bf16.msra.mxu0 0
        %2585 = vmatprep.subr.bf16.mxu0 0
        %2586 = vmatpush2.bf16.msra.mxu0 0
        %2587 = vmatprep.subr.bf16.mxu0 0
        %2588 = vmatpush2.bf16.msra.mxu0 0
        %2589 = vmatprep.subr.bf16.mxu0 0
        %2590 = vmatpush2.bf16.msra.mxu0 0
        %2591 = vmatprep.subr.bf16.mxu0 0
        %2592 = vmatpush2.bf16.msra.mxu0 0
        %2593 = vmatprep.subr.bf16.mxu0 0
        %2594 = vmatpush2.bf16.msra.mxu0 0
        %2595 = vmatprep.subr.bf16.mxu0 0
        %2596 = vmatpush2.bf16.msra.mxu0 0
        %2597 = vmatprep.mubr.bf16.mxu0 0
        %2598 = vmatmul.mubr.bf16.gmra.mxu0 %v2560
        %v2599 = vpop.f32.mrf.mxu0
        %v2600 = vadd.f32 0.0, %v2599
        %v2601 = vpop.f32.mrf.mxu0
        %v2602 = vpop.f32.mrf.mxu0
        %v2603 = vpop.f32.mrf.mxu0
        %2604 = vdwg.mxu0
        %v2605 = vadd.f32 %v2432, %v2600
        %v2606 = vld [vmem:[%s252 + $0x1] sm:$0xff]
        %v2607 = vld [vmem:[%s252 + $0x11] sm:$0xff]
        %v2608 = vld [vmem:[%s252 + $0x21] sm:$0xff]
        %v2609 = vld [vmem:[%s252 + $0x31] sm:$0xff]
        %2614 = vrot.lane.b32.xlu0 %v2606, 126
        %v2615 = vpop.permute.xlu0 %2614
        %2616 = vrot.lane.b32.xlu0 %v2607, 126
        %v2617 = vpop.permute.xlu0 %2616
        %2618 = vrot.lane.b32.xlu0 %v2608, 126
        %v2619 = vpop.permute.xlu0 %2618
        %2620 = vrot.lane.b32.xlu0 %v2609, 126
        %v2621 = vpop.permute.xlu0 %2620
        %v2626 = vcombine.low %v2615, %v2619
        %v2627 = vcombine.high %v2615, %v2619
        %v2629 = vunpack.c.l.s4 1983009808
        %v2630 = vunpack.c.0.s8 %v2629
        %v2631 = vlaneseq
        %v2632 = vshrl.u32 %v2631, 7
        %v2633 = vsub.s32 %v2630, %v2632
        %v2634 = vrot.slane %v2626, %v2633
        %v2636 = vunpack.c.l.s4 1983009808
        %v2637 = vunpack.c.0.s8 %v2636
        %v2638 = vlaneseq
        %v2639 = vshrl.u32 %v2638, 7
        %v2640 = vsub.s32 %v2637, %v2639
        %v2641 = vrot.slane %v2627, %v2640
        %v2642 = vcombine.low %v2617, %v2621
        %v2643 = vcombine.high %v2617, %v2621
        %v2645 = vunpack.c.l.s4 1983009808
        %v2646 = vunpack.c.0.s8 %v2645
        %v2647 = vlaneseq
        %v2648 = vshrl.u32 %v2647, 7
        %v2649 = vsub.s32 %v2646, %v2648
        %v2650 = vrot.slane %v2642, %v2649
        %v2652 = vunpack.c.l.s4 1983009808
        %v2653 = vunpack.c.0.s8 %v2652
        %v2654 = vlaneseq
        %v2655 = vshrl.u32 %v2654, 7
        %v2656 = vsub.s32 %v2653, %v2655
        %v2657 = vrot.slane %v2643, %v2656
        %v2658 = vcombine.low %v2634, %v2650
        %v2659 = vcombine.high %v2634, %v2650
        %v2661 = vunpack.c.l.s4 1934713408
        %v2662 = vunpack.c.0.s8 %v2661
        %v2663 = vlaneseq
        %v2664 = vshrl.u32 %v2663, 7
        %v2665 = vsub.s32 %v2662, %v2664
        %v2666 = vrot.slane %v2658, %v2665
        %v2668 = vunpack.c.l.s4 1934713408
        %v2669 = vunpack.c.0.s8 %v2668
        %v2670 = vlaneseq
        %v2671 = vshrl.u32 %v2670, 7
        %v2672 = vsub.s32 %v2669, %v2671
        %v2673 = vrot.slane %v2659, %v2672
        %v2674 = vcombine.low %v2641, %v2657
        %v2675 = vcombine.high %v2641, %v2657
        %v2677 = vunpack.c.l.s4 1934713408
        %v2678 = vunpack.c.0.s8 %v2677
        %v2679 = vlaneseq
        %v2680 = vshrl.u32 %v2679, 7
        %v2681 = vsub.s32 %v2678, %v2680
        %v2682 = vrot.slane %v2674, %v2681
        %v2684 = vunpack.c.l.s4 1934713408
        %v2685 = vunpack.c.0.s8 %v2684
        %v2686 = vlaneseq
        %v2687 = vshrl.u32 %v2686, 7
        %v2688 = vsub.s32 %v2685, %v2687
        %v2689 = vrot.slane %v2675, %v2688
        %v2690 = vcombine.high %v2666, 0.0
        %v2691 = vcombine.high %v2673, 0.0
        %v2692 = vcombine.high %v2682, 0.0
        %v2693 = vcombine.high %v2689, 0.0
        %2695 = vrot.lane.b32.xlu0 %v2690, 8
        %v2696 = vpop.permute.xlu0 %2695
        %2699 = vrot.lane.b32.xlu0 %v2673, 16
        %v2700 = vpop.permute.xlu0 %2699
        %2703 = vrot.lane.b32.xlu0 %v2691, 24
        %v2704 = vpop.permute.xlu0 %2703
        %2707 = vrot.lane.b32.xlu0 %v2682, 32
        %v2708 = vpop.permute.xlu0 %2707
        %2711 = vrot.lane.b32.xlu0 %v2692, 40
        %v2712 = vpop.permute.xlu0 %2711
        %2715 = vrot.lane.b32.xlu0 %v2689, 48
        %v2716 = vpop.permute.xlu0 %2715
        %2719 = vrot.lane.b32.xlu0 %v2693, 56
        %v2720 = vpop.permute.xlu0 %2719
        %v2722 = vsel %vm371, %v2666, %v2696
        %v2723 = vsel %vm373, %v2722, %v2700
        %v2724 = vsel %vm375, %v2723, %v2704
        %v2725 = vsel %vm377, %v2724, %v2708
        %v2726 = vsel %vm379, %v2725, %v2712
        %v2727 = vsel %vm381, %v2726, %v2716
        %v2728 = vsel %vm383, %v2727, %v2720
        %v2729 = vpack.c.bf16 %v2728, %v2728
        %s2730 = scalar_lea.vmem %s1, 56
        %v2731 = vld [vmem:[%s2730] sm:$0xf]
        %v2733 = vsel %vm498, %v2731, 0
        %v2736 = vsel %vm502, %v2729, 0
        %2738 = vmatprep.subr.bf16.mxu0 0
        %2739 = vmatpush1.bf16.msra.mxu0 0
        %2740 = vmatprep.subr.bf16.mxu0 0
        %2741 = vmatpush1.bf16.msra.mxu0 0
        %2742 = vmatprep.subr.bf16.mxu0 0
        %2743 = vmatpush1.bf16.msra.mxu0 0
        %2744 = vmatprep.subr.bf16.mxu0 0
        %2745 = vmatpush1.bf16.msra.mxu0 0
        %2746 = vmatprep.subr.bf16.mxu0 0
        %2747 = vmatpush1.bf16.msra.mxu0 0
        %2748 = vmatprep.subr.bf16.mxu0 0
        %2749 = vmatpush1.bf16.msra.mxu0 0
        %2750 = vmatprep.subr.bf16.mxu0 0
        %2751 = vmatpush1.bf16.msra.mxu0 0
        %2752 = vmatprep.subr.bf16.mxu0 0
        %2753 = vmatpush1.bf16.msra.mxu0 %v2736
        %2754 = vmatprep.subr.bf16.mxu0 0
        %2755 = vmatpush2.bf16.msra.mxu0 0
        %2756 = vmatprep.subr.bf16.mxu0 0
        %2757 = vmatpush2.bf16.msra.mxu0 0
        %2758 = vmatprep.subr.bf16.mxu0 0
        %2759 = vmatpush2.bf16.msra.mxu0 0
        %2760 = vmatprep.subr.bf16.mxu0 0
        %2761 = vmatpush2.bf16.msra.mxu0 0
        %2762 = vmatprep.subr.bf16.mxu0 0
        %2763 = vmatpush2.bf16.msra.mxu0 0
        %2764 = vmatprep.subr.bf16.mxu0 0
        %2765 = vmatpush2.bf16.msra.mxu0 0
        %2766 = vmatprep.subr.bf16.mxu0 0
        %2767 = vmatpush2.bf16.msra.mxu0 0
        %2768 = vmatprep.subr.bf16.mxu0 0
        %2769 = vmatpush2.bf16.msra.mxu0 0
        %2770 = vmatprep.mubr.bf16.mxu0 0
        %2771 = vmatmul.mubr.bf16.gmra.mxu0 %v2733
        %v2772 = vpop.f32.mrf.mxu0
        %v2773 = vadd.f32 0.0, %v2772
        %v2774 = vpop.f32.mrf.mxu0
        %v2775 = vpop.f32.mrf.mxu0
        %v2776 = vpop.f32.mrf.mxu0
        %2777 = vdwg.mxu0
        %v2778 = vadd.f32 %v2605, %v2773
        %v2779 = vld [vmem:[%s1111 + $0x1] sm:$0xff]
        %v2780 = vld [vmem:[%s1111 + $0x11] sm:$0xff]
        %v2781 = vld [vmem:[%s1111 + $0x21] sm:$0xff]
        %v2782 = vld [vmem:[%s1111 + $0x31] sm:$0xff]
        %v2783 = vcombine.low %v2779, %v2781
        %v2784 = vcombine.high %v2779, %v2781
        %v2786 = vunpack.c.l.s4 1983009808
        %v2787 = vunpack.c.0.s8 %v2786
        %v2788 = vlaneseq
        %v2789 = vshrl.u32 %v2788, 7
        %v2790 = vsub.s32 %v2787, %v2789
        %v2791 = vrot.slane %v2783, %v2790
        %v2793 = vunpack.c.l.s4 1983009808
        %v2794 = vunpack.c.0.s8 %v2793
        %v2795 = vlaneseq
        %v2796 = vshrl.u32 %v2795, 7
        %v2797 = vsub.s32 %v2794, %v2796
        %v2798 = vrot.slane %v2784, %v2797
        %v2799 = vcombine.low %v2780, %v2782
        %v2800 = vcombine.high %v2780, %v2782
        %v2802 = vunpack.c.l.s4 1983009808
        %v2803 = vunpack.c.0.s8 %v2802
        %v2804 = vlaneseq
        %v2805 = vshrl.u32 %v2804, 7
        %v2806 = vsub.s32 %v2803, %v2805
        %v2807 = vrot.slane %v2799, %v2806
        %v2809 = vunpack.c.l.s4 1983009808
        %v2810 = vunpack.c.0.s8 %v2809
        %v2811 = vlaneseq
        %v2812 = vshrl.u32 %v2811, 7
        %v2813 = vsub.s32 %v2810, %v2812
        %v2814 = vrot.slane %v2800, %v2813
        %v2815 = vcombine.low %v2791, %v2807
        %v2816 = vcombine.high %v2791, %v2807
        %v2818 = vunpack.c.l.s4 1934713408
        %v2819 = vunpack.c.0.s8 %v2818
        %v2820 = vlaneseq
        %v2821 = vshrl.u32 %v2820, 7
        %v2822 = vsub.s32 %v2819, %v2821
        %v2823 = vrot.slane %v2815, %v2822
        %v2825 = vunpack.c.l.s4 1934713408
        %v2826 = vunpack.c.0.s8 %v2825
        %v2827 = vlaneseq
        %v2828 = vshrl.u32 %v2827, 7
        %v2829 = vsub.s32 %v2826, %v2828
        %v2830 = vrot.slane %v2816, %v2829
        %v2831 = vcombine.low %v2798, %v2814
        %v2832 = vcombine.high %v2798, %v2814
        %v2834 = vunpack.c.l.s4 1934713408
        %v2835 = vunpack.c.0.s8 %v2834
        %v2836 = vlaneseq
        %v2837 = vshrl.u32 %v2836, 7
        %v2838 = vsub.s32 %v2835, %v2837
        %v2839 = vrot.slane %v2831, %v2838
        %v2841 = vunpack.c.l.s4 1934713408
        %v2842 = vunpack.c.0.s8 %v2841
        %v2843 = vlaneseq
        %v2844 = vshrl.u32 %v2843, 7
        %v2845 = vsub.s32 %v2842, %v2844
        %v2846 = vrot.slane %v2832, %v2845
        %v2847 = vcombine.high %v2823, 0.0
        %v2848 = vcombine.high %v2830, 0.0
        %v2849 = vcombine.high %v2839, 0.0
        %v2850 = vcombine.high %v2846, 0.0
        %2852 = vrot.lane.b32.xlu0 %v2847, 8
        %v2853 = vpop.permute.xlu0 %2852
        %2856 = vrot.lane.b32.xlu0 %v2830, 16
        %v2857 = vpop.permute.xlu0 %2856
        %2860 = vrot.lane.b32.xlu0 %v2848, 24
        %v2861 = vpop.permute.xlu0 %2860
        %2864 = vrot.lane.b32.xlu0 %v2839, 32
        %v2865 = vpop.permute.xlu0 %2864
        %2868 = vrot.lane.b32.xlu0 %v2849, 40
        %v2869 = vpop.permute.xlu0 %2868
        %2872 = vrot.lane.b32.xlu0 %v2846, 48
        %v2873 = vpop.permute.xlu0 %2872
        %2876 = vrot.lane.b32.xlu0 %v2850, 56
        %v2877 = vpop.permute.xlu0 %2876
        %v2879 = vsel %vm371, %v2823, %v2853
        %v2880 = vsel %vm373, %v2879, %v2857
        %v2881 = vsel %vm375, %v2880, %v2861
        %v2882 = vsel %vm377, %v2881, %v2865
        %v2883 = vsel %vm379, %v2882, %v2869
        %v2884 = vsel %vm381, %v2883, %v2873
        %v2885 = vsel %vm383, %v2884, %v2877
        %v2886 = vpack.c.bf16 %v2885, %v2885
        %s2887 = scalar_lea.vmem %s1, 60
        %v2888 = vld [vmem:[%s2887] sm:$0xf]
        %v2890 = vsel %vm498, %v2888, 0
        %v2893 = vsel %vm502, %v2886, 0
        %2895 = vmatprep.subr.bf16.mxu0 0
        %2896 = vmatpush1.bf16.msra.mxu0 0
        %2897 = vmatprep.subr.bf16.mxu0 0
        %2898 = vmatpush1.bf16.msra.mxu0 0
        %2899 = vmatprep.subr.bf16.mxu0 0
        %2900 = vmatpush1.bf16.msra.mxu0 0
        %2901 = vmatprep.subr.bf16.mxu0 0
        %2902 = vmatpush1.bf16.msra.mxu0 0
        %2903 = vmatprep.subr.bf16.mxu0 0
        %2904 = vmatpush1.bf16.msra.mxu0 0
        %2905 = vmatprep.subr.bf16.mxu0 0
        %2906 = vmatpush1.bf16.msra.mxu0 0
        %2907 = vmatprep.subr.bf16.mxu0 0
        %2908 = vmatpush1.bf16.msra.mxu0 0
        %2909 = vmatprep.subr.bf16.mxu0 0
        %2910 = vmatpush1.bf16.msra.mxu0 %v2893
        %2911 = vmatprep.subr.bf16.mxu0 0
        %2912 = vmatpush2.bf16.msra.mxu0 0
        %2913 = vmatprep.subr.bf16.mxu0 0
        %2914 = vmatpush2.bf16.msra.mxu0 0
        %2915 = vmatprep.subr.bf16.mxu0 0
        %2916 = vmatpush2.bf16.msra.mxu0 0
        %2917 = vmatprep.subr.bf16.mxu0 0
        %2918 = vmatpush2.bf16.msra.mxu0 0
        %2919 = vmatprep.subr.bf16.mxu0 0
        %2920 = vmatpush2.bf16.msra.mxu0 0
        %2921 = vmatprep.subr.bf16.mxu0 0
        %2922 = vmatpush2.bf16.msra.mxu0 0
        %2923 = vmatprep.subr.bf16.mxu0 0
        %2924 = vmatpush2.bf16.msra.mxu0 0
        %2925 = vmatprep.subr.bf16.mxu0 0
        %2926 = vmatpush2.bf16.msra.mxu0 0
        %2927 = vmatprep.mubr.bf16.mxu0 0
        %2928 = vmatmul.mubr.bf16.gmra.mxu0 %v2890
        %v2929 = vpop.f32.mrf.mxu0
        %v2930 = vadd.f32 0.0, %v2929
        %v2931 = vpop.f32.mrf.mxu0
        %v2932 = vpop.f32.mrf.mxu0
        %v2933 = vpop.f32.mrf.mxu0
        %2934 = vdwg.mxu0
        %v2935 = vadd.f32 %v2778, %v2930
        %v2936 = vld [vmem:[%s1269 + $0x1] sm:$0xff]
        %v2937 = vld [vmem:[%s1269 + $0x11] sm:$0xff]
        %v2938 = vld [vmem:[%s1269 + $0x21] sm:$0xff]
        %v2939 = vld [vmem:[%s1269 + $0x31] sm:$0xff]
        %v2940 = vcombine.low %v2936, %v2938
        %v2941 = vcombine.high %v2936, %v2938
        %v2943 = vunpack.c.l.s4 1983009808
        %v2944 = vunpack.c.0.s8 %v2943
        %v2945 = vlaneseq
        %v2946 = vshrl.u32 %v2945, 7
        %v2947 = vsub.s32 %v2944, %v2946
        %v2948 = vrot.slane %v2940, %v2947
        %v2950 = vunpack.c.l.s4 1983009808
        %v2951 = vunpack.c.0.s8 %v2950
        %v2952 = vlaneseq
        %v2953 = vshrl.u32 %v2952, 7
        %v2954 = vsub.s32 %v2951, %v2953
        %v2955 = vrot.slane %v2941, %v2954
        %v2956 = vcombine.low %v2937, %v2939
        %v2957 = vcombine.high %v2937, %v2939
        %v2959 = vunpack.c.l.s4 1983009808
        %v2960 = vunpack.c.0.s8 %v2959
        %v2961 = vlaneseq
        %v2962 = vshrl.u32 %v2961, 7
        %v2963 = vsub.s32 %v2960, %v2962
        %v2964 = vrot.slane %v2956, %v2963
        %v2966 = vunpack.c.l.s4 1983009808
        %v2967 = vunpack.c.0.s8 %v2966
        %v2968 = vlaneseq
        %v2969 = vshrl.u32 %v2968, 7
        %v2970 = vsub.s32 %v2967, %v2969
        %v2971 = vrot.slane %v2957, %v2970
        %v2972 = vcombine.low %v2948, %v2964
        %v2973 = vcombine.high %v2948, %v2964
        %v2975 = vunpack.c.l.s4 1934713408
        %v2976 = vunpack.c.0.s8 %v2975
        %v2977 = vlaneseq
        %v2978 = vshrl.u32 %v2977, 7
        %v2979 = vsub.s32 %v2976, %v2978
        %v2980 = vrot.slane %v2972, %v2979
        %v2982 = vunpack.c.l.s4 1934713408
        %v2983 = vunpack.c.0.s8 %v2982
        %v2984 = vlaneseq
        %v2985 = vshrl.u32 %v2984, 7
        %v2986 = vsub.s32 %v2983, %v2985
        %v2987 = vrot.slane %v2973, %v2986
        %v2988 = vcombine.low %v2955, %v2971
        %v2989 = vcombine.high %v2955, %v2971
        %v2991 = vunpack.c.l.s4 1934713408
        %v2992 = vunpack.c.0.s8 %v2991
        %v2993 = vlaneseq
        %v2994 = vshrl.u32 %v2993, 7
        %v2995 = vsub.s32 %v2992, %v2994
        %v2996 = vrot.slane %v2988, %v2995
        %v2998 = vunpack.c.l.s4 1934713408
        %v2999 = vunpack.c.0.s8 %v2998
        %v3000 = vlaneseq
        %v3001 = vshrl.u32 %v3000, 7
        %v3002 = vsub.s32 %v2999, %v3001
        %v3003 = vrot.slane %v2989, %v3002
        %v3004 = vcombine.high %v2980, 0.0
        %v3005 = vcombine.high %v2987, 0.0
        %v3006 = vcombine.high %v2996, 0.0
        %v3007 = vcombine.high %v3003, 0.0
        %3009 = vrot.lane.b32.xlu0 %v3004, 8
        %v3010 = vpop.permute.xlu0 %3009
        %3013 = vrot.lane.b32.xlu0 %v2987, 16
        %v3014 = vpop.permute.xlu0 %3013
        %3017 = vrot.lane.b32.xlu0 %v3005, 24
        %v3018 = vpop.permute.xlu0 %3017
        %3021 = vrot.lane.b32.xlu0 %v2996, 32
        %v3022 = vpop.permute.xlu0 %3021
        %3025 = vrot.lane.b32.xlu0 %v3006, 40
        %v3026 = vpop.permute.xlu0 %3025
        %3029 = vrot.lane.b32.xlu0 %v3003, 48
        %v3030 = vpop.permute.xlu0 %3029
        %3033 = vrot.lane.b32.xlu0 %v3007, 56
        %v3034 = vpop.permute.xlu0 %3033
        %v3036 = vsel %vm371, %v2980, %v3010
        %v3037 = vsel %vm373, %v3036, %v3014
        %v3038 = vsel %vm375, %v3037, %v3018
        %v3039 = vsel %vm377, %v3038, %v3022
        %v3040 = vsel %vm379, %v3039, %v3026
        %v3041 = vsel %vm381, %v3040, %v3030
        %v3042 = vsel %vm383, %v3041, %v3034
        %v3043 = vpack.c.bf16 %v3042, %v3042
        %s3044 = scalar_lea.vmem %s1, 64
        %v3045 = vld [vmem:[%s3044] sm:$0xf]
        %v3047 = vsel %vm498, %v3045, 0
        %v3050 = vsel %vm502, %v3043, 0
        %3052 = vmatprep.subr.bf16.mxu0 0
        %3053 = vmatpush1.bf16.msra.mxu0 0
        %3054 = vmatprep.subr.bf16.mxu0 0
        %3055 = vmatpush1.bf16.msra.mxu0 0
        %3056 = vmatprep.subr.bf16.mxu0 0
        %3057 = vmatpush1.bf16.msra.mxu0 0
        %3058 = vmatprep.subr.bf16.mxu0 0
        %3059 = vmatpush1.bf16.msra.mxu0 0
        %3060 = vmatprep.subr.bf16.mxu0 0
        %3061 = vmatpush1.bf16.msra.mxu0 0
        %3062 = vmatprep.subr.bf16.mxu0 0
        %3063 = vmatpush1.bf16.msra.mxu0 0
        %3064 = vmatprep.subr.bf16.mxu0 0
        %3065 = vmatpush1.bf16.msra.mxu0 0
        %3066 = vmatprep.subr.bf16.mxu0 0
        %3067 = vmatpush1.bf16.msra.mxu0 %v3050
        %3068 = vmatprep.subr.bf16.mxu0 0
        %3069 = vmatpush2.bf16.msra.mxu0 0
        %3070 = vmatprep.subr.bf16.mxu0 0
        %3071 = vmatpush2.bf16.msra.mxu0 0
        %3072 = vmatprep.subr.bf16.mxu0 0
        %3073 = vmatpush2.bf16.msra.mxu0 0
        %3074 = vmatprep.subr.bf16.mxu0 0
        %3075 = vmatpush2.bf16.msra.mxu0 0
        %3076 = vmatprep.subr.bf16.mxu0 0
        %3077 = vmatpush2.bf16.msra.mxu0 0
        %3078 = vmatprep.subr.bf16.mxu0 0
        %3079 = vmatpush2.bf16.msra.mxu0 0
        %3080 = vmatprep.subr.bf16.mxu0 0
        %3081 = vmatpush2.bf16.msra.mxu0 0
        %3082 = vmatprep.subr.bf16.mxu0 0
        %3083 = vmatpush2.bf16.msra.mxu0 0
        %3084 = vmatprep.mubr.bf16.mxu0 0
        %3085 = vmatmul.mubr.bf16.gmra.mxu0 %v3047
        %v3086 = vpop.f32.mrf.mxu0
        %v3087 = vadd.f32 0.0, %v3086
        %v3088 = vpop.f32.mrf.mxu0
        %v3089 = vpop.f32.mrf.mxu0
        %v3090 = vpop.f32.mrf.mxu0
        %3091 = vdwg.mxu0
        %v3092 = vadd.f32 %v2935, %v3087
        %v3093 = vld [vmem:[%s1111 + $0x1] sm:$0xff]
        %v3094 = vld [vmem:[%s1111 + $0x11] sm:$0xff]
        %v3095 = vld [vmem:[%s1111 + $0x21] sm:$0xff]
        %v3096 = vld [vmem:[%s1111 + $0x31] sm:$0xff]
        %3101 = vrot.lane.b32.xlu0 %v3093, 127
        %v3102 = vpop.permute.xlu0 %3101
        %3103 = vrot.lane.b32.xlu0 %v3094, 127
        %v3104 = vpop.permute.xlu0 %3103
        %3105 = vrot.lane.b32.xlu0 %v3095, 127
        %v3106 = vpop.permute.xlu0 %3105
        %3107 = vrot.lane.b32.xlu0 %v3096, 127
        %v3108 = vpop.permute.xlu0 %3107
        %v3113 = vcombine.low %v3102, %v3106
        %v3114 = vcombine.high %v3102, %v3106
        %v3116 = vunpack.c.l.s4 1983009808
        %v3117 = vunpack.c.0.s8 %v3116
        %v3118 = vlaneseq
        %v3119 = vshrl.u32 %v3118, 7
        %v3120 = vsub.s32 %v3117, %v3119
        %v3121 = vrot.slane %v3113, %v3120
        %v3123 = vunpack.c.l.s4 1983009808
        %v3124 = vunpack.c.0.s8 %v3123
        %v3125 = vlaneseq
        %v3126 = vshrl.u32 %v3125, 7
        %v3127 = vsub.s32 %v3124, %v3126
        %v3128 = vrot.slane %v3114, %v3127
        %v3129 = vcombine.low %v3104, %v3108
        %v3130 = vcombine.high %v3104, %v3108
        %v3132 = vunpack.c.l.s4 1983009808
        %v3133 = vunpack.c.0.s8 %v3132
        %v3134 = vlaneseq
        %v3135 = vshrl.u32 %v3134, 7
        %v3136 = vsub.s32 %v3133, %v3135
        %v3137 = vrot.slane %v3129, %v3136
        %v3139 = vunpack.c.l.s4 1983009808
        %v3140 = vunpack.c.0.s8 %v3139
        %v3141 = vlaneseq
        %v3142 = vshrl.u32 %v3141, 7
        %v3143 = vsub.s32 %v3140, %v3142
        %v3144 = vrot.slane %v3130, %v3143
        %v3145 = vcombine.low %v3121, %v3137
        %v3146 = vcombine.high %v3121, %v3137
        %v3148 = vunpack.c.l.s4 1934713408
        %v3149 = vunpack.c.0.s8 %v3148
        %v3150 = vlaneseq
        %v3151 = vshrl.u32 %v3150, 7
        %v3152 = vsub.s32 %v3149, %v3151
        %v3153 = vrot.slane %v3145, %v3152
        %v3155 = vunpack.c.l.s4 1934713408
        %v3156 = vunpack.c.0.s8 %v3155
        %v3157 = vlaneseq
        %v3158 = vshrl.u32 %v3157, 7
        %v3159 = vsub.s32 %v3156, %v3158
        %v3160 = vrot.slane %v3146, %v3159
        %v3161 = vcombine.low %v3128, %v3144
        %v3162 = vcombine.high %v3128, %v3144
        %v3164 = vunpack.c.l.s4 1934713408
        %v3165 = vunpack.c.0.s8 %v3164
        %v3166 = vlaneseq
        %v3167 = vshrl.u32 %v3166, 7
        %v3168 = vsub.s32 %v3165, %v3167
        %v3169 = vrot.slane %v3161, %v3168
        %v3171 = vunpack.c.l.s4 1934713408
        %v3172 = vunpack.c.0.s8 %v3171
        %v3173 = vlaneseq
        %v3174 = vshrl.u32 %v3173, 7
        %v3175 = vsub.s32 %v3172, %v3174
        %v3176 = vrot.slane %v3162, %v3175
        %v3177 = vcombine.high %v3153, 0.0
        %v3178 = vcombine.high %v3160, 0.0
        %v3179 = vcombine.high %v3169, 0.0
        %v3180 = vcombine.high %v3176, 0.0
        %3182 = vrot.lane.b32.xlu0 %v3177, 8
        %v3183 = vpop.permute.xlu0 %3182
        %3186 = vrot.lane.b32.xlu0 %v3160, 16
        %v3187 = vpop.permute.xlu0 %3186
        %3190 = vrot.lane.b32.xlu0 %v3178, 24
        %v3191 = vpop.permute.xlu0 %3190
        %3194 = vrot.lane.b32.xlu0 %v3169, 32
        %v3195 = vpop.permute.xlu0 %3194
        %3198 = vrot.lane.b32.xlu0 %v3179, 40
        %v3199 = vpop.permute.xlu0 %3198
        %3202 = vrot.lane.b32.xlu0 %v3176, 48
        %v3203 = vpop.permute.xlu0 %3202
        %3206 = vrot.lane.b32.xlu0 %v3180, 56
        %v3207 = vpop.permute.xlu0 %3206
        %v3209 = vsel %vm371, %v3153, %v3183
        %v3210 = vsel %vm373, %v3209, %v3187
        %v3211 = vsel %vm375, %v3210, %v3191
        %v3212 = vsel %vm377, %v3211, %v3195
        %v3213 = vsel %vm379, %v3212, %v3199
        %v3214 = vsel %vm381, %v3213, %v3203
        %v3215 = vsel %vm383, %v3214, %v3207
        %v3216 = vpack.c.bf16 %v3215, %v3215
        %s3217 = scalar_lea.vmem %s1, 68
        %v3218 = vld [vmem:[%s3217] sm:$0xf]
        %v3220 = vsel %vm498, %v3218, 0
        %v3223 = vsel %vm502, %v3216, 0
        %3225 = vmatprep.subr.bf16.mxu0 0
        %3226 = vmatpush1.bf16.msra.mxu0 0
        %3227 = vmatprep.subr.bf16.mxu0 0
        %3228 = vmatpush1.bf16.msra.mxu0 0
        %3229 = vmatprep.subr.bf16.mxu0 0
        %3230 = vmatpush1.bf16.msra.mxu0 0
        %3231 = vmatprep.subr.bf16.mxu0 0
        %3232 = vmatpush1.bf16.msra.mxu0 0
        %3233 = vmatprep.subr.bf16.mxu0 0
        %3234 = vmatpush1.bf16.msra.mxu0 0
        %3235 = vmatprep.subr.bf16.mxu0 0
        %3236 = vmatpush1.bf16.msra.mxu0 0
        %3237 = vmatprep.subr.bf16.mxu0 0
        %3238 = vmatpush1.bf16.msra.mxu0 0
        %3239 = vmatprep.subr.bf16.mxu0 0
        %3240 = vmatpush1.bf16.msra.mxu0 %v3223
        %3241 = vmatprep.subr.bf16.mxu0 0
        %3242 = vmatpush2.bf16.msra.mxu0 0
        %3243 = vmatprep.subr.bf16.mxu0 0
        %3244 = vmatpush2.bf16.msra.mxu0 0
        %3245 = vmatprep.subr.bf16.mxu0 0
        %3246 = vmatpush2.bf16.msra.mxu0 0
        %3247 = vmatprep.subr.bf16.mxu0 0
        %3248 = vmatpush2.bf16.msra.mxu0 0
        %3249 = vmatprep.subr.bf16.mxu0 0
        %3250 = vmatpush2.bf16.msra.mxu0 0
        %3251 = vmatprep.subr.bf16.mxu0 0
        %3252 = vmatpush2.bf16.msra.mxu0 0
        %3253 = vmatprep.subr.bf16.mxu0 0
        %3254 = vmatpush2.bf16.msra.mxu0 0
        %3255 = vmatprep.subr.bf16.mxu0 0
        %3256 = vmatpush2.bf16.msra.mxu0 0
        %3257 = vmatprep.mubr.bf16.mxu0 0
        %3258 = vmatmul.mubr.bf16.gmra.mxu0 %v3220
        %v3259 = vpop.f32.mrf.mxu0
        %v3260 = vadd.f32 0.0, %v3259
        %v3261 = vpop.f32.mrf.mxu0
        %v3262 = vpop.f32.mrf.mxu0
        %v3263 = vpop.f32.mrf.mxu0
        %3264 = vdwg.mxu0
        %v3265 = vadd.f32 %v3092, %v3260
        %v3266 = vld [vmem:[%s1269 + $0x1] sm:$0xff]
        %v3267 = vld [vmem:[%s1269 + $0x11] sm:$0xff]
        %v3268 = vld [vmem:[%s1269 + $0x21] sm:$0xff]
        %v3269 = vld [vmem:[%s1269 + $0x31] sm:$0xff]
        %3274 = vrot.lane.b32.xlu0 %v3266, 127
        %v3275 = vpop.permute.xlu0 %3274
        %3276 = vrot.lane.b32.xlu0 %v3267, 127
        %v3277 = vpop.permute.xlu0 %3276
        %3278 = vrot.lane.b32.xlu0 %v3268, 127
        %v3279 = vpop.permute.xlu0 %3278
        %3280 = vrot.lane.b32.xlu0 %v3269, 127
        %v3281 = vpop.permute.xlu0 %3280
        %v3286 = vcombine.low %v3275, %v3279
        %v3287 = vcombine.high %v3275, %v3279
        %v3289 = vunpack.c.l.s4 1983009808
        %v3290 = vunpack.c.0.s8 %v3289
        %v3291 = vlaneseq
        %v3292 = vshrl.u32 %v3291, 7
        %v3293 = vsub.s32 %v3290, %v3292
        %v3294 = vrot.slane %v3286, %v3293
        %v3296 = vunpack.c.l.s4 1983009808
        %v3297 = vunpack.c.0.s8 %v3296
        %v3298 = vlaneseq
        %v3299 = vshrl.u32 %v3298, 7
        %v3300 = vsub.s32 %v3297, %v3299
        %v3301 = vrot.slane %v3287, %v3300
        %v3302 = vcombine.low %v3277, %v3281
        %v3303 = vcombine.high %v3277, %v3281
        %v3305 = vunpack.c.l.s4 1983009808
        %v3306 = vunpack.c.0.s8 %v3305
        %v3307 = vlaneseq
        %v3308 = vshrl.u32 %v3307, 7
        %v3309 = vsub.s32 %v3306, %v3308
        %v3310 = vrot.slane %v3302, %v3309
        %v3312 = vunpack.c.l.s4 1983009808
        %v3313 = vunpack.c.0.s8 %v3312
        %v3314 = vlaneseq
        %v3315 = vshrl.u32 %v3314, 7
        %v3316 = vsub.s32 %v3313, %v3315
        %v3317 = vrot.slane %v3303, %v3316
        %v3318 = vcombine.low %v3294, %v3310
        %v3319 = vcombine.high %v3294, %v3310
        %v3321 = vunpack.c.l.s4 1934713408
        %v3322 = vunpack.c.0.s8 %v3321
        %v3323 = vlaneseq
        %v3324 = vshrl.u32 %v3323, 7
        %v3325 = vsub.s32 %v3322, %v3324
        %v3326 = vrot.slane %v3318, %v3325
        %v3328 = vunpack.c.l.s4 1934713408
        %v3329 = vunpack.c.0.s8 %v3328
        %v3330 = vlaneseq
        %v3331 = vshrl.u32 %v3330, 7
        %v3332 = vsub.s32 %v3329, %v3331
        %v3333 = vrot.slane %v3319, %v3332
        %v3334 = vcombine.low %v3301, %v3317
        %v3335 = vcombine.high %v3301, %v3317
        %v3337 = vunpack.c.l.s4 1934713408
        %v3338 = vunpack.c.0.s8 %v3337
        %v3339 = vlaneseq
        %v3340 = vshrl.u32 %v3339, 7
        %v3341 = vsub.s32 %v3338, %v3340
        %v3342 = vrot.slane %v3334, %v3341
        %v3344 = vunpack.c.l.s4 1934713408
        %v3345 = vunpack.c.0.s8 %v3344
        %v3346 = vlaneseq
        %v3347 = vshrl.u32 %v3346, 7
        %v3348 = vsub.s32 %v3345, %v3347
        %v3349 = vrot.slane %v3335, %v3348
        %v3350 = vcombine.high %v3326, 0.0
        %v3351 = vcombine.high %v3333, 0.0
        %v3352 = vcombine.high %v3342, 0.0
        %v3353 = vcombine.high %v3349, 0.0
        %3355 = vrot.lane.b32.xlu0 %v3350, 8
        %v3356 = vpop.permute.xlu0 %3355
        %3359 = vrot.lane.b32.xlu0 %v3333, 16
        %v3360 = vpop.permute.xlu0 %3359
        %3363 = vrot.lane.b32.xlu0 %v3351, 24
        %v3364 = vpop.permute.xlu0 %3363
        %3367 = vrot.lane.b32.xlu0 %v3342, 32
        %v3368 = vpop.permute.xlu0 %3367
        %3371 = vrot.lane.b32.xlu0 %v3352, 40
        %v3372 = vpop.permute.xlu0 %3371
        %3375 = vrot.lane.b32.xlu0 %v3349, 48
        %v3376 = vpop.permute.xlu0 %3375
        %3379 = vrot.lane.b32.xlu0 %v3353, 56
        %v3380 = vpop.permute.xlu0 %3379
        %v3382 = vsel %vm371, %v3326, %v3356
        %v3383 = vsel %vm373, %v3382, %v3360
        %v3384 = vsel %vm375, %v3383, %v3364
        %v3385 = vsel %vm377, %v3384, %v3368
        %v3386 = vsel %vm379, %v3385, %v3372
        %v3387 = vsel %vm381, %v3386, %v3376
        %v3388 = vsel %vm383, %v3387, %v3380
        %v3389 = vpack.c.bf16 %v3388, %v3388
        %s3390 = scalar_lea.vmem %s1, 72
        %v3391 = vld [vmem:[%s3390] sm:$0xf]
        %v3393 = vsel %vm498, %v3391, 0
        %v3396 = vsel %vm502, %v3389, 0
        %3398 = vmatprep.subr.bf16.mxu0 0
        %3399 = vmatpush1.bf16.msra.mxu0 0
        %3400 = vmatprep.subr.bf16.mxu0 0
        %3401 = vmatpush1.bf16.msra.mxu0 0
        %3402 = vmatprep.subr.bf16.mxu0 0
        %3403 = vmatpush1.bf16.msra.mxu0 0
        %3404 = vmatprep.subr.bf16.mxu0 0
        %3405 = vmatpush1.bf16.msra.mxu0 0
        %3406 = vmatprep.subr.bf16.mxu0 0
        %3407 = vmatpush1.bf16.msra.mxu0 0
        %3408 = vmatprep.subr.bf16.mxu0 0
        %3409 = vmatpush1.bf16.msra.mxu0 0
        %3410 = vmatprep.subr.bf16.mxu0 0
        %3411 = vmatpush1.bf16.msra.mxu0 0
        %3412 = vmatprep.subr.bf16.mxu0 0
        %3413 = vmatpush1.bf16.msra.mxu0 %v3396
        %3414 = vmatprep.subr.bf16.mxu0 0
        %3415 = vmatpush2.bf16.msra.mxu0 0
        %3416 = vmatprep.subr.bf16.mxu0 0
        %3417 = vmatpush2.bf16.msra.mxu0 0
        %3418 = vmatprep.subr.bf16.mxu0 0
        %3419 = vmatpush2.bf16.msra.mxu0 0
        %3420 = vmatprep.subr.bf16.mxu0 0
        %3421 = vmatpush2.bf16.msra.mxu0 0
        %3422 = vmatprep.subr.bf16.mxu0 0
        %3423 = vmatpush2.bf16.msra.mxu0 0
        %3424 = vmatprep.subr.bf16.mxu0 0
        %3425 = vmatpush2.bf16.msra.mxu0 0
        %3426 = vmatprep.subr.bf16.mxu0 0
        %3427 = vmatpush2.bf16.msra.mxu0 0
        %3428 = vmatprep.subr.bf16.mxu0 0
        %3429 = vmatpush2.bf16.msra.mxu0 0
        %3430 = vmatprep.mubr.bf16.mxu0 0
        %3431 = vmatmul.mubr.bf16.gmra.mxu0 %v3393
        %v3432 = vpop.f32.mrf.mxu0
        %v3433 = vadd.f32 0.0, %v3432
        %v3434 = vpop.f32.mrf.mxu0
        %v3435 = vpop.f32.mrf.mxu0
        %v3436 = vpop.f32.mrf.mxu0
        %3437 = vdwg.mxu0
        %v3438 = vadd.f32 %v3265, %v3433
        %v3439 = vld [vmem:[%s1111 + $0x1] sm:$0xff]
        %v3440 = vld [vmem:[%s1111 + $0x11] sm:$0xff]
        %v3441 = vld [vmem:[%s1111 + $0x21] sm:$0xff]
        %v3442 = vld [vmem:[%s1111 + $0x31] sm:$0xff]
        %3447 = vrot.lane.b32.xlu0 %v3439, 126
        %v3448 = vpop.permute.xlu0 %3447
        %3449 = vrot.lane.b32.xlu0 %v3440, 126
        %v3450 = vpop.permute.xlu0 %3449
        %3451 = vrot.lane.b32.xlu0 %v3441, 126
        %v3452 = vpop.permute.xlu0 %3451
        %3453 = vrot.lane.b32.xlu0 %v3442, 126
        %v3454 = vpop.permute.xlu0 %3453
        %v3459 = vcombine.low %v3448, %v3452
        %v3460 = vcombine.high %v3448, %v3452
        %v3462 = vunpack.c.l.s4 1983009808
        %v3463 = vunpack.c.0.s8 %v3462
        %v3464 = vlaneseq
        %v3465 = vshrl.u32 %v3464, 7
        %v3466 = vsub.s32 %v3463, %v3465
        %v3467 = vrot.slane %v3459, %v3466
        %v3469 = vunpack.c.l.s4 1983009808
        %v3470 = vunpack.c.0.s8 %v3469
        %v3471 = vlaneseq
        %v3472 = vshrl.u32 %v3471, 7
        %v3473 = vsub.s32 %v3470, %v3472
        %v3474 = vrot.slane %v3460, %v3473
        %v3475 = vcombine.low %v3450, %v3454
        %v3476 = vcombine.high %v3450, %v3454
        %v3478 = vunpack.c.l.s4 1983009808
        %v3479 = vunpack.c.0.s8 %v3478
        %v3480 = vlaneseq
        %v3481 = vshrl.u32 %v3480, 7
        %v3482 = vsub.s32 %v3479, %v3481
        %v3483 = vrot.slane %v3475, %v3482
        %v3485 = vunpack.c.l.s4 1983009808
        %v3486 = vunpack.c.0.s8 %v3485
        %v3487 = vlaneseq
        %v3488 = vshrl.u32 %v3487, 7
        %v3489 = vsub.s32 %v3486, %v3488
        %v3490 = vrot.slane %v3476, %v3489
        %v3491 = vcombine.low %v3467, %v3483
        %v3492 = vcombine.high %v3467, %v3483
        %v3494 = vunpack.c.l.s4 1934713408
        %v3495 = vunpack.c.0.s8 %v3494
        %v3496 = vlaneseq
        %v3497 = vshrl.u32 %v3496, 7
        %v3498 = vsub.s32 %v3495, %v3497
        %v3499 = vrot.slane %v3491, %v3498
        %v3501 = vunpack.c.l.s4 1934713408
        %v3502 = vunpack.c.0.s8 %v3501
        %v3503 = vlaneseq
        %v3504 = vshrl.u32 %v3503, 7
        %v3505 = vsub.s32 %v3502, %v3504
        %v3506 = vrot.slane %v3492, %v3505
        %v3507 = vcombine.low %v3474, %v3490
        %v3508 = vcombine.high %v3474, %v3490
        %v3510 = vunpack.c.l.s4 1934713408
        %v3511 = vunpack.c.0.s8 %v3510
        %v3512 = vlaneseq
        %v3513 = vshrl.u32 %v3512, 7
        %v3514 = vsub.s32 %v3511, %v3513
        %v3515 = vrot.slane %v3507, %v3514
        %v3517 = vunpack.c.l.s4 1934713408
        %v3518 = vunpack.c.0.s8 %v3517
        %v3519 = vlaneseq
        %v3520 = vshrl.u32 %v3519, 7
        %v3521 = vsub.s32 %v3518, %v3520
        %v3522 = vrot.slane %v3508, %v3521
        %v3523 = vcombine.high %v3499, 0.0
        %v3524 = vcombine.high %v3506, 0.0
        %v3525 = vcombine.high %v3515, 0.0
        %v3526 = vcombine.high %v3522, 0.0
        %3528 = vrot.lane.b32.xlu0 %v3523, 8
        %v3529 = vpop.permute.xlu0 %3528
        %3532 = vrot.lane.b32.xlu0 %v3506, 16
        %v3533 = vpop.permute.xlu0 %3532
        %3536 = vrot.lane.b32.xlu0 %v3524, 24
        %v3537 = vpop.permute.xlu0 %3536
        %3540 = vrot.lane.b32.xlu0 %v3515, 32
        %v3541 = vpop.permute.xlu0 %3540
        %3544 = vrot.lane.b32.xlu0 %v3525, 40
        %v3545 = vpop.permute.xlu0 %3544
        %3548 = vrot.lane.b32.xlu0 %v3522, 48
        %v3549 = vpop.permute.xlu0 %3548
        %3552 = vrot.lane.b32.xlu0 %v3526, 56
        %v3553 = vpop.permute.xlu0 %3552
        %v3555 = vsel %vm371, %v3499, %v3529
        %v3556 = vsel %vm373, %v3555, %v3533
        %v3557 = vsel %vm375, %v3556, %v3537
        %v3558 = vsel %vm377, %v3557, %v3541
        %v3559 = vsel %vm379, %v3558, %v3545
        %v3560 = vsel %vm381, %v3559, %v3549
        %v3561 = vsel %vm383, %v3560, %v3553
        %v3562 = vpack.c.bf16 %v3561, %v3561
        %s3563 = scalar_lea.vmem %s1, 76
        %v3564 = vld [vmem:[%s3563] sm:$0xf]
        %v3566 = vsel %vm498, %v3564, 0
        %v3569 = vsel %vm502, %v3562, 0
        %3571 = vmatprep.subr.bf16.mxu0 0
        %3572 = vmatpush1.bf16.msra.mxu0 0
        %3573 = vmatprep.subr.bf16.mxu0 0
        %3574 = vmatpush1.bf16.msra.mxu0 0
        %3575 = vmatprep.subr.bf16.mxu0 0
        %3576 = vmatpush1.bf16.msra.mxu0 0
        %3577 = vmatprep.subr.bf16.mxu0 0
        %3578 = vmatpush1.bf16.msra.mxu0 0
        %3579 = vmatprep.subr.bf16.mxu0 0
        %3580 = vmatpush1.bf16.msra.mxu0 0
        %3581 = vmatprep.subr.bf16.mxu0 0
        %3582 = vmatpush1.bf16.msra.mxu0 0
        %3583 = vmatprep.subr.bf16.mxu0 0
        %3584 = vmatpush1.bf16.msra.mxu0 0
        %3585 = vmatprep.subr.bf16.mxu0 0
        %3586 = vmatpush1.bf16.msra.mxu0 %v3569
        %3587 = vmatprep.subr.bf16.mxu0 0
        %3588 = vmatpush2.bf16.msra.mxu0 0
        %3589 = vmatprep.subr.bf16.mxu0 0
        %3590 = vmatpush2.bf16.msra.mxu0 0
        %3591 = vmatprep.subr.bf16.mxu0 0
        %3592 = vmatpush2.bf16.msra.mxu0 0
        %3593 = vmatprep.subr.bf16.mxu0 0
        %3594 = vmatpush2.bf16.msra.mxu0 0
        %3595 = vmatprep.subr.bf16.mxu0 0
        %3596 = vmatpush2.bf16.msra.mxu0 0
        %3597 = vmatprep.subr.bf16.mxu0 0
        %3598 = vmatpush2.bf16.msra.mxu0 0
        %3599 = vmatprep.subr.bf16.mxu0 0
        %3600 = vmatpush2.bf16.msra.mxu0 0
        %3601 = vmatprep.subr.bf16.mxu0 0
        %3602 = vmatpush2.bf16.msra.mxu0 0
        %3603 = vmatprep.mubr.bf16.mxu0 0
        %3604 = vmatmul.mubr.bf16.gmra.mxu0 %v3566
        %v3605 = vpop.f32.mrf.mxu0
        %v3606 = vadd.f32 0.0, %v3605
        %v3607 = vpop.f32.mrf.mxu0
        %v3608 = vpop.f32.mrf.mxu0
        %v3609 = vpop.f32.mrf.mxu0
        %3610 = vdwg.mxu0
        %v3611 = vadd.f32 %v3438, %v3606
        %v3612 = vld [vmem:[%s252 + $0x2] sm:$0xff]
        %v3613 = vld [vmem:[%s252 + $0x12] sm:$0xff]
        %v3614 = vld [vmem:[%s252 + $0x22] sm:$0xff]
        %v3615 = vld [vmem:[%s252 + $0x32] sm:$0xff]
        %v3616 = vcombine.low %v3612, %v3614
        %v3617 = vcombine.high %v3612, %v3614
        %v3619 = vunpack.c.l.s4 1983009808
        %v3620 = vunpack.c.0.s8 %v3619
        %v3621 = vlaneseq
        %v3622 = vshrl.u32 %v3621, 7
        %v3623 = vsub.s32 %v3620, %v3622
        %v3624 = vrot.slane %v3616, %v3623
        %v3626 = vunpack.c.l.s4 1983009808
        %v3627 = vunpack.c.0.s8 %v3626
        %v3628 = vlaneseq
        %v3629 = vshrl.u32 %v3628, 7
        %v3630 = vsub.s32 %v3627, %v3629
        %v3631 = vrot.slane %v3617, %v3630
        %v3632 = vcombine.low %v3613, %v3615
        %v3633 = vcombine.high %v3613, %v3615
        %v3635 = vunpack.c.l.s4 1983009808
        %v3636 = vunpack.c.0.s8 %v3635
        %v3637 = vlaneseq
        %v3638 = vshrl.u32 %v3637, 7
        %v3639 = vsub.s32 %v3636, %v3638
        %v3640 = vrot.slane %v3632, %v3639
        %v3642 = vunpack.c.l.s4 1983009808
        %v3643 = vunpack.c.0.s8 %v3642
        %v3644 = vlaneseq
        %v3645 = vshrl.u32 %v3644, 7
        %v3646 = vsub.s32 %v3643, %v3645
        %v3647 = vrot.slane %v3633, %v3646
        %v3648 = vcombine.low %v3624, %v3640
        %v3649 = vcombine.high %v3624, %v3640
        %v3651 = vunpack.c.l.s4 1934713408
        %v3652 = vunpack.c.0.s8 %v3651
        %v3653 = vlaneseq
        %v3654 = vshrl.u32 %v3653, 7
        %v3655 = vsub.s32 %v3652, %v3654
        %v3656 = vrot.slane %v3648, %v3655
        %v3658 = vunpack.c.l.s4 1934713408
        %v3659 = vunpack.c.0.s8 %v3658
        %v3660 = vlaneseq
        %v3661 = vshrl.u32 %v3660, 7
        %v3662 = vsub.s32 %v3659, %v3661
        %v3663 = vrot.slane %v3649, %v3662
        %v3664 = vcombine.low %v3631, %v3647
        %v3665 = vcombine.high %v3631, %v3647
        %v3667 = vunpack.c.l.s4 1934713408
        %v3668 = vunpack.c.0.s8 %v3667
        %v3669 = vlaneseq
        %v3670 = vshrl.u32 %v3669, 7
        %v3671 = vsub.s32 %v3668, %v3670
        %v3672 = vrot.slane %v3664, %v3671
        %v3674 = vunpack.c.l.s4 1934713408
        %v3675 = vunpack.c.0.s8 %v3674
        %v3676 = vlaneseq
        %v3677 = vshrl.u32 %v3676, 7
        %v3678 = vsub.s32 %v3675, %v3677
        %v3679 = vrot.slane %v3665, %v3678
        %v3680 = vcombine.high %v3656, 0.0
        %v3681 = vcombine.high %v3663, 0.0
        %v3682 = vcombine.high %v3672, 0.0
        %v3683 = vcombine.high %v3679, 0.0
        %3685 = vrot.lane.b32.xlu0 %v3680, 8
        %v3686 = vpop.permute.xlu0 %3685
        %3689 = vrot.lane.b32.xlu0 %v3663, 16
        %v3690 = vpop.permute.xlu0 %3689
        %3693 = vrot.lane.b32.xlu0 %v3681, 24
        %v3694 = vpop.permute.xlu0 %3693
        %3697 = vrot.lane.b32.xlu0 %v3672, 32
        %v3698 = vpop.permute.xlu0 %3697
        %3701 = vrot.lane.b32.xlu0 %v3682, 40
        %v3702 = vpop.permute.xlu0 %3701
        %3705 = vrot.lane.b32.xlu0 %v3679, 48
        %v3706 = vpop.permute.xlu0 %3705
        %3709 = vrot.lane.b32.xlu0 %v3683, 56
        %v3710 = vpop.permute.xlu0 %3709
        %v3712 = vsel %vm371, %v3656, %v3686
        %v3713 = vsel %vm373, %v3712, %v3690
        %v3714 = vsel %vm375, %v3713, %v3694
        %v3715 = vsel %vm377, %v3714, %v3698
        %v3716 = vsel %vm379, %v3715, %v3702
        %v3717 = vsel %vm381, %v3716, %v3706
        %v3718 = vsel %vm383, %v3717, %v3710
        %v3719 = vpack.c.bf16 %v3718, %v3718
        %s3720 = scalar_lea.vmem %s1, 80
        %v3721 = vld [vmem:[%s3720] sm:$0xf]
        %v3723 = vsel %vm498, %v3721, 0
        %v3726 = vsel %vm502, %v3719, 0
        %3728 = vmatprep.subr.bf16.mxu0 0
        %3729 = vmatpush1.bf16.msra.mxu0 0
        %3730 = vmatprep.subr.bf16.mxu0 0
        %3731 = vmatpush1.bf16.msra.mxu0 0
        %3732 = vmatprep.subr.bf16.mxu0 0
        %3733 = vmatpush1.bf16.msra.mxu0 0
        %3734 = vmatprep.subr.bf16.mxu0 0
        %3735 = vmatpush1.bf16.msra.mxu0 0
        %3736 = vmatprep.subr.bf16.mxu0 0
        %3737 = vmatpush1.bf16.msra.mxu0 0
        %3738 = vmatprep.subr.bf16.mxu0 0
        %3739 = vmatpush1.bf16.msra.mxu0 0
        %3740 = vmatprep.subr.bf16.mxu0 0
        %3741 = vmatpush1.bf16.msra.mxu0 0
        %3742 = vmatprep.subr.bf16.mxu0 0
        %3743 = vmatpush1.bf16.msra.mxu0 %v3726
        %3744 = vmatprep.subr.bf16.mxu0 0
        %3745 = vmatpush2.bf16.msra.mxu0 0
        %3746 = vmatprep.subr.bf16.mxu0 0
        %3747 = vmatpush2.bf16.msra.mxu0 0
        %3748 = vmatprep.subr.bf16.mxu0 0
        %3749 = vmatpush2.bf16.msra.mxu0 0
        %3750 = vmatprep.subr.bf16.mxu0 0
        %3751 = vmatpush2.bf16.msra.mxu0 0
        %3752 = vmatprep.subr.bf16.mxu0 0
        %3753 = vmatpush2.bf16.msra.mxu0 0
        %3754 = vmatprep.subr.bf16.mxu0 0
        %3755 = vmatpush2.bf16.msra.mxu0 0
        %3756 = vmatprep.subr.bf16.mxu0 0
        %3757 = vmatpush2.bf16.msra.mxu0 0
        %3758 = vmatprep.subr.bf16.mxu0 0
        %3759 = vmatpush2.bf16.msra.mxu0 0
        %3760 = vmatprep.mubr.bf16.mxu0 0
        %3761 = vmatmul.mubr.bf16.gmra.mxu0 %v3723
        %v3762 = vpop.f32.mrf.mxu0
        %v3763 = vadd.f32 0.0, %v3762
        %v3764 = vpop.f32.mrf.mxu0
        %v3765 = vpop.f32.mrf.mxu0
        %v3766 = vpop.f32.mrf.mxu0
        %3767 = vdwg.mxu0
        %v3768 = vadd.f32 %v3611, %v3763
        %v3769 = vld [vmem:[%s387 + $0x2] sm:$0xff]
        %v3770 = vld [vmem:[%s387 + $0x12] sm:$0xff]
        %v3771 = vld [vmem:[%s387 + $0x22] sm:$0xff]
        %v3772 = vld [vmem:[%s387 + $0x32] sm:$0xff]
        %v3773 = vcombine.low %v3769, %v3771
        %v3774 = vcombine.high %v3769, %v3771
        %v3776 = vunpack.c.l.s4 1983009808
        %v3777 = vunpack.c.0.s8 %v3776
        %v3778 = vlaneseq
        %v3779 = vshrl.u32 %v3778, 7
        %v3780 = vsub.s32 %v3777, %v3779
        %v3781 = vrot.slane %v3773, %v3780
        %v3783 = vunpack.c.l.s4 1983009808
        %v3784 = vunpack.c.0.s8 %v3783
        %v3785 = vlaneseq
        %v3786 = vshrl.u32 %v3785, 7
        %v3787 = vsub.s32 %v3784, %v3786
        %v3788 = vrot.slane %v3774, %v3787
        %v3789 = vcombine.low %v3770, %v3772
        %v3790 = vcombine.high %v3770, %v3772
        %v3792 = vunpack.c.l.s4 1983009808
        %v3793 = vunpack.c.0.s8 %v3792
        %v3794 = vlaneseq
        %v3795 = vshrl.u32 %v3794, 7
        %v3796 = vsub.s32 %v3793, %v3795
        %v3797 = vrot.slane %v3789, %v3796
        %v3799 = vunpack.c.l.s4 1983009808
        %v3800 = vunpack.c.0.s8 %v3799
        %v3801 = vlaneseq
        %v3802 = vshrl.u32 %v3801, 7
        %v3803 = vsub.s32 %v3800, %v3802
        %v3804 = vrot.slane %v3790, %v3803
        %v3805 = vcombine.low %v3781, %v3797
        %v3806 = vcombine.high %v3781, %v3797
        %v3808 = vunpack.c.l.s4 1934713408
        %v3809 = vunpack.c.0.s8 %v3808
        %v3810 = vlaneseq
        %v3811 = vshrl.u32 %v3810, 7
        %v3812 = vsub.s32 %v3809, %v3811
        %v3813 = vrot.slane %v3805, %v3812
        %v3815 = vunpack.c.l.s4 1934713408
        %v3816 = vunpack.c.0.s8 %v3815
        %v3817 = vlaneseq
        %v3818 = vshrl.u32 %v3817, 7
        %v3819 = vsub.s32 %v3816, %v3818
        %v3820 = vrot.slane %v3806, %v3819
        %v3821 = vcombine.low %v3788, %v3804
        %v3822 = vcombine.high %v3788, %v3804
        %v3824 = vunpack.c.l.s4 1934713408
        %v3825 = vunpack.c.0.s8 %v3824
        %v3826 = vlaneseq
        %v3827 = vshrl.u32 %v3826, 7
        %v3828 = vsub.s32 %v3825, %v3827
        %v3829 = vrot.slane %v3821, %v3828
        %v3831 = vunpack.c.l.s4 1934713408
        %v3832 = vunpack.c.0.s8 %v3831
        %v3833 = vlaneseq
        %v3834 = vshrl.u32 %v3833, 7
        %v3835 = vsub.s32 %v3832, %v3834
        %v3836 = vrot.slane %v3822, %v3835
        %v3837 = vcombine.high %v3813, 0.0
        %v3838 = vcombine.high %v3820, 0.0
        %v3839 = vcombine.high %v3829, 0.0
        %v3840 = vcombine.high %v3836, 0.0
        %3842 = vrot.lane.b32.xlu0 %v3837, 8
        %v3843 = vpop.permute.xlu0 %3842
        %3846 = vrot.lane.b32.xlu0 %v3820, 16
        %v3847 = vpop.permute.xlu0 %3846
        %3850 = vrot.lane.b32.xlu0 %v3838, 24
        %v3851 = vpop.permute.xlu0 %3850
        %3854 = vrot.lane.b32.xlu0 %v3829, 32
        %v3855 = vpop.permute.xlu0 %3854
        %3858 = vrot.lane.b32.xlu0 %v3839, 40
        %v3859 = vpop.permute.xlu0 %3858
        %3862 = vrot.lane.b32.xlu0 %v3836, 48
        %v3863 = vpop.permute.xlu0 %3862
        %3866 = vrot.lane.b32.xlu0 %v3840, 56
        %v3867 = vpop.permute.xlu0 %3866
        %v3869 = vsel %vm371, %v3813, %v3843
        %v3870 = vsel %vm373, %v3869, %v3847
        %v3871 = vsel %vm375, %v3870, %v3851
        %v3872 = vsel %vm377, %v3871, %v3855
        %v3873 = vsel %vm379, %v3872, %v3859
        %v3874 = vsel %vm381, %v3873, %v3863
        %v3875 = vsel %vm383, %v3874, %v3867
        %v3876 = vpack.c.bf16 %v3875, %v3875
        %s3877 = scalar_lea.vmem %s1, 84
        %v3878 = vld [vmem:[%s3877] sm:$0xf]
        %v3880 = vsel %vm498, %v3878, 0
        %v3883 = vsel %vm502, %v3876, 0
        %3885 = vmatprep.subr.bf16.mxu0 0
        %3886 = vmatpush1.bf16.msra.mxu0 0
        %3887 = vmatprep.subr.bf16.mxu0 0
        %3888 = vmatpush1.bf16.msra.mxu0 0
        %3889 = vmatprep.subr.bf16.mxu0 0
        %3890 = vmatpush1.bf16.msra.mxu0 0
        %3891 = vmatprep.subr.bf16.mxu0 0
        %3892 = vmatpush1.bf16.msra.mxu0 0
        %3893 = vmatprep.subr.bf16.mxu0 0
        %3894 = vmatpush1.bf16.msra.mxu0 0
        %3895 = vmatprep.subr.bf16.mxu0 0
        %3896 = vmatpush1.bf16.msra.mxu0 0
        %3897 = vmatprep.subr.bf16.mxu0 0
        %3898 = vmatpush1.bf16.msra.mxu0 0
        %3899 = vmatprep.subr.bf16.mxu0 0
        %3900 = vmatpush1.bf16.msra.mxu0 %v3883
        %3901 = vmatprep.subr.bf16.mxu0 0
        %3902 = vmatpush2.bf16.msra.mxu0 0
        %3903 = vmatprep.subr.bf16.mxu0 0
        %3904 = vmatpush2.bf16.msra.mxu0 0
        %3905 = vmatprep.subr.bf16.mxu0 0
        %3906 = vmatpush2.bf16.msra.mxu0 0
        %3907 = vmatprep.subr.bf16.mxu0 0
        %3908 = vmatpush2.bf16.msra.mxu0 0
        %3909 = vmatprep.subr.bf16.mxu0 0
        %3910 = vmatpush2.bf16.msra.mxu0 0
        %3911 = vmatprep.subr.bf16.mxu0 0
        %3912 = vmatpush2.bf16.msra.mxu0 0
        %3913 = vmatprep.subr.bf16.mxu0 0
        %3914 = vmatpush2.bf16.msra.mxu0 0
        %3915 = vmatprep.subr.bf16.mxu0 0
        %3916 = vmatpush2.bf16.msra.mxu0 0
        %3917 = vmatprep.mubr.bf16.mxu0 0
        %3918 = vmatmul.mubr.bf16.gmra.mxu0 %v3880
        %v3919 = vpop.f32.mrf.mxu0
        %v3920 = vadd.f32 0.0, %v3919
        %v3921 = vpop.f32.mrf.mxu0
        %v3922 = vpop.f32.mrf.mxu0
        %v3923 = vpop.f32.mrf.mxu0
        %3924 = vdwg.mxu0
        %v3925 = vadd.f32 %v3768, %v3920
        %v3926 = vld [vmem:[%s252 + $0x2] sm:$0xff]
        %v3927 = vld [vmem:[%s252 + $0x12] sm:$0xff]
        %v3928 = vld [vmem:[%s252 + $0x22] sm:$0xff]
        %v3929 = vld [vmem:[%s252 + $0x32] sm:$0xff]
        %3934 = vrot.lane.b32.xlu0 %v3926, 127
        %v3935 = vpop.permute.xlu0 %3934
        %3936 = vrot.lane.b32.xlu0 %v3927, 127
        %v3937 = vpop.permute.xlu0 %3936
        %3938 = vrot.lane.b32.xlu0 %v3928, 127
        %v3939 = vpop.permute.xlu0 %3938
        %3940 = vrot.lane.b32.xlu0 %v3929, 127
        %v3941 = vpop.permute.xlu0 %3940
        %v3946 = vcombine.low %v3935, %v3939
        %v3947 = vcombine.high %v3935, %v3939
        %v3949 = vunpack.c.l.s4 1983009808
        %v3950 = vunpack.c.0.s8 %v3949
        %v3951 = vlaneseq
        %v3952 = vshrl.u32 %v3951, 7
        %v3953 = vsub.s32 %v3950, %v3952
        %v3954 = vrot.slane %v3946, %v3953
        %v3956 = vunpack.c.l.s4 1983009808
        %v3957 = vunpack.c.0.s8 %v3956
        %v3958 = vlaneseq
        %v3959 = vshrl.u32 %v3958, 7
        %v3960 = vsub.s32 %v3957, %v3959
        %v3961 = vrot.slane %v3947, %v3960
        %v3962 = vcombine.low %v3937, %v3941
        %v3963 = vcombine.high %v3937, %v3941
        %v3965 = vunpack.c.l.s4 1983009808
        %v3966 = vunpack.c.0.s8 %v3965
        %v3967 = vlaneseq
        %v3968 = vshrl.u32 %v3967, 7
        %v3969 = vsub.s32 %v3966, %v3968
        %v3970 = vrot.slane %v3962, %v3969
        %v3972 = vunpack.c.l.s4 1983009808
        %v3973 = vunpack.c.0.s8 %v3972
        %v3974 = vlaneseq
        %v3975 = vshrl.u32 %v3974, 7
        %v3976 = vsub.s32 %v3973, %v3975
        %v3977 = vrot.slane %v3963, %v3976
        %v3978 = vcombine.low %v3954, %v3970
        %v3979 = vcombine.high %v3954, %v3970
        %v3981 = vunpack.c.l.s4 1934713408
        %v3982 = vunpack.c.0.s8 %v3981
        %v3983 = vlaneseq
        %v3984 = vshrl.u32 %v3983, 7
        %v3985 = vsub.s32 %v3982, %v3984
        %v3986 = vrot.slane %v3978, %v3985
        %v3988 = vunpack.c.l.s4 1934713408
        %v3989 = vunpack.c.0.s8 %v3988
        %v3990 = vlaneseq
        %v3991 = vshrl.u32 %v3990, 7
        %v3992 = vsub.s32 %v3989, %v3991
        %v3993 = vrot.slane %v3979, %v3992
        %v3994 = vcombine.low %v3961, %v3977
        %v3995 = vcombine.high %v3961, %v3977
        %v3997 = vunpack.c.l.s4 1934713408
        %v3998 = vunpack.c.0.s8 %v3997
        %v3999 = vlaneseq
        %v4000 = vshrl.u32 %v3999, 7
        %v4001 = vsub.s32 %v3998, %v4000
        %v4002 = vrot.slane %v3994, %v4001
        %v4004 = vunpack.c.l.s4 1934713408
        %v4005 = vunpack.c.0.s8 %v4004
        %v4006 = vlaneseq
        %v4007 = vshrl.u32 %v4006, 7
        %v4008 = vsub.s32 %v4005, %v4007
        %v4009 = vrot.slane %v3995, %v4008
        %v4010 = vcombine.high %v3986, 0.0
        %v4011 = vcombine.high %v3993, 0.0
        %v4012 = vcombine.high %v4002, 0.0
        %v4013 = vcombine.high %v4009, 0.0
        %4015 = vrot.lane.b32.xlu0 %v4010, 8
        %v4016 = vpop.permute.xlu0 %4015
        %4019 = vrot.lane.b32.xlu0 %v3993, 16
        %v4020 = vpop.permute.xlu0 %4019
        %4023 = vrot.lane.b32.xlu0 %v4011, 24
        %v4024 = vpop.permute.xlu0 %4023
        %4027 = vrot.lane.b32.xlu0 %v4002, 32
        %v4028 = vpop.permute.xlu0 %4027
        %4031 = vrot.lane.b32.xlu0 %v4012, 40
        %v4032 = vpop.permute.xlu0 %4031
        %4035 = vrot.lane.b32.xlu0 %v4009, 48
        %v4036 = vpop.permute.xlu0 %4035
        %4039 = vrot.lane.b32.xlu0 %v4013, 56
        %v4040 = vpop.permute.xlu0 %4039
        %v4042 = vsel %vm371, %v3986, %v4016
        %v4043 = vsel %vm373, %v4042, %v4020
        %v4044 = vsel %vm375, %v4043, %v4024
        %v4045 = vsel %vm377, %v4044, %v4028
        %v4046 = vsel %vm379, %v4045, %v4032
        %v4047 = vsel %vm381, %v4046, %v4036
        %v4048 = vsel %vm383, %v4047, %v4040
        %v4049 = vpack.c.bf16 %v4048, %v4048
        %s4050 = scalar_lea.vmem %s1, 88
        %v4051 = vld [vmem:[%s4050] sm:$0xf]
        %v4053 = vsel %vm498, %v4051, 0
        %v4056 = vsel %vm502, %v4049, 0
        %4058 = vmatprep.subr.bf16.mxu0 0
        %4059 = vmatpush1.bf16.msra.mxu0 0
        %4060 = vmatprep.subr.bf16.mxu0 0
        %4061 = vmatpush1.bf16.msra.mxu0 0
        %4062 = vmatprep.subr.bf16.mxu0 0
        %4063 = vmatpush1.bf16.msra.mxu0 0
        %4064 = vmatprep.subr.bf16.mxu0 0
        %4065 = vmatpush1.bf16.msra.mxu0 0
        %4066 = vmatprep.subr.bf16.mxu0 0
        %4067 = vmatpush1.bf16.msra.mxu0 0
        %4068 = vmatprep.subr.bf16.mxu0 0
        %4069 = vmatpush1.bf16.msra.mxu0 0
        %4070 = vmatprep.subr.bf16.mxu0 0
        %4071 = vmatpush1.bf16.msra.mxu0 0
        %4072 = vmatprep.subr.bf16.mxu0 0
        %4073 = vmatpush1.bf16.msra.mxu0 %v4056
        %4074 = vmatprep.subr.bf16.mxu0 0
        %4075 = vmatpush2.bf16.msra.mxu0 0
        %4076 = vmatprep.subr.bf16.mxu0 0
        %4077 = vmatpush2.bf16.msra.mxu0 0
        %4078 = vmatprep.subr.bf16.mxu0 0
        %4079 = vmatpush2.bf16.msra.mxu0 0
        %4080 = vmatprep.subr.bf16.mxu0 0
        %4081 = vmatpush2.bf16.msra.mxu0 0
        %4082 = vmatprep.subr.bf16.mxu0 0
        %4083 = vmatpush2.bf16.msra.mxu0 0
        %4084 = vmatprep.subr.bf16.mxu0 0
        %4085 = vmatpush2.bf16.msra.mxu0 0
        %4086 = vmatprep.subr.bf16.mxu0 0
        %4087 = vmatpush2.bf16.msra.mxu0 0
        %4088 = vmatprep.subr.bf16.mxu0 0
        %4089 = vmatpush2.bf16.msra.mxu0 0
        %4090 = vmatprep.mubr.bf16.mxu0 0
        %4091 = vmatmul.mubr.bf16.gmra.mxu0 %v4053
        %v4092 = vpop.f32.mrf.mxu0
        %v4093 = vadd.f32 0.0, %v4092
        %v4094 = vpop.f32.mrf.mxu0
        %v4095 = vpop.f32.mrf.mxu0
        %v4096 = vpop.f32.mrf.mxu0
        %4097 = vdwg.mxu0
        %v4098 = vadd.f32 %v3925, %v4093
        %v4099 = vld [vmem:[%s387 + $0x2] sm:$0xff]
        %v4100 = vld [vmem:[%s387 + $0x12] sm:$0xff]
        %v4101 = vld [vmem:[%s387 + $0x22] sm:$0xff]
        %v4102 = vld [vmem:[%s387 + $0x32] sm:$0xff]
        %4107 = vrot.lane.b32.xlu0 %v4099, 127
        %v4108 = vpop.permute.xlu0 %4107
        %4109 = vrot.lane.b32.xlu0 %v4100, 127
        %v4110 = vpop.permute.xlu0 %4109
        %4111 = vrot.lane.b32.xlu0 %v4101, 127
        %v4112 = vpop.permute.xlu0 %4111
        %4113 = vrot.lane.b32.xlu0 %v4102, 127
        %v4114 = vpop.permute.xlu0 %4113
        %v4119 = vcombine.low %v4108, %v4112
        %v4120 = vcombine.high %v4108, %v4112
        %v4122 = vunpack.c.l.s4 1983009808
        %v4123 = vunpack.c.0.s8 %v4122
        %v4124 = vlaneseq
        %v4125 = vshrl.u32 %v4124, 7
        %v4126 = vsub.s32 %v4123, %v4125
        %v4127 = vrot.slane %v4119, %v4126
        %v4129 = vunpack.c.l.s4 1983009808
        %v4130 = vunpack.c.0.s8 %v4129
        %v4131 = vlaneseq
        %v4132 = vshrl.u32 %v4131, 7
        %v4133 = vsub.s32 %v4130, %v4132
        %v4134 = vrot.slane %v4120, %v4133
        %v4135 = vcombine.low %v4110, %v4114
        %v4136 = vcombine.high %v4110, %v4114
        %v4138 = vunpack.c.l.s4 1983009808
        %v4139 = vunpack.c.0.s8 %v4138
        %v4140 = vlaneseq
        %v4141 = vshrl.u32 %v4140, 7
        %v4142 = vsub.s32 %v4139, %v4141
        %v4143 = vrot.slane %v4135, %v4142
        %v4145 = vunpack.c.l.s4 1983009808
        %v4146 = vunpack.c.0.s8 %v4145
        %v4147 = vlaneseq
        %v4148 = vshrl.u32 %v4147, 7
        %v4149 = vsub.s32 %v4146, %v4148
        %v4150 = vrot.slane %v4136, %v4149
        %v4151 = vcombine.low %v4127, %v4143
        %v4152 = vcombine.high %v4127, %v4143
        %v4154 = vunpack.c.l.s4 1934713408
        %v4155 = vunpack.c.0.s8 %v4154
        %v4156 = vlaneseq
        %v4157 = vshrl.u32 %v4156, 7
        %v4158 = vsub.s32 %v4155, %v4157
        %v4159 = vrot.slane %v4151, %v4158
        %v4161 = vunpack.c.l.s4 1934713408
        %v4162 = vunpack.c.0.s8 %v4161
        %v4163 = vlaneseq
        %v4164 = vshrl.u32 %v4163, 7
        %v4165 = vsub.s32 %v4162, %v4164
        %v4166 = vrot.slane %v4152, %v4165
        %v4167 = vcombine.low %v4134, %v4150
        %v4168 = vcombine.high %v4134, %v4150
        %v4170 = vunpack.c.l.s4 1934713408
        %v4171 = vunpack.c.0.s8 %v4170
        %v4172 = vlaneseq
        %v4173 = vshrl.u32 %v4172, 7
        %v4174 = vsub.s32 %v4171, %v4173
        %v4175 = vrot.slane %v4167, %v4174
        %v4177 = vunpack.c.l.s4 1934713408
        %v4178 = vunpack.c.0.s8 %v4177
        %v4179 = vlaneseq
        %v4180 = vshrl.u32 %v4179, 7
        %v4181 = vsub.s32 %v4178, %v4180
        %v4182 = vrot.slane %v4168, %v4181
        %v4183 = vcombine.high %v4159, 0.0
        %v4184 = vcombine.high %v4166, 0.0
        %v4185 = vcombine.high %v4175, 0.0
        %v4186 = vcombine.high %v4182, 0.0
        %4188 = vrot.lane.b32.xlu0 %v4183, 8
        %v4189 = vpop.permute.xlu0 %4188
        %4192 = vrot.lane.b32.xlu0 %v4166, 16
        %v4193 = vpop.permute.xlu0 %4192
        %4196 = vrot.lane.b32.xlu0 %v4184, 24
        %v4197 = vpop.permute.xlu0 %4196
        %4200 = vrot.lane.b32.xlu0 %v4175, 32
        %v4201 = vpop.permute.xlu0 %4200
        %4204 = vrot.lane.b32.xlu0 %v4185, 40
        %v4205 = vpop.permute.xlu0 %4204
        %4208 = vrot.lane.b32.xlu0 %v4182, 48
        %v4209 = vpop.permute.xlu0 %4208
        %4212 = vrot.lane.b32.xlu0 %v4186, 56
        %v4213 = vpop.permute.xlu0 %4212
        %v4215 = vsel %vm371, %v4159, %v4189
        %v4216 = vsel %vm373, %v4215, %v4193
        %v4217 = vsel %vm375, %v4216, %v4197
        %v4218 = vsel %vm377, %v4217, %v4201
        %v4219 = vsel %vm379, %v4218, %v4205
        %v4220 = vsel %vm381, %v4219, %v4209
        %v4221 = vsel %vm383, %v4220, %v4213
        %v4222 = vpack.c.bf16 %v4221, %v4221
        %s4223 = scalar_lea.vmem %s1, 92
        %v4224 = vld [vmem:[%s4223] sm:$0xf]
        %v4226 = vsel %vm498, %v4224, 0
        %v4229 = vsel %vm502, %v4222, 0
        %4231 = vmatprep.subr.bf16.mxu0 0
        %4232 = vmatpush1.bf16.msra.mxu0 0
        %4233 = vmatprep.subr.bf16.mxu0 0
        %4234 = vmatpush1.bf16.msra.mxu0 0
        %4235 = vmatprep.subr.bf16.mxu0 0
        %4236 = vmatpush1.bf16.msra.mxu0 0
        %4237 = vmatprep.subr.bf16.mxu0 0
        %4238 = vmatpush1.bf16.msra.mxu0 0
        %4239 = vmatprep.subr.bf16.mxu0 0
        %4240 = vmatpush1.bf16.msra.mxu0 0
        %4241 = vmatprep.subr.bf16.mxu0 0
        %4242 = vmatpush1.bf16.msra.mxu0 0
        %4243 = vmatprep.subr.bf16.mxu0 0
        %4244 = vmatpush1.bf16.msra.mxu0 0
        %4245 = vmatprep.subr.bf16.mxu0 0
        %4246 = vmatpush1.bf16.msra.mxu0 %v4229
        %4247 = vmatprep.subr.bf16.mxu0 0
        %4248 = vmatpush2.bf16.msra.mxu0 0
        %4249 = vmatprep.subr.bf16.mxu0 0
        %4250 = vmatpush2.bf16.msra.mxu0 0
        %4251 = vmatprep.subr.bf16.mxu0 0
        %4252 = vmatpush2.bf16.msra.mxu0 0
        %4253 = vmatprep.subr.bf16.mxu0 0
        %4254 = vmatpush2.bf16.msra.mxu0 0
        %4255 = vmatprep.subr.bf16.mxu0 0
        %4256 = vmatpush2.bf16.msra.mxu0 0
        %4257 = vmatprep.subr.bf16.mxu0 0
        %4258 = vmatpush2.bf16.msra.mxu0 0
        %4259 = vmatprep.subr.bf16.mxu0 0
        %4260 = vmatpush2.bf16.msra.mxu0 0
        %4261 = vmatprep.subr.bf16.mxu0 0
        %4262 = vmatpush2.bf16.msra.mxu0 0
        %4263 = vmatprep.mubr.bf16.mxu0 0
        %4264 = vmatmul.mubr.bf16.gmra.mxu0 %v4226
        %v4265 = vpop.f32.mrf.mxu0
        %v4266 = vadd.f32 0.0, %v4265
        %v4267 = vpop.f32.mrf.mxu0
        %v4268 = vpop.f32.mrf.mxu0
        %v4269 = vpop.f32.mrf.mxu0
        %4270 = vdwg.mxu0
        %v4271 = vadd.f32 %v4098, %v4266
        %v4272 = vld [vmem:[%s252 + $0x2] sm:$0xff]
        %v4273 = vld [vmem:[%s252 + $0x12] sm:$0xff]
        %v4274 = vld [vmem:[%s252 + $0x22] sm:$0xff]
        %v4275 = vld [vmem:[%s252 + $0x32] sm:$0xff]
        %4280 = vrot.lane.b32.xlu0 %v4272, 126
        %v4281 = vpop.permute.xlu0 %4280
        %4282 = vrot.lane.b32.xlu0 %v4273, 126
        %v4283 = vpop.permute.xlu0 %4282
        %4284 = vrot.lane.b32.xlu0 %v4274, 126
        %v4285 = vpop.permute.xlu0 %4284
        %4286 = vrot.lane.b32.xlu0 %v4275, 126
        %v4287 = vpop.permute.xlu0 %4286
        %v4292 = vcombine.low %v4281, %v4285
        %v4293 = vcombine.high %v4281, %v4285
        %v4295 = vunpack.c.l.s4 1983009808
        %v4296 = vunpack.c.0.s8 %v4295
        %v4297 = vlaneseq
        %v4298 = vshrl.u32 %v4297, 7
        %v4299 = vsub.s32 %v4296, %v4298
        %v4300 = vrot.slane %v4292, %v4299
        %v4302 = vunpack.c.l.s4 1983009808
        %v4303 = vunpack.c.0.s8 %v4302
        %v4304 = vlaneseq
        %v4305 = vshrl.u32 %v4304, 7
        %v4306 = vsub.s32 %v4303, %v4305
        %v4307 = vrot.slane %v4293, %v4306
        %v4308 = vcombine.low %v4283, %v4287
        %v4309 = vcombine.high %v4283, %v4287
        %v4311 = vunpack.c.l.s4 1983009808
        %v4312 = vunpack.c.0.s8 %v4311
        %v4313 = vlaneseq
        %v4314 = vshrl.u32 %v4313, 7
        %v4315 = vsub.s32 %v4312, %v4314
        %v4316 = vrot.slane %v4308, %v4315
        %v4318 = vunpack.c.l.s4 1983009808
        %v4319 = vunpack.c.0.s8 %v4318
        %v4320 = vlaneseq
        %v4321 = vshrl.u32 %v4320, 7
        %v4322 = vsub.s32 %v4319, %v4321
        %v4323 = vrot.slane %v4309, %v4322
        %v4324 = vcombine.low %v4300, %v4316
        %v4325 = vcombine.high %v4300, %v4316
        %v4327 = vunpack.c.l.s4 1934713408
        %v4328 = vunpack.c.0.s8 %v4327
        %v4329 = vlaneseq
        %v4330 = vshrl.u32 %v4329, 7
        %v4331 = vsub.s32 %v4328, %v4330
        %v4332 = vrot.slane %v4324, %v4331
        %v4334 = vunpack.c.l.s4 1934713408
        %v4335 = vunpack.c.0.s8 %v4334
        %v4336 = vlaneseq
        %v4337 = vshrl.u32 %v4336, 7
        %v4338 = vsub.s32 %v4335, %v4337
        %v4339 = vrot.slane %v4325, %v4338
        %v4340 = vcombine.low %v4307, %v4323
        %v4341 = vcombine.high %v4307, %v4323
        %v4343 = vunpack.c.l.s4 1934713408
        %v4344 = vunpack.c.0.s8 %v4343
        %v4345 = vlaneseq
        %v4346 = vshrl.u32 %v4345, 7
        %v4347 = vsub.s32 %v4344, %v4346
        %v4348 = vrot.slane %v4340, %v4347
        %v4350 = vunpack.c.l.s4 1934713408
        %v4351 = vunpack.c.0.s8 %v4350
        %v4352 = vlaneseq
        %v4353 = vshrl.u32 %v4352, 7
        %v4354 = vsub.s32 %v4351, %v4353
        %v4355 = vrot.slane %v4341, %v4354
        %v4356 = vcombine.high %v4332, 0.0
        %v4357 = vcombine.high %v4339, 0.0
        %v4358 = vcombine.high %v4348, 0.0
        %v4359 = vcombine.high %v4355, 0.0
        %4361 = vrot.lane.b32.xlu0 %v4356, 8
        %v4362 = vpop.permute.xlu0 %4361
        %4365 = vrot.lane.b32.xlu0 %v4339, 16
        %v4366 = vpop.permute.xlu0 %4365
        %4369 = vrot.lane.b32.xlu0 %v4357, 24
        %v4370 = vpop.permute.xlu0 %4369
        %4373 = vrot.lane.b32.xlu0 %v4348, 32
        %v4374 = vpop.permute.xlu0 %4373
        %4377 = vrot.lane.b32.xlu0 %v4358, 40
        %v4378 = vpop.permute.xlu0 %4377
        %4381 = vrot.lane.b32.xlu0 %v4355, 48
        %v4382 = vpop.permute.xlu0 %4381
        %4385 = vrot.lane.b32.xlu0 %v4359, 56
        %v4386 = vpop.permute.xlu0 %4385
        %v4388 = vsel %vm371, %v4332, %v4362
        %v4389 = vsel %vm373, %v4388, %v4366
        %v4390 = vsel %vm375, %v4389, %v4370
        %v4391 = vsel %vm377, %v4390, %v4374
        %v4392 = vsel %vm379, %v4391, %v4378
        %v4393 = vsel %vm381, %v4392, %v4382
        %v4394 = vsel %vm383, %v4393, %v4386
        %v4395 = vpack.c.bf16 %v4394, %v4394
        %s4396 = scalar_lea.vmem %s1, 96
        %v4397 = vld [vmem:[%s4396] sm:$0xf]
        %v4399 = vsel %vm498, %v4397, 0
        %v4402 = vsel %vm502, %v4395, 0
        %4404 = vmatprep.subr.bf16.mxu0 0
        %4405 = vmatpush1.bf16.msra.mxu0 0
        %4406 = vmatprep.subr.bf16.mxu0 0
        %4407 = vmatpush1.bf16.msra.mxu0 0
        %4408 = vmatprep.subr.bf16.mxu0 0
        %4409 = vmatpush1.bf16.msra.mxu0 0
        %4410 = vmatprep.subr.bf16.mxu0 0
        %4411 = vmatpush1.bf16.msra.mxu0 0
        %4412 = vmatprep.subr.bf16.mxu0 0
        %4413 = vmatpush1.bf16.msra.mxu0 0
        %4414 = vmatprep.subr.bf16.mxu0 0
        %4415 = vmatpush1.bf16.msra.mxu0 0
        %4416 = vmatprep.subr.bf16.mxu0 0
        %4417 = vmatpush1.bf16.msra.mxu0 0
        %4418 = vmatprep.subr.bf16.mxu0 0
        %4419 = vmatpush1.bf16.msra.mxu0 %v4402
        %4420 = vmatprep.subr.bf16.mxu0 0
        %4421 = vmatpush2.bf16.msra.mxu0 0
        %4422 = vmatprep.subr.bf16.mxu0 0
        %4423 = vmatpush2.bf16.msra.mxu0 0
        %4424 = vmatprep.subr.bf16.mxu0 0
        %4425 = vmatpush2.bf16.msra.mxu0 0
        %4426 = vmatprep.subr.bf16.mxu0 0
        %4427 = vmatpush2.bf16.msra.mxu0 0
        %4428 = vmatprep.subr.bf16.mxu0 0
        %4429 = vmatpush2.bf16.msra.mxu0 0
        %4430 = vmatprep.subr.bf16.mxu0 0
        %4431 = vmatpush2.bf16.msra.mxu0 0
        %4432 = vmatprep.subr.bf16.mxu0 0
        %4433 = vmatpush2.bf16.msra.mxu0 0
        %4434 = vmatprep.subr.bf16.mxu0 0
        %4435 = vmatpush2.bf16.msra.mxu0 0
        %4436 = vmatprep.mubr.bf16.mxu0 0
        %4437 = vmatmul.mubr.bf16.gmra.mxu0 %v4399
        %v4438 = vpop.f32.mrf.mxu0
        %v4439 = vadd.f32 0.0, %v4438
        %v4440 = vpop.f32.mrf.mxu0
        %v4441 = vpop.f32.mrf.mxu0
        %v4442 = vpop.f32.mrf.mxu0
        %4443 = vdwg.mxu0
        %v4444 = vadd.f32 %v4271, %v4439
        %v4445 = vpack.c.bf16 %v4444, %v4444
        %vm4446 = vcmask 519168
        %4447 = vst.msk [vmem:[%s222] sm:$0xf] %vm4446, %v4445
        %vm4448 = vcmask 523264
        %v4449 = vsel %vm4448, %v4444, 0.0
        %4450 = vadd.xlane.f32.xlu0 %v4449
        %v4451 = vpop.xlane.xlu0 %4450
        %v4452 = vmul.f32 %v4451, 0.015625
        %v4453 = vsub.f32 %v4444, %v4452
        %v4454 = vmul.f32 %v4453, %v4453
        %v4455 = vsel %vm4448, %v4454, 0.0
        %4456 = vadd.xlane.f32.xlu0 %v4455
        %v4457 = vpop.xlane.xlu0 %4456
        %vm4458 = vcmask 7168
        %4459 = vst.msk [vmem:[%s261] sm:$0xff] %vm4458, %v4451
        %4460 = vst.msk [vmem:[%s269] sm:$0xff] %vm4458, %v4457
        %s4461 = sand.u32 %s90, 1
        %s4462 = scalar_lea.sflag [#allocation3], %s4461
        %s4463 = sand.u32 %s90, 1
        %s4464 = smul.addr %s4463, 4
        %s4465 = scalar_lea.vmem [#allocation2], %s4464
        %p4466 = scmp.lt.s32.totalorder %s23, 1
        %s4467 = scalar_select %p4466, %s23, 1
        %p4468 = scmp.lt.s32.totalorder %s24, 3
        %s4469 = scalar_select %p4468, %s24, 3
        %s4470 = smul.addr %s4467, 4
        %s4471 = sadd.s32 %s4469, %s4470
        %s4472 = smul.addr %s4471, 8
        %s4473 = scalar_lea.vmem %s3, %s4472
        %p4474 = scmp.lt.s32.totalorder %s23, 1
        %s4475 = scalar_select %p4474, %s23, 1
        %p4476 = scmp.lt.s32.totalorder %s24, 3
        %s4477 = scalar_select %p4476, %s24, 3
        %s4478 = smul.addr %s4475, 4
        %s4479 = sadd.s32 %s4477, %s4478
        %s4480 = smul.addr %s4479, 8
        %s4481 = scalar_lea.vmem %s4, %s4480
        // Predicated region
        $region29: #{tpu_custom_call.1} parent=27 // pred_check
          %p4482 = pneg %p100
        $region30: #{tpu_custom_call.1} parent=27 // pred_check_branch
          %4484 = sbr.rel (%p4482) target = $region32
        $region31: #{tpu_custom_call.1} parent=27 // pred_region
          %s4486 = ssub.s32 64, 64
          %4487 = vsyncadd %s4462, %s4486
          %s4488 = smul.addr %s23, 4
          %s4489 = sadd.s32 %s24, %s4488
          %s4490 = smul.addr %s4489, 64
          %s4491 = scalar_lea.hbm %s2, %s4490
          %s4493 = sshll.u32 %s4465, 4
          %s4494 = int_to_ptr.vmem [resolvable:$true] %s4493
          %4496 = dma.vmem_to_hbm [thread:$0]  %s4494, 64, %s4491, %s4462
        $region32: #{tpu_custom_call.1} parent=27 // pred_fallthru
          _
        // Predicated region
        $region33: #{tpu_custom_call.1} parent=27 // pred_check
          %p4497 = pneg %p128
        $region34: #{tpu_custom_call.1} parent=27 // pred_check_branch
          %4499 = sbr.rel (%p4497) target = $region36
        $region35: #{tpu_custom_call.1} parent=27 // pred_region
          _
        $region36: #{tpu_custom_call.1} parent=27 // pred_fallthru
          _
        // Predicated region
        $region37: #{tpu_custom_call.1} parent=27 // pred_check
          %p4500 = pneg %p156
        $region38: #{tpu_custom_call.1} parent=27 // pred_check_branch
          %4502 = sbr.rel (%p4500) target = $region40
        $region39: #{tpu_custom_call.1} parent=27 // pred_region
          _
        $region40: #{tpu_custom_call.1} parent=27 // pred_fallthru
          _
      $region28: #{tpu_custom_call.1} parent=5 // pred_fallthru
        _
      %p4503 = scmp.le.s32.totalorder 2, %s14
      // Predicated region
      $region41: #{tpu_custom_call.1} parent=5 // pred_check
        %p4504 = pneg %p4503
      $region42: #{tpu_custom_call.1} parent=5 // pred_check_branch
        %4506 = sbr.rel (%p4504) target = $region44
      $region43: #{tpu_custom_call.1} parent=5 // pred_region
        %s4507 = ssub.s32 %s14, 2
        // Predicated region
        $region45: #{tpu_custom_call.1} parent=43 // pred_check
          %p4508 = pneg %p106
        $region46: #{tpu_custom_call.1} parent=43 // pred_check_branch
          %4510 = sbr.rel (%p4508) target = $region48
        $region47: #{tpu_custom_call.1} parent=43 // pred_region
          %s4511 = sand.u32 %s91, 1
          %s4512 = scalar_lea.sflag [#allocation3], %s4511
          %s4513 = sand.u32 %s91, 1
          %s4514 = smul.addr %s4513, 4
          %s4515 = scalar_lea.vmem [#allocation2], %s4514
          %4516 = dma.done %s4512, 64
        $region48: #{tpu_custom_call.1} parent=43 // pred_fallthru
          _
        // Predicated region
        $region49: #{tpu_custom_call.1} parent=43 // pred_check
          %p4517 = pneg %p134
        $region50: #{tpu_custom_call.1} parent=43 // pred_check_branch
          %4519 = sbr.rel (%p4517) target = $region52
        $region51: #{tpu_custom_call.1} parent=43 // pred_region
          %p4520 = scmp.lt.s32.totalorder %s25, 1
          %s4521 = scalar_select %p4520, %s25, 1
          %p4522 = scmp.lt.s32.totalorder %s26, 3
          %s4523 = scalar_select %p4522, %s26, 3
          %s4524 = smul.addr %s4521, 4
          %s4525 = sadd.s32 %s4523, %s4524
          %s4526 = smul.addr %s4525, 8
          %s4527 = scalar_lea.vmem %s3, %s4526
        $region52: #{tpu_custom_call.1} parent=43 // pred_fallthru
          _
        // Predicated region
        $region53: #{tpu_custom_call.1} parent=43 // pred_check
          %p4528 = pneg %p162
        $region54: #{tpu_custom_call.1} parent=43 // pred_check_branch
          %4530 = sbr.rel (%p4528) target = $region56
        $region55: #{tpu_custom_call.1} parent=43 // pred_region
          %p4531 = scmp.lt.s32.totalorder %s25, 1
          %s4532 = scalar_select %p4531, %s25, 1
          %p4533 = scmp.lt.s32.totalorder %s26, 3
          %s4534 = scalar_select %p4533, %s26, 3
          %s4535 = smul.addr %s4532, 4
          %s4536 = sadd.s32 %s4534, %s4535
          %s4537 = smul.addr %s4536, 8
          %s4538 = scalar_lea.vmem %s4, %s4537
        $region56: #{tpu_custom_call.1} parent=43 // pred_fallthru
          _
      $region44: #{tpu_custom_call.1} parent=5 // pred_fallthru
        _
    $region6: #{tpu_custom_call.1} parent=1 // loop_footer
      %s18 = sadd.s32 1, %s14
    $region7: #{tpu_custom_call.1} parent=1 // loop_footer_branch
      %13 = sbr.rel target = $region3
    $region8: #{tpu_custom_call.1} parent=1 // loop_exit
      _
    %4539 = vsyncpa [#allocation3], 1
    %s4540 = scalar_lea.sflag [#allocation3], 1
    %4541 = vsyncpa %s4540, 1

</llo_original>
